<compile_context>
chip_gen: v7x
topology: tpu7x:2x2x1
jax: 0.10.0
libtpu: 0.0.40
codegen_flags: <defaults>
</compile_context>

<pallas_src>
import jax
import jax.numpy as jnp
from jax.experimental import pallas as pl
from jax.experimental.pallas import tpu as pltpu

ARCH = [64, 128, 'M', 256, 256, 'M', 512, 512, 'M', 512, 512, 'M']

_LANE = 128                 # vreg lane width
_M_TARGET = 256             # MXU rows per pass on v6e/v7x (128 on v5e)
_VMEM_BUDGET = 24 * 1024 * 1024

_VMEM_SPEC = pl.BlockSpec(memory_space=pltpu.MemorySpace.VMEM)


# ---------------------------------------------------------------------------
# Shared kernel pieces
# ---------------------------------------------------------------------------
def _zero_halo_border(xpad_ref):
    """Zero only the 1-element border of the padded activation scratch.

    Done every grid step (cost O(border), not O(plane)); the interior is
    fully overwritten each step.  Deliberately NOT gated on program_id == 0:
    with dimension_semantics=("parallel",) the grid may be split across
    v7x's two TensorCores and each core has its own scratch.
    """
    B, Hp, Wp, Cin = xpad_ref.shape
    dt = xpad_ref.dtype
    xpad_ref[:, 0:1, :, :] = jnp.zeros((B, 1, Wp, Cin), dt)
    xpad_ref[:, Hp - 1:Hp, :, :] = jnp.zeros((B, 1, Wp, Cin), dt)
    xpad_ref[:, :, 0:1, :] = jnp.zeros((B, Hp, 1, Cin), dt)
    xpad_ref[:, :, Wp - 1:Wp, :] = jnp.zeros((B, Hp, 1, Cin), dt)


def _bn_relu_pool_store(acc, scale, bias, o_ref, pool):
    """Folded-BN + ReLU (+ fused MaxPool2d(2)) epilogue on the f32 accumulator."""
    B, Ho, Wo, Cout = o_ref.shape
    H, W = (2 * Ho, 2 * Wo) if pool else (Ho, Wo)
    # TODO(synk): on v6e/v7x this epilogue could run in bf16 (bf16 VALUs);
    #             kept in f32 so the same code path is exact on v5e.
    y = jnp.maximum(acc * scale + bias, 0.0)            # (B*H*W, Cout) f32
    if pool:
        y = y.reshape(B, H, W // 2, 2, Cout)
        y = jnp.max(y, axis=3)                           # pool along W (sublane pair)
        y = jnp.maximum(y[:, 0::2], y[:, 1::2])          # pool along H (leading axis)
    else:
        y = y.reshape(B, H, W, Cout)
    o_ref[...] = y.astype(o_ref.dtype)


# ---------------------------------------------------------------------------
# Kernel 1a: conv3x3 (padding=1) + folded BN + ReLU (+ MaxPool2d(2))
#            for Cin % 128 == 0  -> single im2col MXU matmul, K = 9*Cin.
# ---------------------------------------------------------------------------
def _conv_kernel_im2col(pool):
    def kernel(x_ref, w_ref, scale_ref, bias_ref, o_ref, xpad_ref, col_ref):
        # x_ref:     (B, H, W, Cin)        bf16 activation block
        # w_ref:     (9*Cin, Cout)         bf16, rows ordered (kh, kw, cin)
        # scale/bias:(1, Cout)             f32 folded BN
        # o_ref:     (B, Ho, Wo, Cout)     bf16
        # xpad_ref:  (B, H+2, W+2, Cin)    bf16 halo scratch (padding fused)
        # col_ref:   (B, H, W, 9*Cin)      bf16 im2col scratch (128-aligned slots)
        B, H, W, Cin = x_ref.shape
        _zero_halo_border(xpad_ref)
        xpad_ref[:, 1:H + 1, 1:W + 1, :] = x_ref[...]
        for kh in range(3):
            for kw in range(3):
                t = kh * 3 + kw
                col_ref[:, :, :, t * Cin:(t + 1) * Cin] = (
                    xpad_ref[:, kh:kh + H, kw:kw + W, :])
        col = col_ref[...].reshape(B * H * W, 9 * Cin)
        acc = jnp.dot(col, w_ref[...], preferred_element_type=jnp.float32)
        _bn_relu_pool_store(acc, scale_ref[...], bias_ref[...], o_ref, pool)
    return kernel


# ---------------------------------------------------------------------------
# Kernel 1b: same fused conv, for Cin not a multiple of 128 (Cin=3, Cin=64):
#            9 per-tap accumulating matmuls (K = Cin) -> no masked lane
#            stores from non-128-aligned im2col slots, no col scratch.
# ---------------------------------------------------------------------------
def _conv_kernel_pertap(pool):
    def kernel(x_ref, w_ref, scale_ref, bias_ref, o_ref, xpad_ref):
        # w_ref: (9, Cin, Cout) bf16, tap-major
        B, H, W, Cin = x_ref.shape
        Cout = o_ref.shape[-1]
        _zero_halo_border(xpad_ref)
        xpad_ref[:, 1:H + 1, 1:W + 1, :] = x_ref[...]
        acc = jnp.zeros((B * H * W, Cout), jnp.float32)
        for kh in range(3):
            for kw in range(3):
                t = kh * 3 + kw
                xs = xpad_ref[:, kh:kh + H, kw:kw + W, :].reshape(B * H * W, Cin)
                acc = acc + jnp.dot(xs, w_ref[t],
                                    preferred_element_type=jnp.float32)
        _bn_relu_pool_store(acc, scale_ref[...], bias_ref[...], o_ref, pool)
    return kernel


def conv_bn_relu(x, w, scale, bias, pool):
    N, H, W, Cin = x.shape
    Cout = scale.shape[-1]
    if pool:
        assert H % 2 == 0 and W % 2 == 0, "MaxPool2d(2) needs even H and W"
    Ho, Wo = (H // 2, W // 2) if pool else (H, W)
    aligned = (Cin % _LANE == 0)

    # --- choose the image block so M = b*H*W fills an MXU pass --------------
    b = 1
    while 2 * b <= N and N % (2 * b) == 0 and b * H * W < _M_TARGET:
        b *= 2
    # keep >=2 grid steps (v7x megacore split + DMA pipelining) unless it
    # would push M below a single 128-row (v5e) MXU pass
    if b == N and N >= 2 and (b // 2) * H * W >= 128:
        b //= 2

    def vmem_bytes(bb):
        wt = 2 * int(w.size) * 2                 # weight, double-buffered
        act = 2 * bb * H * W * Cin * 2           # input block, double-buffered
        out = 2 * bb * Ho * Wo * Cout * 2        # output block, double-buffered
        halo = bb * (H + 2) * (W + 2) * Cin * 2
        col = bb * H * W * 9 * Cin * 2 if aligned else 0
        return wt + act + out + halo + col

    while b > 1 and vmem_bytes(b) > _VMEM_BUDGET:
        b //= 2
    # TODO(synk): for inputs much larger than ~64x64 the H dimension should
    #             also be tiled (row blocks with a 1-row halo) to stay inside
    #             v7x's 64 MiB VMEM; not needed at these shapes.
    assert N % b == 0

    scratch = [pltpu.VMEM((b, H + 2, W + 2, Cin), jnp.bfloat16)]
    if aligned:
        scratch.append(pltpu.VMEM((b, H, W, 9 * Cin), jnp.bfloat16))
        kernel = _conv_kernel_im2col(pool)
        w_spec = pl.BlockSpec((9 * Cin, Cout), lambda n: (0, 0))
    else:
        kernel = _conv_kernel_pertap(pool)
        w_spec = pl.BlockSpec((9, Cin, Cout), lambda n: (0, 0, 0))

    return pl.pallas_call(
        kernel,
        out_shape=jax.ShapeDtypeStruct((N, Ho, Wo, Cout), jnp.bfloat16),
        grid_spec=pltpu.PrefetchScalarGridSpec(
            num_scalar_prefetch=0,
            grid=(N // b,),
            in_specs=[
                pl.BlockSpec((b, H, W, Cin), lambda n: (n, 0, 0, 0)),
                w_spec,
                pl.BlockSpec((1, Cout), lambda n: (0, 0)),
                pl.BlockSpec((1, Cout), lambda n: (0, 0)),
            ],
            out_specs=pl.BlockSpec((b, Ho, Wo, Cout), lambda n: (n, 0, 0, 0)),
            scratch_shapes=scratch,
        ),
        compiler_params=pltpu.CompilerParams(
            dimension_semantics=("parallel",),
        ),
    )(x, w, scale, bias)


# ---------------------------------------------------------------------------
# Kernel 2: head = global mean over (H, W) + Linear(512 -> 10), with the
#           10-wide output padded to 128 lanes (sliced back outside).
# ---------------------------------------------------------------------------
def _head_kernel(x_ref, w_ref, b_ref, o_ref):
    # x_ref: (N, Hf, Wf, 512) bf16 ; w_ref: (512, 128) f32 ; b_ref: (1, 128) f32
    x = x_ref[...].astype(jnp.float32)
    N, H, W, C = x.shape
    xm = jnp.mean(x.reshape(N, H * W, C), axis=1)                 # (N, 512)
    o_ref[...] = jnp.dot(xm, w_ref[...],
                         preferred_element_type=jnp.float32) + b_ref[...]


def head(x, w_pad, b_pad):
    N = x.shape[0]
    return pl.pallas_call(
        _head_kernel,
        out_shape=jax.ShapeDtypeStruct((N, w_pad.shape[-1]), jnp.float32),
        in_specs=[_VMEM_SPEC, _VMEM_SPEC, _VMEM_SPEC],
        out_specs=_VMEM_SPEC,
    )(x, w_pad, b_pad)


# ---------------------------------------------------------------------------
# Deterministic synthetic parameters (shapes follow VGG.__init__).
# Conv weights are generated in HWIO; lane-aligned layers (Cin % 128 == 0)
# get the (9*Cin, Cout) im2col layout (rows in (kh, kw, cin) order), the
# Cin=3 / Cin=64 layers get the (9, Cin, Cout) per-tap layout.  MaxPool
# positions in ARCH are folded into the preceding conv layer (pool=True).
# ---------------------------------------------------------------------------
def init_params(key):
    eps = 1e-5
    layers = []
    in_c = 3
    i = 0
    while i < len(ARCH):
        a = ARCH[i]
        pool = (i + 1 < len(ARCH)) and (ARCH[i + 1] == 'M')
        key, k1, k2, k3, k4, k5 = jax.random.split(key, 6)
        w = jax.random.normal(k1, (3, 3, in_c, a), jnp.float32) * (2.0 / (9 * in_c)) ** 0.5
        gamma = 1.0 + 0.1 * jax.random.normal(k2, (a,), jnp.float32)
        beta = 0.1 * jax.random.normal(k3, (a,), jnp.float32)
        rmean = 0.1 * jax.random.normal(k4, (a,), jnp.float32)
        rvar = 1.0 + 0.1 * jax.random.uniform(k5, (a,), jnp.float32)
        scale = gamma / jnp.sqrt(rvar + eps)
        bias = beta - rmean * scale
        if in_c % _LANE == 0:
            wk = w.reshape(9 * in_c, a)          # im2col layout
        else:
            wk = w.reshape(9, in_c, a)           # per-tap layout
        layers.append((wk.astype(jnp.bfloat16),
                       scale.reshape(1, a), bias.reshape(1, a), pool))
        in_c = a
        i += 2 if pool else 1

    key, kw, kb = jax.random.split(key, 3)
    n_cls = 10
    wl = jax.random.normal(kw, (512, n_cls), jnp.float32) * (1.0 / 512.0) ** 0.5
    bl = 0.1 * jax.random.normal(kb, (n_cls,), jnp.float32)
    # pad the classifier to 128 lane-dense output columns
    wl_pad = jnp.zeros((512, _LANE), jnp.float32).at[:, :n_cls].set(wl)
    bl_pad = jnp.zeros((1, _LANE), jnp.float32).at[:, :n_cls].set(bl)
    return layers, (wl_pad, bl_pad, n_cls)


def vgg_forward(x_nchw, layers, head_params):
    x = jnp.transpose(x_nchw, (0, 2, 3, 1)).astype(jnp.bfloat16)  # NCHW -> NHWC
    for w, scale, bias, pool in layers:
        x = conv_bn_relu(x, w, scale, bias, pool)
    wl_pad, bl_pad, n_cls = head_params
    return head(x, wl_pad, bl_pad)[:, :n_cls]


if __name__ == "__main__":
    key = jax.random.PRNGKey(0)
    kx, kp = jax.random.split(key)
    # small input consistent with the module: NCHW, 3 channels, 16x16 spatial
    x = jax.random.normal(kx, (2, 3, 16, 16), jnp.float32)
    layers, head_params = init_params(kp)
    out = vgg_forward(x, layers, head_params)
    out = jax.block_until_ready(out)
    assert out.shape == (2, 10), out.shape
    assert bool(jnp.all(jnp.isfinite(out)))
    print("KERNEL_OK")
</pallas_src>

<mosaic_0001>
module attributes {stable_mosaic.version = 11 : i64} {
  func.func @kernel(%arg0: i32, %arg1: memref<1x16x16x3xbf16, #tpu.memory_space<vmem>>, %arg2: memref<9x3x64xbf16, #tpu.memory_space<vmem>>, %arg3: memref<1x64xf32, #tpu.memory_space<vmem>>, %arg4: memref<1x64xf32, #tpu.memory_space<vmem>>, %arg5: memref<1x16x16x64xbf16, #tpu.memory_space<vmem>>, %arg6: memref<1x18x18x3xbf16, #tpu.memory_space<vmem>>) attributes {dimension_semantics = [#tpu.dimension_semantics<parallel>], iteration_bounds = array<i64: 2>, scalar_prefetch = 0 : i64, scratch_operands = 1 : i64, tpu.core_type = #tpu.core_type<tc>, window_params = [{transform_indices = @transform_0, window_bounds = array<i64: 1, 16, 16, 3>}, {pipeline_mode = #tpu.pipeline_mode<synchronous>, transform_indices = @transform_1, window_bounds = array<i64: 9, 3, 64>}, {pipeline_mode = #tpu.pipeline_mode<synchronous>, transform_indices = @transform_2, window_bounds = array<i64: 1, 64>}, {pipeline_mode = #tpu.pipeline_mode<synchronous>, transform_indices = @transform_3, window_bounds = array<i64: 1, 64>}, {transform_indices = @transform_4, window_bounds = array<i64: 1, 16, 16, 64>}]} {
    %cst = arith.constant 0.000000e+00 : bf16
    %0 = vector.broadcast %cst : bf16 to vector<1x1x18x3xbf16>
    %c0 = arith.constant 0 : index
    %c0_0 = arith.constant 0 : index
    %c0_1 = arith.constant 0 : index
    %c0_2 = arith.constant 0 : index
    %1 = vector.load %arg6[%c0, %c0_0, %c0_1, %c0_2] : memref<1x18x18x3xbf16, #tpu.memory_space<vmem>>, vector<1x1x18x3xbf16>
    tpu.vector_store %arg6[%c0, %c0_0, %c0_1, %c0_2], %0 {strides = array<i32>} : memref<1x18x18x3xbf16, #tpu.memory_space<vmem>>, vector<1x1x18x3xbf16>,
    %cst_3 = arith.constant 0.000000e+00 : bf16
    %2 = vector.broadcast %cst_3 : bf16 to vector<1x1x18x3xbf16>
    %c0_4 = arith.constant 0 : index
    %c17 = arith.constant 17 : index
    %c0_5 = arith.constant 0 : index
    %c0_6 = arith.constant 0 : index
    %3 = vector.load %arg6[%c0_4, %c17, %c0_5, %c0_6] : memref<1x18x18x3xbf16, #tpu.memory_space<vmem>>, vector<1x1x18x3xbf16>
    tpu.vector_store %arg6[%c0_4, %c17, %c0_5, %c0_6], %2 {strides = array<i32>} : memref<1x18x18x3xbf16, #tpu.memory_space<vmem>>, vector<1x1x18x3xbf16>,
    %cst_7 = arith.constant 0.000000e+00 : bf16
    %4 = vector.broadcast %cst_7 : bf16 to vector<1x18x1x3xbf16>
    %c0_8 = arith.constant 0 : index
    %c0_9 = arith.constant 0 : index
    %c0_10 = arith.constant 0 : index
    %c0_11 = arith.constant 0 : index
    %5 = vector.load %arg6[%c0_8, %c0_9, %c0_10, %c0_11] : memref<1x18x18x3xbf16, #tpu.memory_space<vmem>>, vector<1x18x1x3xbf16>
    tpu.vector_store %arg6[%c0_8, %c0_9, %c0_10, %c0_11], %4 {strides = array<i32>} : memref<1x18x18x3xbf16, #tpu.memory_space<vmem>>, vector<1x18x1x3xbf16>,
    %cst_12 = arith.constant 0.000000e+00 : bf16
    %6 = vector.broadcast %cst_12 : bf16 to vector<1x18x1x3xbf16>
    %c0_13 = arith.constant 0 : index
    %c0_14 = arith.constant 0 : index
    %c17_15 = arith.constant 17 : index
    %c0_16 = arith.constant 0 : index
    %7 = vector.load %arg6[%c0_13, %c0_14, %c17_15, %c0_16] : memref<1x18x18x3xbf16, #tpu.memory_space<vmem>>, vector<1x18x1x3xbf16>
    tpu.vector_store %arg6[%c0_13, %c0_14, %c17_15, %c0_16], %6 {strides = array<i32>} : memref<1x18x18x3xbf16, #tpu.memory_space<vmem>>, vector<1x18x1x3xbf16>,
    %c0_17 = arith.constant 0 : index
    %c0_18 = arith.constant 0 : index
    %c0_19 = arith.constant 0 : index
    %c0_20 = arith.constant 0 : index
    %8 = vector.load %arg1[%c0_17, %c0_18, %c0_19, %c0_20] : memref<1x16x16x3xbf16, #tpu.memory_space<vmem>>, vector<1x16x16x3xbf16>
    %c0_21 = arith.constant 0 : index
    %c1 = arith.constant 1 : index
    %c1_22 = arith.constant 1 : index
    %c0_23 = arith.constant 0 : index
    %9 = vector.load %arg6[%c0_21, %c1, %c1_22, %c0_23] : memref<1x18x18x3xbf16, #tpu.memory_space<vmem>>, vector<1x16x16x3xbf16>
    tpu.vector_store %arg6[%c0_21, %c1, %c1_22, %c0_23], %8 {strides = array<i32>} : memref<1x18x18x3xbf16, #tpu.memory_space<vmem>>, vector<1x16x16x3xbf16>,
    %cst_24 = arith.constant 0.000000e+00 : f32
    %10 = vector.broadcast %cst_24 : f32 to vector<256x64xf32>
    %c0_25 = arith.constant 0 : index
    %c0_26 = arith.constant 0 : index
    %c0_27 = arith.constant 0 : index
    %c0_28 = arith.constant 0 : index
    %11 = vector.load %arg6[%c0_25, %c0_26, %c0_27, %c0_28] : memref<1x18x18x3xbf16, #tpu.memory_space<vmem>>, vector<1x16x16x3xbf16>
    %12 = vector.shape_cast %11 : vector<1x16x16x3xbf16> to vector<256x3xbf16>
    %c0_29 = arith.constant 0 : index
    %c0_30 = arith.constant 0 : index
    %c0_31 = arith.constant 0 : index
    %13 = vector.load %arg2[%c0_29, %c0_30, %c0_31] : memref<9x3x64xbf16, #tpu.memory_space<vmem>>, vector<1x3x64xbf16>
    %14 = vector.shape_cast %13 : vector<1x3x64xbf16> to vector<3x64xbf16>
    %cst_32 = arith.constant dense<0.000000e+00> : vector<256x64xf32>
    %15 = tpu.matmul %12, %14, %cst_32 {dimension_numbers = #tpu.dot_dimension_numbers<[1], [0], [0], [1], [0, 0, 1, 1], [], []>} : vector<256x3xbf16>, vector<3x64xbf16>, vector<256x64xf32> -> vector<256x64xf32>
    %16 = arith.addf %10, %15 : vector<256x64xf32>
    %c0_33 = arith.constant 0 : index
    %c0_34 = arith.constant 0 : index
    %c1_35 = arith.constant 1 : index
    %c0_36 = arith.constant 0 : index
    %17 = vector.load %arg6[%c0_33, %c0_34, %c1_35, %c0_36] : memref<1x18x18x3xbf16, #tpu.memory_space<vmem>>, vector<1x16x16x3xbf16>
    %18 = vector.shape_cast %17 : vector<1x16x16x3xbf16> to vector<256x3xbf16>
    %c1_37 = arith.constant 1 : index
    %c0_38 = arith.constant 0 : index
    %c0_39 = arith.constant 0 : index
    %19 = vector.load %arg2[%c1_37, %c0_38, %c0_39] : memref<9x3x64xbf16, #tpu.memory_space<vmem>>, vector<1x3x64xbf16>
    %20 = vector.shape_cast %19 : vector<1x3x64xbf16> to vector<3x64xbf16>
    %cst_40 = arith.constant dense<0.000000e+00> : vector<256x64xf32>
    %21 = tpu.matmul %18, %20, %cst_40 {dimension_numbers = #tpu.dot_dimension_numbers<[1], [0], [0], [1], [0, 0, 1, 1], [], []>} : vector<256x3xbf16>, vector<3x64xbf16>, vector<256x64xf32> -> vector<256x64xf32>
    %22 = arith.addf %16, %21 : vector<256x64xf32>
    %c0_41 = arith.constant 0 : index
    %c0_42 = arith.constant 0 : index
    %c2 = arith.constant 2 : index
    %c0_43 = arith.constant 0 : index
    %23 = vector.load %arg6[%c0_41, %c0_42, %c2, %c0_43] : memref<1x18x18x3xbf16, #tpu.memory_space<vmem>>, vector<1x16x16x3xbf16>
    %24 = vector.shape_cast %23 : vector<1x16x16x3xbf16> to vector<256x3xbf16>
    %c2_44 = arith.constant 2 : index
    %c0_45 = arith.constant 0 : index
    %c0_46 = arith.constant 0 : index
    %25 = vector.load %arg2[%c2_44, %c0_45, %c0_46] : memref<9x3x64xbf16, #tpu.memory_space<vmem>>, vector<1x3x64xbf16>
    %26 = vector.shape_cast %25 : vector<1x3x64xbf16> to vector<3x64xbf16>
    %cst_47 = arith.constant dense<0.000000e+00> : vector<256x64xf32>
    %27 = tpu.matmul %24, %26, %cst_47 {dimension_numbers = #tpu.dot_dimension_numbers<[1], [0], [0], [1], [0, 0, 1, 1], [], []>} : vector<256x3xbf16>, vector<3x64xbf16>, vector<256x64xf32> -> vector<256x64xf32>
    %28 = arith.addf %22, %27 : vector<256x64xf32>
    %c0_48 = arith.constant 0 : index
    %c1_49 = arith.constant 1 : index
    %c0_50 = arith.constant 0 : index
    %c0_51 = arith.constant 0 : index
    %29 = vector.load %arg6[%c0_48, %c1_49, %c0_50, %c0_51] : memref<1x18x18x3xbf16, #tpu.memory_space<vmem>>, vector<1x16x16x3xbf16>
    %30 = vector.shape_cast %29 : vector<1x16x16x3xbf16> to vector<256x3xbf16>
    %c3 = arith.constant 3 : index
    %c0_52 = arith.constant 0 : index
    %c0_53 = arith.constant 0 : index
    %31 = vector.load %arg2[%c3, %c0_52, %c0_53] : memref<9x3x64xbf16, #tpu.memory_space<vmem>>, vector<1x3x64xbf16>
    %32 = vector.shape_cast %31 : vector<1x3x64xbf16> to vector<3x64xbf16>
    %cst_54 = arith.constant dense<0.000000e+00> : vector<256x64xf32>
    %33 = tpu.matmul %30, %32, %cst_54 {dimension_numbers = #tpu.dot_dimension_numbers<[1], [0], [0], [1], [0, 0, 1, 1], [], []>} : vector<256x3xbf16>, vector<3x64xbf16>, vector<256x64xf32> -> vector<256x64xf32>
    %34 = arith.addf %28, %33 : vector<256x64xf32>
    %c0_55 = arith.constant 0 : index
    %c1_56 = arith.constant 1 : index
    %c1_57 = arith.constant 1 : index
    %c0_58 = arith.constant 0 : index
    %35 = vector.load %arg6[%c0_55, %c1_56, %c1_57, %c0_58] : memref<1x18x18x3xbf16, #tpu.memory_space<vmem>>, vector<1x16x16x3xbf16>
    %36 = vector.shape_cast %35 : vector<1x16x16x3xbf16> to vector<256x3xbf16>
    %c4 = arith.constant 4 : index
    %c0_59 = arith.constant 0 : index
    %c0_60 = arith.constant 0 : index
    %37 = vector.load %arg2[%c4, %c0_59, %c0_60] : memref<9x3x64xbf16, #tpu.memory_space<vmem>>, vector<1x3x64xbf16>
    %38 = vector.shape_cast %37 : vector<1x3x64xbf16> to vector<3x64xbf16>
    %cst_61 = arith.constant dense<0.000000e+00> : vector<256x64xf32>
    %39 = tpu.matmul %36, %38, %cst_61 {dimension_numbers = #tpu.dot_dimension_numbers<[1], [0], [0], [1], [0, 0, 1, 1], [], []>} : vector<256x3xbf16>, vector<3x64xbf16>, vector<256x64xf32> -> vector<256x64xf32>
    %40 = arith.addf %34, %39 : vector<256x64xf32>
    %c0_62 = arith.constant 0 : index
    %c1_63 = arith.constant 1 : index
    %c2_64 = arith.constant 2 : index
    %c0_65 = arith.constant 0 : index
    %41 = vector.load %arg6[%c0_62, %c1_63, %c2_64, %c0_65] : memref<1x18x18x3xbf16, #tpu.memory_space<vmem>>, vector<1x16x16x3xbf16>
    %42 = vector.shape_cast %41 : vector<1x16x16x3xbf16> to vector<256x3xbf16>
    %c5 = arith.constant 5 : index
    %c0_66 = arith.constant 0 : index
    %c0_67 = arith.constant 0 : index
    %43 = vector.load %arg2[%c5, %c0_66, %c0_67] : memref<9x3x64xbf16, #tpu.memory_space<vmem>>, vector<1x3x64xbf16>
    %44 = vector.shape_cast %43 : vector<1x3x64xbf16> to vector<3x64xbf16>
    %cst_68 = arith.constant dense<0.000000e+00> : vector<256x64xf32>
    %45 = tpu.matmul %42, %44, %cst_68 {dimension_numbers = #tpu.dot_dimension_numbers<[1], [0], [0], [1], [0, 0, 1, 1], [], []>} : vector<256x3xbf16>, vector<3x64xbf16>, vector<256x64xf32> -> vector<256x64xf32>
    %46 = arith.addf %40, %45 : vector<256x64xf32>
    %c0_69 = arith.constant 0 : index
    %c2_70 = arith.constant 2 : index
    %c0_71 = arith.constant 0 : index
    %c0_72 = arith.constant 0 : index
    %47 = vector.load %arg6[%c0_69, %c2_70, %c0_71, %c0_72] : memref<1x18x18x3xbf16, #tpu.memory_space<vmem>>, vector<1x16x16x3xbf16>
    %48 = vector.shape_cast %47 : vector<1x16x16x3xbf16> to vector<256x3xbf16>
    %c6 = arith.constant 6 : index
    %c0_73 = arith.constant 0 : index
    %c0_74 = arith.constant 0 : index
    %49 = vector.load %arg2[%c6, %c0_73, %c0_74] : memref<9x3x64xbf16, #tpu.memory_space<vmem>>, vector<1x3x64xbf16>
    %50 = vector.shape_cast %49 : vector<1x3x64xbf16> to vector<3x64xbf16>
    %cst_75 = arith.constant dense<0.000000e+00> : vector<256x64xf32>
    %51 = tpu.matmul %48, %50, %cst_75 {dimension_numbers = #tpu.dot_dimension_numbers<[1], [0], [0], [1], [0, 0, 1, 1], [], []>} : vector<256x3xbf16>, vector<3x64xbf16>, vector<256x64xf32> -> vector<256x64xf32>
    %52 = arith.addf %46, %51 : vector<256x64xf32>
    %c0_76 = arith.constant 0 : index
    %c2_77 = arith.constant 2 : index
    %c1_78 = arith.constant 1 : index
    %c0_79 = arith.constant 0 : index
    %53 = vector.load %arg6[%c0_76, %c2_77, %c1_78, %c0_79] : memref<1x18x18x3xbf16, #tpu.memory_space<vmem>>, vector<1x16x16x3xbf16>
    %54 = vector.shape_cast %53 : vector<1x16x16x3xbf16> to vector<256x3xbf16>
    %c7 = arith.constant 7 : index
    %c0_80 = arith.constant 0 : index
    %c0_81 = arith.constant 0 : index
    %55 = vector.load %arg2[%c7, %c0_80, %c0_81] : memref<9x3x64xbf16, #tpu.memory_space<vmem>>, vector<1x3x64xbf16>
    %56 = vector.shape_cast %55 : vector<1x3x64xbf16> to vector<3x64xbf16>
    %cst_82 = arith.constant dense<0.000000e+00> : vector<256x64xf32>
    %57 = tpu.matmul %54, %56, %cst_82 {dimension_numbers = #tpu.dot_dimension_numbers<[1], [0], [0], [1], [0, 0, 1, 1], [], []>} : vector<256x3xbf16>, vector<3x64xbf16>, vector<256x64xf32> -> vector<256x64xf32>
    %58 = arith.addf %52, %57 : vector<256x64xf32>
    %c0_83 = arith.constant 0 : index
    %c2_84 = arith.constant 2 : index
    %c2_85 = arith.constant 2 : index
    %c0_86 = arith.constant 0 : index
    %59 = vector.load %arg6[%c0_83, %c2_84, %c2_85, %c0_86] : memref<1x18x18x3xbf16, #tpu.memory_space<vmem>>, vector<1x16x16x3xbf16>
    %60 = vector.shape_cast %59 : vector<1x16x16x3xbf16> to vector<256x3xbf16>
    %c8 = arith.constant 8 : index
    %c0_87 = arith.constant 0 : index
    %c0_88 = arith.constant 0 : index
    %61 = vector.load %arg2[%c8, %c0_87, %c0_88] : memref<9x3x64xbf16, #tpu.memory_space<vmem>>, vector<1x3x64xbf16>
    %62 = vector.shape_cast %61 : vector<1x3x64xbf16> to vector<3x64xbf16>
    %cst_89 = arith.constant dense<0.000000e+00> : vector<256x64xf32>
    %63 = tpu.matmul %60, %62, %cst_89 {dimension_numbers = #tpu.dot_dimension_numbers<[1], [0], [0], [1], [0, 0, 1, 1], [], []>} : vector<256x3xbf16>, vector<3x64xbf16>, vector<256x64xf32> -> vector<256x64xf32>
    %64 = arith.addf %58, %63 : vector<256x64xf32>
    %c0_90 = arith.constant 0 : index
    %c0_91 = arith.constant 0 : index
    %65 = vector.load %arg3[%c0_90, %c0_91] : memref<1x64xf32, #tpu.memory_space<vmem>>, vector<1x64xf32>
    %c0_92 = arith.constant 0 : index
    %c0_93 = arith.constant 0 : index
    %66 = vector.load %arg4[%c0_92, %c0_93] : memref<1x64xf32, #tpu.memory_space<vmem>>, vector<1x64xf32>
    %67 = vector.broadcast %65 : vector<1x64xf32> to vector<256x64xf32>
    %68 = arith.mulf %64, %67 : vector<256x64xf32>
    %69 = vector.broadcast %66 : vector<1x64xf32> to vector<256x64xf32>
    %70 = arith.addf %68, %69 : vector<256x64xf32>
    %cst_94 = arith.constant 0.000000e+00 : f32
    %71 = vector.broadcast %cst_94 : f32 to vector<256x64xf32>
    %72 = arith.maximumf %70, %71 : vector<256x64xf32>
    %73 = vector.shape_cast %72 : vector<256x64xf32> to vector<1x16x16x64xf32>
    %74 = arith.truncf %73 : vector<1x16x16x64xf32> to vector<1x16x16x64xbf16>
    %c0_95 = arith.constant 0 : index
    %c0_96 = arith.constant 0 : index
    %c0_97 = arith.constant 0 : index
    %c0_98 = arith.constant 0 : index
    %75 = vector.load %arg5[%c0_95, %c0_96, %c0_97, %c0_98] : memref<1x16x16x64xbf16, #tpu.memory_space<vmem>>, vector<1x16x16x64xbf16>
    tpu.vector_store %arg5[%c0_95, %c0_96, %c0_97, %c0_98], %74 {strides = array<i32>} : memref<1x16x16x64xbf16, #tpu.memory_space<vmem>>, vector<1x16x16x64xbf16>,
    return
  }
  func.func @transform_0(%arg0: i32) -> (i32, i32, i32, i32) {
    %c0_i32 = arith.constant 0 : i32
    %c0_i32_0 = arith.constant 0 : i32
    %c0_i32_1 = arith.constant 0 : i32
    %c0_i32_2 = arith.constant 0 : i32
    return %arg0, %c0_i32, %c0_i32_0, %c0_i32_1 : i32, i32, i32, i32
  }
  func.func @transform_1(%arg0: i32) -> (i32, i32, i32) {
    %c0_i32 = arith.constant 0 : i32
    %c0_i32_0 = arith.constant 0 : i32
    %c0_i32_1 = arith.constant 0 : i32
    %c0_i32_2 = arith.constant 0 : i32
    return %c0_i32, %c0_i32_0, %c0_i32_1 : i32, i32, i32
  }
  func.func @transform_2(%arg0: i32) -> (i32, i32) {
    %c0_i32 = arith.constant 0 : i32
    %c0_i32_0 = arith.constant 0 : i32
    %c0_i32_1 = arith.constant 0 : i32
    return %c0_i32, %c0_i32_0 : i32, i32
  }
  func.func @transform_3(%arg0: i32) -> (i32, i32) {
    %c0_i32 = arith.constant 0 : i32
    %c0_i32_0 = arith.constant 0 : i32
    %c0_i32_1 = arith.constant 0 : i32
    return %c0_i32, %c0_i32_0 : i32, i32
  }
  func.func @transform_4(%arg0: i32) -> (i32, i32, i32, i32) {
    %c0_i32 = arith.constant 0 : i32
    %c0_i32_0 = arith.constant 0 : i32
    %c0_i32_1 = arith.constant 0 : i32
    %c0_i32_2 = arith.constant 0 : i32
    return %arg0, %c0_i32, %c0_i32_0, %c0_i32_1 : i32, i32, i32, i32
  }
}

</mosaic_0001>

<llo_original>
// kernel: tpu_custom_call.1
$region0: #{tpu_custom_call.1}
  #allocation0 [shape = 'u32[]', space=smem, size = 0x4, offset = 0x4, fixed_abs, tag = 'smem constant byte address 0x4 - core index']
  #allocation1 [shape = 'u32[144,128]{1,0:T(1,128)}', space=vmem, size = 0x12000, scoped, tag = 'internal scratch']
  #allocation2 [shape = 'bf16[1,18,18,3]{3,2,1,0:T(8,128)(2,1)}', space=vmem, size = 0x1b000, scoped, tag = 'scratch operand']
  %s0 = inlined_call_operand.vmem [shape: bf16[2,16,16,3], index: 0, kind: input, shape index: {}]
  %s1 = inlined_call_operand.vmem [shape: bf16[9,3,64], index: 1, kind: input, shape index: {}]
  %s2 = inlined_call_operand.vmem [shape: f32[1,64], index: 2, kind: input, shape index: {}]
  %s3 = inlined_call_operand.vmem [shape: f32[1,64], index: 3, kind: input, shape index: {}]
  %s4 = inlined_call_operand.hbm [shape: bf16[2,16,16,64], index: 4, kind: output, shape index: {}]
  %s5 = sld [smem:[#allocation0]]
  $region49: #{tpu_custom_call.1} parent=0
    _
  %s7 = ssub.s32 1, %s5
  %s8 = scalar_select 0, %s7, %s5
  $region1: #{tpu_custom_call.1} parent=0
    #allocation3 [shape = 'u8[131072]{0}', space=vmem, size = 0x20000, scoped, tag = 'output window, operand 0']
    #allocation4 [shape = 's32[2]{0}', space=sflag, size = 0x8, scoped, tag = 'scoped memory for tpu_custom_call.1']
    %9 = vsyncpa [#allocation4], 0
    %s10 = scalar_lea.sflag [#allocation4], 1
    %11 = vsyncpa %s10, 0
    loop: start=0, step=1, limit=4
    $region2: #{tpu_custom_call.1} parent=1 // loop_pre_header
      _
    $region3: #{tpu_custom_call.1} parent=1 // loop_header
      %s13 = sphi 0, %s17
      %p14 = scmp.ge.s32.totalorder %s13, 4
      %s23 = sphi 0, %s25
      %s26 = sphi 0, %s23
      %s27 = sphi 0, %s26
      %s43 = sphi 0, %s27
      %s47 = sphi 0, %s47
      %s49 = sphi 0, %s47
      %s50 = sphi 0, %s49
      %s64 = sphi 0, %s50
      %s68 = sphi 0, %s68
      %s70 = sphi 0, %s68
      %s71 = sphi 0, %s70
      %s85 = sphi 0, %s71
      %s89 = sphi 0, %s89
      %s91 = sphi 0, %s89
      %s92 = sphi 0, %s91
      %s106 = sphi 0, %s92
      %s112 = sphi 0, %s114
      %s115 = sphi 0, %s112
      %s116 = sphi 0, %s115
      %s132 = sphi 0, %s116
    $region4: #{tpu_custom_call.1} parent=1 // loop_header_branch
      %16 = sbr.rel (%p14) target = $region8
    $region5: #{tpu_custom_call.1} parent=1 // loop_body
      %s18 = ssub.s32 %s13, 1
      %s19 = ssub.s32 %s13, 2
      %s20 = sadd.s32 %s13, 1
      %s21 = ssub.s32 %s13, %s20
      %p22 = scmp.eq.s32.totalorder %s21, 0
      %s24 = sadd.s32 %s23, 1
      %s25 = scalar_select %p22, %s23, %s24
      %p28 = pneg %p22
      %p29 = scmp.eq.s32.totalorder %s13, 1
      %p30 = por %p28, %p29
      %p31 = scmp.ne.s32.totalorder %s23, %s26
      %p32 = scmp.eq.s32.totalorder %s13, 0
      %p33 = por %p31, %p32
      %p34 = scmp.ne.s32.totalorder %s23, %s26
      %p35 = scmp.eq.s32.totalorder %s18, 1
      %p36 = por %p34, %p35
      %p37 = scmp.ne.s32.totalorder %s26, %s27
      %p38 = scmp.eq.s32.totalorder %s18, 0
      %p39 = por %p37, %p38
      %p40 = scmp.ne.s32.totalorder %s26, %s27
      %p41 = scmp.eq.s32.totalorder %s19, 1
      %p42 = por %p40, %p41
      %p44 = scmp.ne.s32.totalorder %s27, %s43
      %p45 = scmp.eq.s32.totalorder %s19, 0
      %p46 = por %p44, %p45
      %s48 = sadd.s32 %s47, 1
      %p51 = scmp.eq.s32.totalorder %s13, 1
      %p52 = scmp.ne.s32.totalorder %s47, %s49
      %p53 = scmp.eq.s32.totalorder %s13, 0
      %p54 = por %p52, %p53
      %p55 = scmp.ne.s32.totalorder %s47, %s49
      %p56 = scmp.eq.s32.totalorder %s18, 1
      %p57 = por %p55, %p56
      %p58 = scmp.ne.s32.totalorder %s49, %s50
      %p59 = scmp.eq.s32.totalorder %s18, 0
      %p60 = por %p58, %p59
      %p61 = scmp.ne.s32.totalorder %s49, %s50
      %p62 = scmp.eq.s32.totalorder %s19, 1
      %p63 = por %p61, %p62
      %p65 = scmp.ne.s32.totalorder %s50, %s64
      %p66 = scmp.eq.s32.totalorder %s19, 0
      %p67 = por %p65, %p66
      %s69 = sadd.s32 %s68, 1
      %p72 = scmp.eq.s32.totalorder %s13, 1
      %p73 = scmp.ne.s32.totalorder %s68, %s70
      %p74 = scmp.eq.s32.totalorder %s13, 0
      %p75 = por %p73, %p74
      %p76 = scmp.ne.s32.totalorder %s68, %s70
      %p77 = scmp.eq.s32.totalorder %s18, 1
      %p78 = por %p76, %p77
      %p79 = scmp.ne.s32.totalorder %s70, %s71
      %p80 = scmp.eq.s32.totalorder %s18, 0
      %p81 = por %p79, %p80
      %p82 = scmp.ne.s32.totalorder %s70, %s71
      %p83 = scmp.eq.s32.totalorder %s19, 1
      %p84 = por %p82, %p83
      %p86 = scmp.ne.s32.totalorder %s71, %s85
      %p87 = scmp.eq.s32.totalorder %s19, 0
      %p88 = por %p86, %p87
      %s90 = sadd.s32 %s89, 1
      %p93 = scmp.eq.s32.totalorder %s13, 1
      %p94 = scmp.ne.s32.totalorder %s89, %s91
      %p95 = scmp.eq.s32.totalorder %s13, 0
      %p96 = por %p94, %p95
      %p97 = scmp.ne.s32.totalorder %s89, %s91
      %p98 = scmp.eq.s32.totalorder %s18, 1
      %p99 = por %p97, %p98
      %p100 = scmp.ne.s32.totalorder %s91, %s92
      %p101 = scmp.eq.s32.totalorder %s18, 0
      %p102 = por %p100, %p101
      %p103 = scmp.ne.s32.totalorder %s91, %s92
      %p104 = scmp.eq.s32.totalorder %s19, 1
      %p105 = por %p103, %p104
      %p107 = scmp.ne.s32.totalorder %s92, %s106
      %p108 = scmp.eq.s32.totalorder %s19, 0
      %p109 = por %p107, %p108
      %s110 = ssub.s32 %s13, %s20
      %p111 = scmp.eq.s32.totalorder %s110, 0
      %s113 = sadd.s32 %s112, 1
      %s114 = scalar_select %p111, %s112, %s113
      %p117 = pneg %p111
      %p118 = scmp.eq.s32.totalorder %s13, 1
      %p119 = por %p117, %p118
      %p120 = scmp.ne.s32.totalorder %s112, %s115
      %p121 = scmp.eq.s32.totalorder %s13, 0
      %p122 = por %p120, %p121
      %p123 = scmp.ne.s32.totalorder %s112, %s115
      %p124 = scmp.eq.s32.totalorder %s18, 1
      %p125 = por %p123, %p124
      %p126 = scmp.ne.s32.totalorder %s115, %s116
      %p127 = scmp.eq.s32.totalorder %s18, 0
      %p128 = por %p126, %p127
      %p129 = scmp.ne.s32.totalorder %s115, %s116
      %p130 = scmp.eq.s32.totalorder %s19, 1
      %p131 = por %p129, %p130
      %p133 = scmp.ne.s32.totalorder %s116, %s132
      %p134 = scmp.eq.s32.totalorder %s19, 0
      %p135 = por %p133, %p134
      %p136 = scmp.le.s32.totalorder 1, %s13
      %p137 = scmp.lt.s32.totalorder %s13, 3
      %p138 = pnand %p136, %p137
      %p139 = pneg %p138
      // Predicated region
      $region9: #{tpu_custom_call.1} parent=5 // pred_check
        _
      $region10: #{tpu_custom_call.1} parent=5 // pred_check_branch
        %141 = sbr.rel (%p138) target = $region12
      $region11: #{tpu_custom_call.1} parent=5 // pred_region
        %s142 = ssub.s32 %s13, 1
        // Predicated region
        $region13: #{tpu_custom_call.1} parent=11 // pred_check
          %p143 = pneg %p60
        $region14: #{tpu_custom_call.1} parent=11 // pred_check_branch
          %145 = sbr.rel (%p143) target = $region16
        $region15: #{tpu_custom_call.1} parent=11 // pred_region
          _
        $region16: #{tpu_custom_call.1} parent=11 // pred_fallthru
          _
        // Predicated region
        $region17: #{tpu_custom_call.1} parent=11 // pred_check
          %p146 = pneg %p81
        $region18: #{tpu_custom_call.1} parent=11 // pred_check_branch
          %148 = sbr.rel (%p146) target = $region20
        $region19: #{tpu_custom_call.1} parent=11 // pred_region
          _
        $region20: #{tpu_custom_call.1} parent=11 // pred_fallthru
          _
        // Predicated region
        $region21: #{tpu_custom_call.1} parent=11 // pred_check
          %p149 = pneg %p102
        $region22: #{tpu_custom_call.1} parent=11 // pred_check_branch
          %151 = sbr.rel (%p149) target = $region24
        $region23: #{tpu_custom_call.1} parent=11 // pred_region
          _
        $region24: #{tpu_custom_call.1} parent=11 // pred_fallthru
          _
      $region12: #{tpu_custom_call.1} parent=5 // pred_fallthru
        _
      %p152 = scmp.lt.s32.totalorder %s13, 2
      // Predicated region
      $region25: #{tpu_custom_call.1} parent=5 // pred_check
        %p153 = pneg %p152
      $region26: #{tpu_custom_call.1} parent=5 // pred_check_branch
        %155 = sbr.rel (%p153) target = $region28
      $region27: #{tpu_custom_call.1} parent=5 // pred_region
        // Predicated region
        $region29: #{tpu_custom_call.1} parent=27 // pred_check
          %p156 = pneg %p33
        $region30: #{tpu_custom_call.1} parent=27 // pred_check_branch
          %158 = sbr.rel (%p156) target = $region32
        $region31: #{tpu_custom_call.1} parent=27 // pred_region
          %p159 = scmp.lt.s32.totalorder %s13, 1
          %s160 = scalar_select %p159, %s13, 1
          %s161 = smul.addr %s160, 32
          %s162 = smul.addr %s161, 4
          %s163 = scalar_lea.vmem %s0, %s162
        $region32: #{tpu_custom_call.1} parent=27 // pred_fallthru
          _
      $region28: #{tpu_custom_call.1} parent=5 // pred_fallthru
        _
      %p164 = scmp.le.s32.totalorder 1, %s13
      %p165 = scmp.lt.s32.totalorder %s13, 3
      %p166 = pnand %p164, %p165
      %p167 = pneg %p166
      // Predicated region
      $region33: #{tpu_custom_call.1} parent=5 // pred_check
        _
      $region34: #{tpu_custom_call.1} parent=5 // pred_check_branch
        %169 = sbr.rel (%p166) target = $region36
      $region35: #{tpu_custom_call.1} parent=5 // pred_region
        %s170 = ssub.s32 %s13, 1
        %p171 = scmp.lt.s32.totalorder %s18, 1
        %s172 = scalar_select %p171, %s18, 1
        %s173 = smul.addr %s172, 32
        %s174 = smul.addr %s173, 4
        %s175 = scalar_lea.vmem %s0, %s174
        %p176 = pneg %p39
        %p177 = pneg %p36
        %p178 = pneg %p60
        %p179 = pneg %p57
        %p180 = pneg %p81
        %p181 = pneg %p78
        %p182 = pneg %p102
        %p183 = pneg %p99
        %p184 = pneg %p128
        %p185 = pneg %p125
        %s186 = sand.u32 %s115, 1
        %s187 = scalar_lea.sflag [#allocation4], %s186
        %s188 = sand.u32 %s115, 1
        %s189 = smul.addr %s188, 128
        %s190 = scalar_lea.vmem [#allocation3], %s189
        %p191 = scmp.lt.s32.totalorder %s18, 1
        %s192 = scalar_select %p191, %s18, 1
        %s193 = smul.addr %s192, 32
        %s194 = smul.addr %s193, 4
        %s195 = scalar_lea.vmem %s0, %s194
        %vm197 = vcmask 19456
        %198 = vst.msk [vmem:[#allocation2] sm:$0xf] %vm197, 0
        %199 = vst.msk [vmem:[#allocation2 + $0x4] sm:$0xf] %vm197, 0
        %vm200 = vcmask 16384
        %201 = vst.msk [vmem:[#allocation2 + $0x8] sm:$0x1] %vm200, 0
        %s202 = scalar_lea.vmem [#allocation2], 204
        %203 = vst.msk [vmem:[%s202] sm:$0xf] %vm197, 0
        %204 = vst.msk [vmem:[%s202 + $0x4] sm:$0xf] %vm197, 0
        %205 = vst.msk [vmem:[%s202 + $0x8] sm:$0x1] %vm200, 0
        %vm206 = vcmask 16384
        %vm207 = vsmask.f32 256
        %vm208 = vmand %vm206, %vm207
        %v209 = vld [vmem:[#allocation2] sm:$0x1]
        %v210 = vsel %vm208, 0, %v209
        %211 = vst [vmem:[#allocation2] sm:$0x1] %v210
        %v212 = vld [vmem:[#allocation2 + $0xc] sm:$0x1]
        %v213 = vsel %vm208, 0, %v212
        %214 = vst [vmem:[#allocation2 + $0xc] sm:$0x1] %v213
        %v215 = vld [vmem:[#allocation2 + $0x18] sm:$0x1]
        %v216 = vsel %vm208, 0, %v215
        %217 = vst [vmem:[#allocation2 + $0x18] sm:$0x1] %v216
        %v218 = vld [vmem:[#allocation2 + $0x24] sm:$0x1]
        %v219 = vsel %vm208, 0, %v218
        %220 = vst [vmem:[#allocation2 + $0x24] sm:$0x1] %v219
        %v221 = vld [vmem:[#allocation2 + $0x30] sm:$0x1]
        %v222 = vsel %vm208, 0, %v221
        %223 = vst [vmem:[#allocation2 + $0x30] sm:$0x1] %v222
        %v224 = vld [vmem:[#allocation2 + $0x3c] sm:$0x1]
        %v225 = vsel %vm208, 0, %v224
        %226 = vst [vmem:[#allocation2 + $0x3c] sm:$0x1] %v225
        %v227 = vld [vmem:[#allocation2 + $0x48] sm:$0x1]
        %v228 = vsel %vm208, 0, %v227
        %229 = vst [vmem:[#allocation2 + $0x48] sm:$0x1] %v228
        %v230 = vld [vmem:[#allocation2 + $0x54] sm:$0x1]
        %v231 = vsel %vm208, 0, %v230
        %232 = vst [vmem:[#allocation2 + $0x54] sm:$0x1] %v231
        %v233 = vld [vmem:[#allocation2 + $0x60] sm:$0x1]
        %v234 = vsel %vm208, 0, %v233
        %235 = vst [vmem:[#allocation2 + $0x60] sm:$0x1] %v234
        %v236 = vld [vmem:[#allocation2 + $0x6c] sm:$0x1]
        %v237 = vsel %vm208, 0, %v236
        %238 = vst [vmem:[#allocation2 + $0x6c] sm:$0x1] %v237
        %v239 = vld [vmem:[#allocation2 + $0x78] sm:$0x1]
        %v240 = vsel %vm208, 0, %v239
        %241 = vst [vmem:[#allocation2 + $0x78] sm:$0x1] %v240
        %v242 = vld [vmem:[#allocation2 + $0x84] sm:$0x1]
        %v243 = vsel %vm208, 0, %v242
        %244 = vst [vmem:[#allocation2 + $0x84] sm:$0x1] %v243
        %v245 = vld [vmem:[#allocation2 + $0x90] sm:$0x1]
        %v246 = vsel %vm208, 0, %v245
        %247 = vst [vmem:[#allocation2 + $0x90] sm:$0x1] %v246
        %v248 = vld [vmem:[#allocation2 + $0x9c] sm:$0x1]
        %v249 = vsel %vm208, 0, %v248
        %250 = vst [vmem:[#allocation2 + $0x9c] sm:$0x1] %v249
        %v251 = vld [vmem:[#allocation2 + $0xa8] sm:$0x1]
        %v252 = vsel %vm208, 0, %v251
        %253 = vst [vmem:[#allocation2 + $0xa8] sm:$0x1] %v252
        %v254 = vld [vmem:[#allocation2 + $0xb4] sm:$0x1]
        %v255 = vsel %vm208, 0, %v254
        %256 = vst [vmem:[#allocation2 + $0xb4] sm:$0x1] %v255
        %v257 = vld [vmem:[#allocation2 + $0xc0] sm:$0x1]
        %v258 = vsel %vm208, 0, %v257
        %259 = vst [vmem:[#allocation2 + $0xc0] sm:$0x1] %v258
        %v260 = vld [vmem:[#allocation2 + $0xcc] sm:$0x1]
        %v261 = vsel %vm208, 0, %v260
        %262 = vst [vmem:[#allocation2 + $0xcc] sm:$0x1] %v261
        %vm263 = vsmask.f32 7938
        %vm264 = vmand %vm206, %vm263
        %v265 = vld [vmem:[#allocation2 + $0x8] sm:$0x1]
        %v266 = vsel %vm264, 0, %v265
        %267 = vst [vmem:[#allocation2 + $0x8] sm:$0x1] %v266
        %v268 = vld [vmem:[#allocation2 + $0x14] sm:$0x1]
        %v269 = vsel %vm264, 0, %v268
        %270 = vst [vmem:[#allocation2 + $0x14] sm:$0x1] %v269
        %v271 = vld [vmem:[#allocation2 + $0x20] sm:$0x1]
        %v272 = vsel %vm264, 0, %v271
        %273 = vst [vmem:[#allocation2 + $0x20] sm:$0x1] %v272
        %v274 = vld [vmem:[#allocation2 + $0x2c] sm:$0x1]
        %v275 = vsel %vm264, 0, %v274
        %276 = vst [vmem:[#allocation2 + $0x2c] sm:$0x1] %v275
        %v277 = vld [vmem:[#allocation2 + $0x38] sm:$0x1]
        %v278 = vsel %vm264, 0, %v277
        %279 = vst [vmem:[#allocation2 + $0x38] sm:$0x1] %v278
        %v280 = vld [vmem:[#allocation2 + $0x44] sm:$0x1]
        %v281 = vsel %vm264, 0, %v280
        %282 = vst [vmem:[#allocation2 + $0x44] sm:$0x1] %v281
        %v283 = vld [vmem:[#allocation2 + $0x50] sm:$0x1]
        %v284 = vsel %vm264, 0, %v283
        %285 = vst [vmem:[#allocation2 + $0x50] sm:$0x1] %v284
        %v286 = vld [vmem:[#allocation2 + $0x5c] sm:$0x1]
        %v287 = vsel %vm264, 0, %v286
        %288 = vst [vmem:[#allocation2 + $0x5c] sm:$0x1] %v287
        %v289 = vld [vmem:[#allocation2 + $0x68] sm:$0x1]
        %v290 = vsel %vm264, 0, %v289
        %291 = vst [vmem:[#allocation2 + $0x68] sm:$0x1] %v290
        %v292 = vld [vmem:[#allocation2 + $0x74] sm:$0x1]
        %v293 = vsel %vm264, 0, %v292
        %294 = vst [vmem:[#allocation2 + $0x74] sm:$0x1] %v293
        %v295 = vld [vmem:[#allocation2 + $0x80] sm:$0x1]
        %v296 = vsel %vm264, 0, %v295
        %297 = vst [vmem:[#allocation2 + $0x80] sm:$0x1] %v296
        %v298 = vld [vmem:[#allocation2 + $0x8c] sm:$0x1]
        %v299 = vsel %vm264, 0, %v298
        %300 = vst [vmem:[#allocation2 + $0x8c] sm:$0x1] %v299
        %v301 = vld [vmem:[#allocation2 + $0x98] sm:$0x1]
        %v302 = vsel %vm264, 0, %v301
        %303 = vst [vmem:[#allocation2 + $0x98] sm:$0x1] %v302
        %v304 = vld [vmem:[#allocation2 + $0xa4] sm:$0x1]
        %v305 = vsel %vm264, 0, %v304
        %306 = vst [vmem:[#allocation2 + $0xa4] sm:$0x1] %v305
        %v307 = vld [vmem:[#allocation2 + $0xb0] sm:$0x1]
        %v308 = vsel %vm264, 0, %v307
        %309 = vst [vmem:[#allocation2 + $0xb0] sm:$0x1] %v308
        %v310 = vld [vmem:[#allocation2 + $0xbc] sm:$0x1]
        %v311 = vsel %vm264, 0, %v310
        %312 = vst [vmem:[#allocation2 + $0xbc] sm:$0x1] %v311
        %v313 = vld [vmem:[#allocation2 + $0xc8] sm:$0x1]
        %v314 = vsel %vm264, 0, %v313
        %315 = vst [vmem:[#allocation2 + $0xc8] sm:$0x1] %v314
        %v316 = vld [vmem:[#allocation2 + $0xd4] sm:$0x1]
        %v317 = vsel %vm264, 0, %v316
        %318 = vst [vmem:[#allocation2 + $0xd4] sm:$0x1] %v317
        %v319 = vld [vmem:[%s195] sm:$0xf]
        %v320 = vld [vmem:[%s195 + $0x4] sm:$0xf]
        %v321 = vld [vmem:[%s195 + $0x8] sm:$0xf]
        %v322 = vld [vmem:[%s195 + $0xc] sm:$0xf]
        %v323 = vld [vmem:[%s195 + $0x10] sm:$0xf]
        %v324 = vld [vmem:[%s195 + $0x14] sm:$0xf]
        %v325 = vld [vmem:[%s195 + $0x18] sm:$0xf]
        %v326 = vld [vmem:[%s195 + $0x1c] sm:$0xf]
        %v327 = vld [vmem:[%s195 + $0x20] sm:$0xf]
        %v328 = vld [vmem:[%s195 + $0x24] sm:$0xf]
        %v329 = vld [vmem:[%s195 + $0x28] sm:$0xf]
        %v330 = vld [vmem:[%s195 + $0x2c] sm:$0xf]
        %v331 = vld [vmem:[%s195 + $0x30] sm:$0xf]
        %v332 = vld [vmem:[%s195 + $0x34] sm:$0xf]
        %v333 = vld [vmem:[%s195 + $0x38] sm:$0xf]
        %v334 = vld [vmem:[%s195 + $0x3c] sm:$0xf]
        %v335 = vld [vmem:[%s195 + $0x40] sm:$0xf]
        %v336 = vld [vmem:[%s195 + $0x44] sm:$0xf]
        %v337 = vld [vmem:[%s195 + $0x48] sm:$0xf]
        %v338 = vld [vmem:[%s195 + $0x4c] sm:$0xf]
        %v339 = vld [vmem:[%s195 + $0x50] sm:$0xf]
        %v340 = vld [vmem:[%s195 + $0x54] sm:$0xf]
        %v341 = vld [vmem:[%s195 + $0x58] sm:$0xf]
        %v342 = vld [vmem:[%s195 + $0x5c] sm:$0xf]
        %v343 = vld [vmem:[%s195 + $0x60] sm:$0xf]
        %v344 = vld [vmem:[%s195 + $0x64] sm:$0xf]
        %v345 = vld [vmem:[%s195 + $0x68] sm:$0xf]
        %v346 = vld [vmem:[%s195 + $0x6c] sm:$0xf]
        %v347 = vld [vmem:[%s195 + $0x70] sm:$0xf]
        %v348 = vld [vmem:[%s195 + $0x74] sm:$0xf]
        %v349 = vld [vmem:[%s195 + $0x78] sm:$0xf]
        %v350 = vld [vmem:[%s195 + $0x7c] sm:$0xf]
        %vm351 = vsmask.f32 4368
        %vm352 = vmor %vm207, %vm351
        %v354 = vshrl.u32 %v319, 16
        %v356 = vrot.slane %v354, 7
        %v357 = vshll.u32 %v319, 16
        %v359 = vor.u32 %v356, %v357
        %v360 = vrot.slane %v356, 4
        %v362 = vshrl.u32 %v320, 16
        %v364 = vrot.slane %v362, 7
        %v365 = vshll.u32 %v320, 16
        %v367 = vor.u32 %v364, %v365
        %v368 = vsel %vm352, %v360, %v367
        %v369 = vrot.slane %v364, 4
        %v371 = vshrl.u32 %v321, 16
        %v373 = vrot.slane %v371, 7
        %v374 = vshll.u32 %v321, 16
        %v376 = vor.u32 %v373, %v374
        %v377 = vrot.slane %v373, 4
        %v379 = vshrl.u32 %v322, 16
        %v381 = vrot.slane %v379, 7
        %v382 = vshll.u32 %v322, 16
        %v384 = vor.u32 %v381, %v382
        %v385 = vsel %vm352, %v377, %v384
        %v386 = vrot.slane %v381, 4
        %v388 = vshrl.u32 %v323, 16
        %v390 = vrot.slane %v388, 7
        %v391 = vshll.u32 %v323, 16
        %v393 = vor.u32 %v390, %v391
        %v394 = vrot.slane %v390, 4
        %v396 = vshrl.u32 %v324, 16
        %v398 = vrot.slane %v396, 7
        %v399 = vshll.u32 %v324, 16
        %v401 = vor.u32 %v398, %v399
        %v402 = vsel %vm352, %v394, %v401
        %v403 = vrot.slane %v398, 4
        %v405 = vshrl.u32 %v325, 16
        %v407 = vrot.slane %v405, 7
        %v408 = vshll.u32 %v325, 16
        %v410 = vor.u32 %v407, %v408
        %v411 = vrot.slane %v407, 4
        %v413 = vshrl.u32 %v326, 16
        %v415 = vrot.slane %v413, 7
        %v416 = vshll.u32 %v326, 16
        %v418 = vor.u32 %v415, %v416
        %v419 = vsel %vm352, %v411, %v418
        %v420 = vrot.slane %v415, 4
        %v422 = vshrl.u32 %v327, 16
        %v424 = vrot.slane %v422, 7
        %v425 = vshll.u32 %v327, 16
        %v427 = vor.u32 %v424, %v425
        %v428 = vrot.slane %v424, 4
        %v430 = vshrl.u32 %v328, 16
        %v432 = vrot.slane %v430, 7
        %v433 = vshll.u32 %v328, 16
        %v435 = vor.u32 %v432, %v433
        %v436 = vsel %vm352, %v428, %v435
        %v437 = vrot.slane %v432, 4
        %v439 = vshrl.u32 %v329, 16
        %v441 = vrot.slane %v439, 7
        %v442 = vshll.u32 %v329, 16
        %v444 = vor.u32 %v441, %v442
        %v445 = vrot.slane %v441, 4
        %v447 = vshrl.u32 %v330, 16
        %v449 = vrot.slane %v447, 7
        %v450 = vshll.u32 %v330, 16
        %v452 = vor.u32 %v449, %v450
        %v453 = vsel %vm352, %v445, %v452
        %v454 = vrot.slane %v449, 4
        %v456 = vshrl.u32 %v331, 16
        %v458 = vrot.slane %v456, 7
        %v459 = vshll.u32 %v331, 16
        %v461 = vor.u32 %v458, %v459
        %v462 = vrot.slane %v458, 4
        %v464 = vshrl.u32 %v332, 16
        %v466 = vrot.slane %v464, 7
        %v467 = vshll.u32 %v332, 16
        %v469 = vor.u32 %v466, %v467
        %v470 = vsel %vm352, %v462, %v469
        %v471 = vrot.slane %v466, 4
        %v473 = vshrl.u32 %v333, 16
        %v475 = vrot.slane %v473, 7
        %v476 = vshll.u32 %v333, 16
        %v478 = vor.u32 %v475, %v476
        %v479 = vrot.slane %v475, 4
        %v481 = vshrl.u32 %v334, 16
        %v483 = vrot.slane %v481, 7
        %v484 = vshll.u32 %v334, 16
        %v486 = vor.u32 %v483, %v484
        %v487 = vsel %vm352, %v479, %v486
        %v488 = vrot.slane %v483, 4
        %v490 = vshrl.u32 %v335, 16
        %v492 = vrot.slane %v490, 7
        %v493 = vshll.u32 %v335, 16
        %v495 = vor.u32 %v492, %v493
        %v496 = vrot.slane %v492, 4
        %v498 = vshrl.u32 %v336, 16
        %v500 = vrot.slane %v498, 7
        %v501 = vshll.u32 %v336, 16
        %v503 = vor.u32 %v500, %v501
        %v504 = vsel %vm352, %v496, %v503
        %v505 = vrot.slane %v500, 4
        %v507 = vshrl.u32 %v337, 16
        %v509 = vrot.slane %v507, 7
        %v510 = vshll.u32 %v337, 16
        %v512 = vor.u32 %v509, %v510
        %v513 = vrot.slane %v509, 4
        %v515 = vshrl.u32 %v338, 16
        %v517 = vrot.slane %v515, 7
        %v518 = vshll.u32 %v338, 16
        %v520 = vor.u32 %v517, %v518
        %v521 = vsel %vm352, %v513, %v520
        %v522 = vrot.slane %v517, 4
        %v524 = vshrl.u32 %v339, 16
        %v526 = vrot.slane %v524, 7
        %v527 = vshll.u32 %v339, 16
        %v529 = vor.u32 %v526, %v527
        %v530 = vrot.slane %v526, 4
        %v532 = vshrl.u32 %v340, 16
        %v534 = vrot.slane %v532, 7
        %v535 = vshll.u32 %v340, 16
        %v537 = vor.u32 %v534, %v535
        %v538 = vsel %vm352, %v530, %v537
        %v539 = vrot.slane %v534, 4
        %v541 = vshrl.u32 %v341, 16
        %v543 = vrot.slane %v541, 7
        %v544 = vshll.u32 %v341, 16
        %v546 = vor.u32 %v543, %v544
        %v547 = vrot.slane %v543, 4
        %v549 = vshrl.u32 %v342, 16
        %v551 = vrot.slane %v549, 7
        %v552 = vshll.u32 %v342, 16
        %v554 = vor.u32 %v551, %v552
        %v555 = vsel %vm352, %v547, %v554
        %v556 = vrot.slane %v551, 4
        %v558 = vshrl.u32 %v343, 16
        %v560 = vrot.slane %v558, 7
        %v561 = vshll.u32 %v343, 16
        %v563 = vor.u32 %v560, %v561
        %v564 = vrot.slane %v560, 4
        %v566 = vshrl.u32 %v344, 16
        %v568 = vrot.slane %v566, 7
        %v569 = vshll.u32 %v344, 16
        %v571 = vor.u32 %v568, %v569
        %v572 = vsel %vm352, %v564, %v571
        %v573 = vrot.slane %v568, 4
        %v575 = vshrl.u32 %v345, 16
        %v577 = vrot.slane %v575, 7
        %v578 = vshll.u32 %v345, 16
        %v580 = vor.u32 %v577, %v578
        %v581 = vrot.slane %v577, 4
        %v583 = vshrl.u32 %v346, 16
        %v585 = vrot.slane %v583, 7
        %v586 = vshll.u32 %v346, 16
        %v588 = vor.u32 %v585, %v586
        %v589 = vsel %vm352, %v581, %v588
        %v590 = vrot.slane %v585, 4
        %v592 = vshrl.u32 %v347, 16
        %v594 = vrot.slane %v592, 7
        %v595 = vshll.u32 %v347, 16
        %v597 = vor.u32 %v594, %v595
        %v598 = vrot.slane %v594, 4
        %v600 = vshrl.u32 %v348, 16
        %v602 = vrot.slane %v600, 7
        %v603 = vshll.u32 %v348, 16
        %v605 = vor.u32 %v602, %v603
        %v606 = vsel %vm352, %v598, %v605
        %v607 = vrot.slane %v602, 4
        %v609 = vshrl.u32 %v349, 16
        %v611 = vrot.slane %v609, 7
        %v612 = vshll.u32 %v349, 16
        %v614 = vor.u32 %v611, %v612
        %v615 = vrot.slane %v611, 4
        %v617 = vshrl.u32 %v350, 16
        %v619 = vrot.slane %v617, 7
        %v620 = vshll.u32 %v350, 16
        %v622 = vor.u32 %v619, %v620
        %v623 = vsel %vm352, %v615, %v622
        %v624 = vrot.slane %v619, 4
        %s673 = scalar_lea.vmem [#allocation2], 12
        %vm674 = vcmask 19456
        %vm675 = vmand %vm674, %vm263
        %v676 = vld [vmem:[%s673] sm:$0xf]
        %v677 = vsel %vm675, %v359, %v676
        %678 = vst [vmem:[%s673] sm:$0xf] %v677
        %679 = vst.msk [vmem:[%s673 + $0x4] sm:$0xf] %vm197, %v368
        %v680 = vld [vmem:[%s673 + $0x8] sm:$0x1]
        %v681 = vsel %vm208, %v369, %v680
        %682 = vst [vmem:[%s673 + $0x8] sm:$0x1] %v681
        %v683 = vld [vmem:[%s673 + $0xc] sm:$0xf]
        %v684 = vsel %vm675, %v376, %v683
        %685 = vst [vmem:[%s673 + $0xc] sm:$0xf] %v684
        %686 = vst.msk [vmem:[%s673 + $0x10] sm:$0xf] %vm197, %v385
        %v687 = vld [vmem:[%s673 + $0x14] sm:$0x1]
        %v688 = vsel %vm208, %v386, %v687
        %689 = vst [vmem:[%s673 + $0x14] sm:$0x1] %v688
        %v690 = vld [vmem:[%s673 + $0x18] sm:$0xf]
        %v691 = vsel %vm675, %v393, %v690
        %692 = vst [vmem:[%s673 + $0x18] sm:$0xf] %v691
        %693 = vst.msk [vmem:[%s673 + $0x1c] sm:$0xf] %vm197, %v402
        %v694 = vld [vmem:[%s673 + $0x20] sm:$0x1]
        %v695 = vsel %vm208, %v403, %v694
        %696 = vst [vmem:[%s673 + $0x20] sm:$0x1] %v695
        %v697 = vld [vmem:[%s673 + $0x24] sm:$0xf]
        %v698 = vsel %vm675, %v410, %v697
        %699 = vst [vmem:[%s673 + $0x24] sm:$0xf] %v698
        %700 = vst.msk [vmem:[%s673 + $0x28] sm:$0xf] %vm197, %v419
        %v701 = vld [vmem:[%s673 + $0x2c] sm:$0x1]
        %v702 = vsel %vm208, %v420, %v701
        %703 = vst [vmem:[%s673 + $0x2c] sm:$0x1] %v702
        %v704 = vld [vmem:[%s673 + $0x30] sm:$0xf]
        %v705 = vsel %vm675, %v427, %v704
        %706 = vst [vmem:[%s673 + $0x30] sm:$0xf] %v705
        %707 = vst.msk [vmem:[%s673 + $0x34] sm:$0xf] %vm197, %v436
        %v708 = vld [vmem:[%s673 + $0x38] sm:$0x1]
        %v709 = vsel %vm208, %v437, %v708
        %710 = vst [vmem:[%s673 + $0x38] sm:$0x1] %v709
        %v711 = vld [vmem:[%s673 + $0x3c] sm:$0xf]
        %v712 = vsel %vm675, %v444, %v711
        %713 = vst [vmem:[%s673 + $0x3c] sm:$0xf] %v712
        %714 = vst.msk [vmem:[%s673 + $0x40] sm:$0xf] %vm197, %v453
        %v715 = vld [vmem:[%s673 + $0x44] sm:$0x1]
        %v716 = vsel %vm208, %v454, %v715
        %717 = vst [vmem:[%s673 + $0x44] sm:$0x1] %v716
        %v718 = vld [vmem:[%s673 + $0x48] sm:$0xf]
        %v719 = vsel %vm675, %v461, %v718
        %720 = vst [vmem:[%s673 + $0x48] sm:$0xf] %v719
        %721 = vst.msk [vmem:[%s673 + $0x4c] sm:$0xf] %vm197, %v470
        %v722 = vld [vmem:[%s673 + $0x50] sm:$0x1]
        %v723 = vsel %vm208, %v471, %v722
        %724 = vst [vmem:[%s673 + $0x50] sm:$0x1] %v723
        %v725 = vld [vmem:[%s673 + $0x54] sm:$0xf]
        %v726 = vsel %vm675, %v478, %v725
        %727 = vst [vmem:[%s673 + $0x54] sm:$0xf] %v726
        %728 = vst.msk [vmem:[%s673 + $0x58] sm:$0xf] %vm197, %v487
        %v729 = vld [vmem:[%s673 + $0x5c] sm:$0x1]
        %v730 = vsel %vm208, %v488, %v729
        %731 = vst [vmem:[%s673 + $0x5c] sm:$0x1] %v730
        %v732 = vld [vmem:[%s673 + $0x60] sm:$0xf]
        %v733 = vsel %vm675, %v495, %v732
        %734 = vst [vmem:[%s673 + $0x60] sm:$0xf] %v733
        %735 = vst.msk [vmem:[%s673 + $0x64] sm:$0xf] %vm197, %v504
        %v736 = vld [vmem:[%s673 + $0x68] sm:$0x1]
        %v737 = vsel %vm208, %v505, %v736
        %738 = vst [vmem:[%s673 + $0x68] sm:$0x1] %v737
        %v739 = vld [vmem:[%s673 + $0x6c] sm:$0xf]
        %v740 = vsel %vm675, %v512, %v739
        %741 = vst [vmem:[%s673 + $0x6c] sm:$0xf] %v740
        %742 = vst.msk [vmem:[%s673 + $0x70] sm:$0xf] %vm197, %v521
        %v743 = vld [vmem:[%s673 + $0x74] sm:$0x1]
        %v744 = vsel %vm208, %v522, %v743
        %745 = vst [vmem:[%s673 + $0x74] sm:$0x1] %v744
        %v746 = vld [vmem:[%s673 + $0x78] sm:$0xf]
        %v747 = vsel %vm675, %v529, %v746
        %748 = vst [vmem:[%s673 + $0x78] sm:$0xf] %v747
        %749 = vst.msk [vmem:[%s673 + $0x7c] sm:$0xf] %vm197, %v538
        %v750 = vld [vmem:[%s673 + $0x80] sm:$0x1]
        %v751 = vsel %vm208, %v539, %v750
        %752 = vst [vmem:[%s673 + $0x80] sm:$0x1] %v751
        %v753 = vld [vmem:[%s673 + $0x84] sm:$0xf]
        %v754 = vsel %vm675, %v546, %v753
        %755 = vst [vmem:[%s673 + $0x84] sm:$0xf] %v754
        %756 = vst.msk [vmem:[%s673 + $0x88] sm:$0xf] %vm197, %v555
        %v757 = vld [vmem:[%s673 + $0x8c] sm:$0x1]
        %v758 = vsel %vm208, %v556, %v757
        %759 = vst [vmem:[%s673 + $0x8c] sm:$0x1] %v758
        %v760 = vld [vmem:[%s673 + $0x90] sm:$0xf]
        %v761 = vsel %vm675, %v563, %v760
        %762 = vst [vmem:[%s673 + $0x90] sm:$0xf] %v761
        %763 = vst.msk [vmem:[%s673 + $0x94] sm:$0xf] %vm197, %v572
        %v764 = vld [vmem:[%s673 + $0x98] sm:$0x1]
        %v765 = vsel %vm208, %v573, %v764
        %766 = vst [vmem:[%s673 + $0x98] sm:$0x1] %v765
        %v767 = vld [vmem:[%s673 + $0x9c] sm:$0xf]
        %v768 = vsel %vm675, %v580, %v767
        %769 = vst [vmem:[%s673 + $0x9c] sm:$0xf] %v768
        %770 = vst.msk [vmem:[%s673 + $0xa0] sm:$0xf] %vm197, %v589
        %v771 = vld [vmem:[%s673 + $0xa4] sm:$0x1]
        %v772 = vsel %vm208, %v590, %v771
        %773 = vst [vmem:[%s673 + $0xa4] sm:$0x1] %v772
        %v774 = vld [vmem:[%s673 + $0xa8] sm:$0xf]
        %v775 = vsel %vm675, %v597, %v774
        %776 = vst [vmem:[%s673 + $0xa8] sm:$0xf] %v775
        %777 = vst.msk [vmem:[%s673 + $0xac] sm:$0xf] %vm197, %v606
        %v778 = vld [vmem:[%s673 + $0xb0] sm:$0x1]
        %v779 = vsel %vm208, %v607, %v778
        %780 = vst [vmem:[%s673 + $0xb0] sm:$0x1] %v779
        %v781 = vld [vmem:[%s673 + $0xb4] sm:$0xf]
        %v782 = vsel %vm675, %v614, %v781
        %783 = vst [vmem:[%s673 + $0xb4] sm:$0xf] %v782
        %784 = vst.msk [vmem:[%s673 + $0xb8] sm:$0xf] %vm197, %v623
        %v785 = vld [vmem:[%s673 + $0xbc] sm:$0x1]
        %v786 = vsel %vm208, %v624, %v785
        %787 = vst [vmem:[%s673 + $0xbc] sm:$0x1] %v786
        %v788 = vld [vmem:[#allocation2] sm:$0xf]
        %v789 = vld [vmem:[#allocation2 + $0x4] sm:$0xf]
        %v790 = vld [vmem:[#allocation2 + $0xc] sm:$0xf]
        %v791 = vld [vmem:[#allocation2 + $0x10] sm:$0xf]
        %v792 = vld [vmem:[#allocation2 + $0x18] sm:$0xf]
        %v793 = vld [vmem:[#allocation2 + $0x1c] sm:$0xf]
        %v794 = vld [vmem:[#allocation2 + $0x24] sm:$0xf]
        %v795 = vld [vmem:[#allocation2 + $0x28] sm:$0xf]
        %v796 = vld [vmem:[#allocation2 + $0x30] sm:$0xf]
        %v797 = vld [vmem:[#allocation2 + $0x34] sm:$0xf]
        %v798 = vld [vmem:[#allocation2 + $0x3c] sm:$0xf]
        %v799 = vld [vmem:[#allocation2 + $0x40] sm:$0xf]
        %v800 = vld [vmem:[#allocation2 + $0x48] sm:$0xf]
        %v801 = vld [vmem:[#allocation2 + $0x4c] sm:$0xf]
        %v802 = vld [vmem:[#allocation2 + $0x54] sm:$0xf]
        %v803 = vld [vmem:[#allocation2 + $0x58] sm:$0xf]
        %v804 = vld [vmem:[#allocation2 + $0x60] sm:$0xf]
        %v805 = vld [vmem:[#allocation2 + $0x64] sm:$0xf]
        %v806 = vld [vmem:[#allocation2 + $0x6c] sm:$0xf]
        %v807 = vld [vmem:[#allocation2 + $0x70] sm:$0xf]
        %v808 = vld [vmem:[#allocation2 + $0x78] sm:$0xf]
        %v809 = vld [vmem:[#allocation2 + $0x7c] sm:$0xf]
        %v810 = vld [vmem:[#allocation2 + $0x84] sm:$0xf]
        %v811 = vld [vmem:[#allocation2 + $0x88] sm:$0xf]
        %v812 = vld [vmem:[#allocation2 + $0x90] sm:$0xf]
        %v813 = vld [vmem:[#allocation2 + $0x94] sm:$0xf]
        %v814 = vld [vmem:[#allocation2 + $0x9c] sm:$0xf]
        %v815 = vld [vmem:[#allocation2 + $0xa0] sm:$0xf]
        %v816 = vld [vmem:[#allocation2 + $0xa8] sm:$0xf]
        %v817 = vld [vmem:[#allocation2 + $0xac] sm:$0xf]
        %v818 = vld [vmem:[#allocation2 + $0xb4] sm:$0xf]
        %v819 = vld [vmem:[#allocation2 + $0xb8] sm:$0xf]
        %v820 = vld [vmem:[%s1] sm:$0x3]
        %v821 = vld [vmem:[#allocation2 + $0x8] sm:$0x1]
        %v822 = vld [vmem:[#allocation2 + $0x14] sm:$0x1]
        %v823 = vld [vmem:[#allocation2 + $0x20] sm:$0x1]
        %v824 = vld [vmem:[#allocation2 + $0x2c] sm:$0x1]
        %v825 = vld [vmem:[#allocation2 + $0x38] sm:$0x1]
        %v826 = vld [vmem:[#allocation2 + $0x44] sm:$0x1]
        %v827 = vld [vmem:[#allocation2 + $0x50] sm:$0x1]
        %v828 = vld [vmem:[#allocation2 + $0x5c] sm:$0x1]
        %v829 = vld [vmem:[#allocation2 + $0x68] sm:$0x1]
        %v830 = vld [vmem:[#allocation2 + $0x74] sm:$0x1]
        %v831 = vld [vmem:[#allocation2 + $0x80] sm:$0x1]
        %v832 = vld [vmem:[#allocation2 + $0x8c] sm:$0x1]
        %v833 = vld [vmem:[#allocation2 + $0x98] sm:$0x1]
        %v834 = vld [vmem:[#allocation2 + $0xa4] sm:$0x1]
        %v835 = vld [vmem:[#allocation2 + $0xb0] sm:$0x1]
        %v836 = vld [vmem:[#allocation2 + $0xbc] sm:$0x1]
        %vm837 = vsmask.f32 3328
        %vm838 = vsmask.f32 7440
        %vm839 = vmor %vm837, %vm838
        %v841 = vshrl.u32 %v788, 16
        %v843 = vrot.slane %v841, 4
        %v844 = vshll.u32 %v788, 16
        %v846 = vrot.slane %v844, 5
        %v847 = vor.u32 %v843, %v846
        %v848 = vrot.slane %v847, 4
        %v850 = vshll.u32 %v789, 16
        %v852 = vrot.slane %v850, 5
        %v853 = vsel %vm839, %v848, %v852
        %v854 = vshrl.u32 %v789, 16
        %v856 = vrot.slane %v854, 4
        %v857 = vor.u32 %v856, %v852
        %v858 = vrot.slane %v857, 4
        %v860 = vshll.u32 %v821, 16
        %v862 = vrot.slane %v860, 5
        %v863 = vsel %vm839, %v858, %v862
        %v865 = vshrl.u32 %v790, 16
        %v867 = vrot.slane %v865, 4
        %v868 = vshll.u32 %v790, 16
        %v870 = vrot.slane %v868, 5
        %v871 = vor.u32 %v867, %v870
        %v872 = vrot.slane %v871, 4
        %v874 = vshll.u32 %v791, 16
        %v876 = vrot.slane %v874, 5
        %v877 = vsel %vm839, %v872, %v876
        %v878 = vshrl.u32 %v791, 16
        %v880 = vrot.slane %v878, 4
        %v881 = vor.u32 %v880, %v876
        %v882 = vrot.slane %v881, 4
        %v884 = vshll.u32 %v822, 16
        %v886 = vrot.slane %v884, 5
        %v887 = vsel %vm839, %v882, %v886
        %v889 = vshrl.u32 %v792, 16
        %v891 = vrot.slane %v889, 4
        %v892 = vshll.u32 %v792, 16
        %v894 = vrot.slane %v892, 5
        %v895 = vor.u32 %v891, %v894
        %v896 = vrot.slane %v895, 4
        %v898 = vshll.u32 %v793, 16
        %v900 = vrot.slane %v898, 5
        %v901 = vsel %vm839, %v896, %v900
        %v902 = vshrl.u32 %v793, 16
        %v904 = vrot.slane %v902, 4
        %v905 = vor.u32 %v904, %v900
        %v906 = vrot.slane %v905, 4
        %v908 = vshll.u32 %v823, 16
        %v910 = vrot.slane %v908, 5
        %v911 = vsel %vm839, %v906, %v910
        %v913 = vshrl.u32 %v794, 16
        %v915 = vrot.slane %v913, 4
        %v916 = vshll.u32 %v794, 16
        %v918 = vrot.slane %v916, 5
        %v919 = vor.u32 %v915, %v918
        %v920 = vrot.slane %v919, 4
        %v922 = vshll.u32 %v795, 16
        %v924 = vrot.slane %v922, 5
        %v925 = vsel %vm839, %v920, %v924
        %v926 = vshrl.u32 %v795, 16
        %v928 = vrot.slane %v926, 4
        %v929 = vor.u32 %v928, %v924
        %v930 = vrot.slane %v929, 4
        %v932 = vshll.u32 %v824, 16
        %v934 = vrot.slane %v932, 5
        %v935 = vsel %vm839, %v930, %v934
        %v937 = vshrl.u32 %v796, 16
        %v939 = vrot.slane %v937, 4
        %v940 = vshll.u32 %v796, 16
        %v942 = vrot.slane %v940, 5
        %v943 = vor.u32 %v939, %v942
        %v944 = vrot.slane %v943, 4
        %v946 = vshll.u32 %v797, 16
        %v948 = vrot.slane %v946, 5
        %v949 = vsel %vm839, %v944, %v948
        %v950 = vshrl.u32 %v797, 16
        %v952 = vrot.slane %v950, 4
        %v953 = vor.u32 %v952, %v948
        %v954 = vrot.slane %v953, 4
        %v956 = vshll.u32 %v825, 16
        %v958 = vrot.slane %v956, 5
        %v959 = vsel %vm839, %v954, %v958
        %v961 = vshrl.u32 %v798, 16
        %v963 = vrot.slane %v961, 4
        %v964 = vshll.u32 %v798, 16
        %v966 = vrot.slane %v964, 5
        %v967 = vor.u32 %v963, %v966
        %v968 = vrot.slane %v967, 4
        %v970 = vshll.u32 %v799, 16
        %v972 = vrot.slane %v970, 5
        %v973 = vsel %vm839, %v968, %v972
        %v974 = vshrl.u32 %v799, 16
        %v976 = vrot.slane %v974, 4
        %v977 = vor.u32 %v976, %v972
        %v978 = vrot.slane %v977, 4
        %v980 = vshll.u32 %v826, 16
        %v982 = vrot.slane %v980, 5
        %v983 = vsel %vm839, %v978, %v982
        %v985 = vshrl.u32 %v800, 16
        %v987 = vrot.slane %v985, 4
        %v988 = vshll.u32 %v800, 16
        %v990 = vrot.slane %v988, 5
        %v991 = vor.u32 %v987, %v990
        %v992 = vrot.slane %v991, 4
        %v994 = vshll.u32 %v801, 16
        %v996 = vrot.slane %v994, 5
        %v997 = vsel %vm839, %v992, %v996
        %v998 = vshrl.u32 %v801, 16
        %v1000 = vrot.slane %v998, 4
        %v1001 = vor.u32 %v1000, %v996
        %v1002 = vrot.slane %v1001, 4
        %v1004 = vshll.u32 %v827, 16
        %v1006 = vrot.slane %v1004, 5
        %v1007 = vsel %vm839, %v1002, %v1006
        %v1009 = vshrl.u32 %v802, 16
        %v1011 = vrot.slane %v1009, 4
        %v1012 = vshll.u32 %v802, 16
        %v1014 = vrot.slane %v1012, 5
        %v1015 = vor.u32 %v1011, %v1014
        %v1016 = vrot.slane %v1015, 4
        %v1018 = vshll.u32 %v803, 16
        %v1020 = vrot.slane %v1018, 5
        %v1021 = vsel %vm839, %v1016, %v1020
        %v1022 = vshrl.u32 %v803, 16
        %v1024 = vrot.slane %v1022, 4
        %v1025 = vor.u32 %v1024, %v1020
        %v1026 = vrot.slane %v1025, 4
        %v1028 = vshll.u32 %v828, 16
        %v1030 = vrot.slane %v1028, 5
        %v1031 = vsel %vm839, %v1026, %v1030
        %v1033 = vshrl.u32 %v804, 16
        %v1035 = vrot.slane %v1033, 4
        %v1036 = vshll.u32 %v804, 16
        %v1038 = vrot.slane %v1036, 5
        %v1039 = vor.u32 %v1035, %v1038
        %v1040 = vrot.slane %v1039, 4
        %v1042 = vshll.u32 %v805, 16
        %v1044 = vrot.slane %v1042, 5
        %v1045 = vsel %vm839, %v1040, %v1044
        %v1046 = vshrl.u32 %v805, 16
        %v1048 = vrot.slane %v1046, 4
        %v1049 = vor.u32 %v1048, %v1044
        %v1050 = vrot.slane %v1049, 4
        %v1052 = vshll.u32 %v829, 16
        %v1054 = vrot.slane %v1052, 5
        %v1055 = vsel %vm839, %v1050, %v1054
        %v1057 = vshrl.u32 %v806, 16
        %v1059 = vrot.slane %v1057, 4
        %v1060 = vshll.u32 %v806, 16
        %v1062 = vrot.slane %v1060, 5
        %v1063 = vor.u32 %v1059, %v1062
        %v1064 = vrot.slane %v1063, 4
        %v1066 = vshll.u32 %v807, 16
        %v1068 = vrot.slane %v1066, 5
        %v1069 = vsel %vm839, %v1064, %v1068
        %v1070 = vshrl.u32 %v807, 16
        %v1072 = vrot.slane %v1070, 4
        %v1073 = vor.u32 %v1072, %v1068
        %v1074 = vrot.slane %v1073, 4
        %v1076 = vshll.u32 %v830, 16
        %v1078 = vrot.slane %v1076, 5
        %v1079 = vsel %vm839, %v1074, %v1078
        %v1081 = vshrl.u32 %v808, 16
        %v1083 = vrot.slane %v1081, 4
        %v1084 = vshll.u32 %v808, 16
        %v1086 = vrot.slane %v1084, 5
        %v1087 = vor.u32 %v1083, %v1086
        %v1088 = vrot.slane %v1087, 4
        %v1090 = vshll.u32 %v809, 16
        %v1092 = vrot.slane %v1090, 5
        %v1093 = vsel %vm839, %v1088, %v1092
        %v1094 = vshrl.u32 %v809, 16
        %v1096 = vrot.slane %v1094, 4
        %v1097 = vor.u32 %v1096, %v1092
        %v1098 = vrot.slane %v1097, 4
        %v1100 = vshll.u32 %v831, 16
        %v1102 = vrot.slane %v1100, 5
        %v1103 = vsel %vm839, %v1098, %v1102
        %v1105 = vshrl.u32 %v810, 16
        %v1107 = vrot.slane %v1105, 4
        %v1108 = vshll.u32 %v810, 16
        %v1110 = vrot.slane %v1108, 5
        %v1111 = vor.u32 %v1107, %v1110
        %v1112 = vrot.slane %v1111, 4
        %v1114 = vshll.u32 %v811, 16
        %v1116 = vrot.slane %v1114, 5
        %v1117 = vsel %vm839, %v1112, %v1116
        %v1118 = vshrl.u32 %v811, 16
        %v1120 = vrot.slane %v1118, 4
        %v1121 = vor.u32 %v1120, %v1116
        %v1122 = vrot.slane %v1121, 4
        %v1124 = vshll.u32 %v832, 16
        %v1126 = vrot.slane %v1124, 5
        %v1127 = vsel %vm839, %v1122, %v1126
        %v1129 = vshrl.u32 %v812, 16
        %v1131 = vrot.slane %v1129, 4
        %v1132 = vshll.u32 %v812, 16
        %v1134 = vrot.slane %v1132, 5
        %v1135 = vor.u32 %v1131, %v1134
        %v1136 = vrot.slane %v1135, 4
        %v1138 = vshll.u32 %v813, 16
        %v1140 = vrot.slane %v1138, 5
        %v1141 = vsel %vm839, %v1136, %v1140
        %v1142 = vshrl.u32 %v813, 16
        %v1144 = vrot.slane %v1142, 4
        %v1145 = vor.u32 %v1144, %v1140
        %v1146 = vrot.slane %v1145, 4
        %v1148 = vshll.u32 %v833, 16
        %v1150 = vrot.slane %v1148, 5
        %v1151 = vsel %vm839, %v1146, %v1150
        %v1153 = vshrl.u32 %v814, 16
        %v1155 = vrot.slane %v1153, 4
        %v1156 = vshll.u32 %v814, 16
        %v1158 = vrot.slane %v1156, 5
        %v1159 = vor.u32 %v1155, %v1158
        %v1160 = vrot.slane %v1159, 4
        %v1162 = vshll.u32 %v815, 16
        %v1164 = vrot.slane %v1162, 5
        %v1165 = vsel %vm839, %v1160, %v1164
        %v1166 = vshrl.u32 %v815, 16
        %v1168 = vrot.slane %v1166, 4
        %v1169 = vor.u32 %v1168, %v1164
        %v1170 = vrot.slane %v1169, 4
        %v1172 = vshll.u32 %v834, 16
        %v1174 = vrot.slane %v1172, 5
        %v1175 = vsel %vm839, %v1170, %v1174
        %v1177 = vshrl.u32 %v816, 16
        %v1179 = vrot.slane %v1177, 4
        %v1180 = vshll.u32 %v816, 16
        %v1182 = vrot.slane %v1180, 5
        %v1183 = vor.u32 %v1179, %v1182
        %v1184 = vrot.slane %v1183, 4
        %v1186 = vshll.u32 %v817, 16
        %v1188 = vrot.slane %v1186, 5
        %v1189 = vsel %vm839, %v1184, %v1188
        %v1190 = vshrl.u32 %v817, 16
        %v1192 = vrot.slane %v1190, 4
        %v1193 = vor.u32 %v1192, %v1188
        %v1194 = vrot.slane %v1193, 4
        %v1196 = vshll.u32 %v835, 16
        %v1198 = vrot.slane %v1196, 5
        %v1199 = vsel %vm839, %v1194, %v1198
        %v1201 = vshrl.u32 %v818, 16
        %v1203 = vrot.slane %v1201, 4
        %v1204 = vshll.u32 %v818, 16
        %v1206 = vrot.slane %v1204, 5
        %v1207 = vor.u32 %v1203, %v1206
        %v1208 = vrot.slane %v1207, 4
        %v1210 = vshll.u32 %v819, 16
        %v1212 = vrot.slane %v1210, 5
        %v1213 = vsel %vm839, %v1208, %v1212
        %v1214 = vshrl.u32 %v819, 16
        %v1216 = vrot.slane %v1214, 4
        %v1217 = vor.u32 %v1216, %v1212
        %v1218 = vrot.slane %v1217, 4
        %v1220 = vshll.u32 %v836, 16
        %v1222 = vrot.slane %v1220, 5
        %v1223 = vsel %vm839, %v1218, %v1222
        %s1224 = scalar_lea.vmem %s1, 2
        %v1225 = vld [vmem:[%s1224] sm:$0x3]
        %v1226 = vunpack.c.l.b16 %v853
        %v1227 = vunpack.c.l.b16 %v863
        %v1228 = vunpack.c.l.b16 %v877
        %v1229 = vunpack.c.l.b16 %v887
        %v1230 = vunpack.c.l.b16 %v901
        %v1231 = vunpack.c.l.b16 %v911
        %v1232 = vunpack.c.l.b16 %v925
        %v1233 = vunpack.c.l.b16 %v935
        %v1234 = vunpack.c.l.b16 %v949
        %v1235 = vunpack.c.l.b16 %v959
        %v1236 = vunpack.c.l.b16 %v973
        %v1237 = vunpack.c.l.b16 %v983
        %v1238 = vunpack.c.l.b16 %v997
        %v1239 = vunpack.c.l.b16 %v1007
        %v1240 = vunpack.c.l.b16 %v1021
        %v1241 = vunpack.c.l.b16 %v1031
        %v1242 = vunpack.c.l.b16 %v1045
        %v1243 = vunpack.c.l.b16 %v1055
        %v1244 = vunpack.c.l.b16 %v1069
        %v1245 = vunpack.c.l.b16 %v1079
        %v1246 = vunpack.c.l.b16 %v1093
        %v1247 = vunpack.c.l.b16 %v1103
        %v1248 = vunpack.c.l.b16 %v1117
        %v1249 = vunpack.c.l.b16 %v1127
        %v1250 = vunpack.c.l.b16 %v1141
        %v1251 = vunpack.c.l.b16 %v1151
        %v1252 = vunpack.c.l.b16 %v1165
        %v1253 = vunpack.c.l.b16 %v1175
        %v1254 = vunpack.c.l.b16 %v1189
        %v1255 = vunpack.c.l.b16 %v1199
        %v1256 = vunpack.c.l.b16 %v1213
        %v1257 = vunpack.c.l.b16 %v1223
        %v1258 = vpack.c.b16 %v1227, %v1226
        %v1259 = vpack.c.b16 %v1229, %v1228
        %v1260 = vpack.c.b16 %v1231, %v1230
        %v1261 = vpack.c.b16 %v1233, %v1232
        %v1262 = vpack.c.b16 %v1235, %v1234
        %v1263 = vpack.c.b16 %v1237, %v1236
        %v1264 = vpack.c.b16 %v1239, %v1238
        %v1265 = vpack.c.b16 %v1241, %v1240
        %v1266 = vpack.c.b16 %v1243, %v1242
        %v1267 = vpack.c.b16 %v1245, %v1244
        %v1268 = vpack.c.b16 %v1247, %v1246
        %v1269 = vpack.c.b16 %v1249, %v1248
        %v1270 = vpack.c.b16 %v1251, %v1250
        %v1271 = vpack.c.b16 %v1253, %v1252
        %v1272 = vpack.c.b16 %v1255, %v1254
        %v1273 = vpack.c.b16 %v1257, %v1256
        %vm1274 = vcmask 23552
        %v1276 = vsel %vm1274, %v1258, 0
        %v1279 = vsel %vm1274, %v1259, 0
        %v1282 = vsel %vm1274, %v1260, 0
        %v1285 = vsel %vm1274, %v1261, 0
        %v1288 = vsel %vm1274, %v1262, 0
        %v1291 = vsel %vm1274, %v1263, 0
        %v1294 = vsel %vm1274, %v1264, 0
        %v1297 = vsel %vm1274, %v1265, 0
        %v1300 = vsel %vm1274, %v1266, 0
        %v1303 = vsel %vm1274, %v1267, 0
        %v1306 = vsel %vm1274, %v1268, 0
        %v1309 = vsel %vm1274, %v1269, 0
        %v1312 = vsel %vm1274, %v1270, 0
        %v1315 = vsel %vm1274, %v1271, 0
        %v1318 = vsel %vm1274, %v1272, 0
        %v1321 = vsel %vm1274, %v1273, 0
        %vm1323 = vcmask 1040384
        %vm1324 = vcmask 1041408
        %v1325 = vsel %vm1323, 4294967295, 65535
        %v1326 = vsel %vm1324, %v1325, 0
        %v1328 = vand.u32 %v1225, %v1326
        %1330 = vmatprep.subr.bf16.mxu0 0
        %1331 = vmatpush1.bf16.msra.mxu0 %v1328
        %1332 = vmatprep.subr.bf16.mxu0 0
        %1333 = vmatpush1.bf16.msra.mxu0 0
        %1334 = vmatprep.subr.bf16.mxu0 0
        %1335 = vmatpush1.bf16.msra.mxu0 0
        %1336 = vmatprep.subr.bf16.mxu0 0
        %1337 = vmatpush1.bf16.msra.mxu0 0
        %1338 = vmatprep.subr.bf16.mxu0 0
        %1339 = vmatpush1.bf16.msra.mxu0 0
        %1340 = vmatprep.subr.bf16.mxu0 0
        %1341 = vmatpush1.bf16.msra.mxu0 0
        %1342 = vmatprep.subr.bf16.mxu0 0
        %1343 = vmatpush1.bf16.msra.mxu0 0
        %1344 = vmatprep.subr.bf16.mxu0 0
        %1345 = vmatpush1.bf16.msra.mxu0 0
        %1346 = vmatprep.subr.bf16.mxu0 0
        %1347 = vmatpush1.bf16.msra.mxu0 0
        %1348 = vmatprep.subr.bf16.mxu0 0
        %1349 = vmatpush1.bf16.msra.mxu0 0
        %1350 = vmatprep.subr.bf16.mxu0 0
        %1351 = vmatpush1.bf16.msra.mxu0 0
        %1352 = vmatprep.subr.bf16.mxu0 0
        %1353 = vmatpush1.bf16.msra.mxu0 0
        %1354 = vmatprep.subr.bf16.mxu0 0
        %1355 = vmatpush1.bf16.msra.mxu0 0
        %1356 = vmatprep.subr.bf16.mxu0 0
        %1357 = vmatpush1.bf16.msra.mxu0 0
        %1358 = vmatprep.subr.bf16.mxu0 0
        %1359 = vmatpush1.bf16.msra.mxu0 0
        %1360 = vmatprep.subr.bf16.mxu0 0
        %1361 = vmatpush1.bf16.msra.mxu0 0
        %1362 = vmatprep.mubr.bf16.mxu0 0
        %1363 = vmatmul.mubr.bf16.gmra.mrb[0].mxu0 %v1276
        %v1364 = vpop.f32.mrb[0].mxu0
        %v1365 = vadd.f32 0.0, %v1364
        %v1366 = vpop.f32.mrb[0].mxu0
        %v1367 = vpop.f32.mrb[0].mxu0
        %v1368 = vadd.f32 0.0, %v1367
        %v1369 = vpop.f32.mrb[0].mxu0
        %1370 = vmatprep.mubr.bf16.mxu0 0
        %1371 = vmatmul.mubr.bf16.gmra.mrb[0].mxu0 %v1279
        %v1372 = vpop.f32.mrb[0].mxu0
        %v1373 = vadd.f32 0.0, %v1372
        %v1374 = vpop.f32.mrb[0].mxu0
        %v1375 = vpop.f32.mrb[0].mxu0
        %v1376 = vadd.f32 0.0, %v1375
        %v1377 = vpop.f32.mrb[0].mxu0
        %1378 = vmatprep.mubr.bf16.mxu0 0
        %1379 = vmatmul.mubr.bf16.gmra.mrb[0].mxu0 %v1282
        %v1380 = vpop.f32.mrb[0].mxu0
        %v1381 = vadd.f32 0.0, %v1380
        %v1382 = vpop.f32.mrb[0].mxu0
        %v1383 = vpop.f32.mrb[0].mxu0
        %v1384 = vadd.f32 0.0, %v1383
        %v1385 = vpop.f32.mrb[0].mxu0
        %1386 = vmatprep.mubr.bf16.mxu0 0
        %1387 = vmatmul.mubr.bf16.gmra.mrb[0].mxu0 %v1285
        %v1388 = vpop.f32.mrb[0].mxu0
        %v1389 = vadd.f32 0.0, %v1388
        %v1390 = vpop.f32.mrb[0].mxu0
        %v1391 = vpop.f32.mrb[0].mxu0
        %v1392 = vadd.f32 0.0, %v1391
        %v1393 = vpop.f32.mrb[0].mxu0
        %1394 = vmatprep.mubr.bf16.mxu0 0
        %1395 = vmatmul.mubr.bf16.gmra.mrb[0].mxu0 %v1288
        %v1396 = vpop.f32.mrb[0].mxu0
        %v1397 = vadd.f32 0.0, %v1396
        %v1398 = vpop.f32.mrb[0].mxu0
        %v1399 = vpop.f32.mrb[0].mxu0
        %v1400 = vadd.f32 0.0, %v1399
        %v1401 = vpop.f32.mrb[0].mxu0
        %1402 = vmatprep.mubr.bf16.mxu0 0
        %1403 = vmatmul.mubr.bf16.gmra.mrb[0].mxu0 %v1291
        %v1404 = vpop.f32.mrb[0].mxu0
        %v1405 = vadd.f32 0.0, %v1404
        %v1406 = vpop.f32.mrb[0].mxu0
        %v1407 = vpop.f32.mrb[0].mxu0
        %v1408 = vadd.f32 0.0, %v1407
        %v1409 = vpop.f32.mrb[0].mxu0
        %1410 = vmatprep.mubr.bf16.mxu0 0
        %1411 = vmatmul.mubr.bf16.gmra.mrb[0].mxu0 %v1294
        %v1412 = vpop.f32.mrb[0].mxu0
        %v1413 = vadd.f32 0.0, %v1412
        %v1414 = vpop.f32.mrb[0].mxu0
        %v1415 = vpop.f32.mrb[0].mxu0
        %v1416 = vadd.f32 0.0, %v1415
        %v1417 = vpop.f32.mrb[0].mxu0
        %1418 = vmatprep.mubr.bf16.mxu0 0
        %1419 = vmatmul.mubr.bf16.gmra.mrb[0].mxu0 %v1297
        %v1420 = vpop.f32.mrb[0].mxu0
        %v1421 = vadd.f32 0.0, %v1420
        %v1422 = vpop.f32.mrb[0].mxu0
        %v1423 = vpop.f32.mrb[0].mxu0
        %v1424 = vadd.f32 0.0, %v1423
        %v1425 = vpop.f32.mrb[0].mxu0
        %1426 = vmatprep.mubr.bf16.mxu0 0
        %1427 = vmatmul.mubr.bf16.gmra.mrb[0].mxu0 %v1300
        %v1428 = vpop.f32.mrb[0].mxu0
        %v1429 = vadd.f32 0.0, %v1428
        %v1430 = vpop.f32.mrb[0].mxu0
        %v1431 = vpop.f32.mrb[0].mxu0
        %v1432 = vadd.f32 0.0, %v1431
        %v1433 = vpop.f32.mrb[0].mxu0
        %1434 = vmatprep.mubr.bf16.mxu0 0
        %1435 = vmatmul.mubr.bf16.gmra.mrb[0].mxu0 %v1303
        %v1436 = vpop.f32.mrb[0].mxu0
        %v1437 = vadd.f32 0.0, %v1436
        %v1438 = vpop.f32.mrb[0].mxu0
        %v1439 = vpop.f32.mrb[0].mxu0
        %v1440 = vadd.f32 0.0, %v1439
        %v1441 = vpop.f32.mrb[0].mxu0
        %1442 = vmatprep.mubr.bf16.mxu0 0
        %1443 = vmatmul.mubr.bf16.gmra.mrb[0].mxu0 %v1306
        %v1444 = vpop.f32.mrb[0].mxu0
        %v1445 = vadd.f32 0.0, %v1444
        %v1446 = vpop.f32.mrb[0].mxu0
        %v1447 = vpop.f32.mrb[0].mxu0
        %v1448 = vadd.f32 0.0, %v1447
        %v1449 = vpop.f32.mrb[0].mxu0
        %1450 = vmatprep.mubr.bf16.mxu0 0
        %1451 = vmatmul.mubr.bf16.gmra.mrb[0].mxu0 %v1309
        %v1452 = vpop.f32.mrb[0].mxu0
        %v1453 = vadd.f32 0.0, %v1452
        %v1454 = vpop.f32.mrb[0].mxu0
        %v1455 = vpop.f32.mrb[0].mxu0
        %v1456 = vadd.f32 0.0, %v1455
        %v1457 = vpop.f32.mrb[0].mxu0
        %1458 = vmatprep.mubr.bf16.mxu0 0
        %1459 = vmatmul.mubr.bf16.gmra.mrb[0].mxu0 %v1312
        %v1460 = vpop.f32.mrb[0].mxu0
        %v1461 = vadd.f32 0.0, %v1460
        %v1462 = vpop.f32.mrb[0].mxu0
        %v1463 = vpop.f32.mrb[0].mxu0
        %v1464 = vadd.f32 0.0, %v1463
        %v1465 = vpop.f32.mrb[0].mxu0
        %1466 = vmatprep.mubr.bf16.mxu0 0
        %1467 = vmatmul.mubr.bf16.gmra.mrb[0].mxu0 %v1315
        %v1468 = vpop.f32.mrb[0].mxu0
        %v1469 = vadd.f32 0.0, %v1468
        %v1470 = vpop.f32.mrb[0].mxu0
        %v1471 = vpop.f32.mrb[0].mxu0
        %v1472 = vadd.f32 0.0, %v1471
        %v1473 = vpop.f32.mrb[0].mxu0
        %1474 = vmatprep.mubr.bf16.mxu0 0
        %1475 = vmatmul.mubr.bf16.gmra.mrb[0].mxu0 %v1318
        %v1476 = vpop.f32.mrb[0].mxu0
        %v1477 = vadd.f32 0.0, %v1476
        %v1478 = vpop.f32.mrb[0].mxu0
        %v1479 = vpop.f32.mrb[0].mxu0
        %v1480 = vadd.f32 0.0, %v1479
        %v1481 = vpop.f32.mrb[0].mxu0
        %1482 = vmatprep.mubr.bf16.mxu0 0
        %1483 = vmatmul.mubr.bf16.gmra.mrb[0].mxu0 %v1321
        %v1484 = vpop.f32.mrb[0].mxu0
        %v1485 = vadd.f32 0.0, %v1484
        %v1486 = vpop.f32.mrb[0].mxu0
        %v1487 = vpop.f32.mrb[0].mxu0
        %v1488 = vadd.f32 0.0, %v1487
        %v1489 = vpop.f32.mrb[0].mxu0
        %1490 = vdwg.mxu0
        %v1523 = vunpack.c.l.b16 %v788
        %v1524 = vunpack.c.l.b16 %v789
        %v1525 = vunpack.c.l.b16 %v790
        %v1526 = vunpack.c.l.b16 %v791
        %v1527 = vunpack.c.l.b16 %v792
        %v1528 = vunpack.c.l.b16 %v793
        %v1529 = vunpack.c.l.b16 %v794
        %v1530 = vunpack.c.l.b16 %v795
        %v1531 = vunpack.c.l.b16 %v796
        %v1532 = vunpack.c.l.b16 %v797
        %v1533 = vunpack.c.l.b16 %v798
        %v1534 = vunpack.c.l.b16 %v799
        %v1535 = vunpack.c.l.b16 %v800
        %v1536 = vunpack.c.l.b16 %v801
        %v1537 = vunpack.c.l.b16 %v802
        %v1538 = vunpack.c.l.b16 %v803
        %v1539 = vunpack.c.l.b16 %v804
        %v1540 = vunpack.c.l.b16 %v805
        %v1541 = vunpack.c.l.b16 %v806
        %v1542 = vunpack.c.l.b16 %v807
        %v1543 = vunpack.c.l.b16 %v808
        %v1544 = vunpack.c.l.b16 %v809
        %v1545 = vunpack.c.l.b16 %v810
        %v1546 = vunpack.c.l.b16 %v811
        %v1547 = vunpack.c.l.b16 %v812
        %v1548 = vunpack.c.l.b16 %v813
        %v1549 = vunpack.c.l.b16 %v814
        %v1550 = vunpack.c.l.b16 %v815
        %v1551 = vunpack.c.l.b16 %v816
        %v1552 = vunpack.c.l.b16 %v817
        %v1553 = vunpack.c.l.b16 %v818
        %v1554 = vunpack.c.l.b16 %v819
        %v1555 = vpack.c.b16 %v1524, %v1523
        %v1556 = vpack.c.b16 %v1526, %v1525
        %v1557 = vpack.c.b16 %v1528, %v1527
        %v1558 = vpack.c.b16 %v1530, %v1529
        %v1559 = vpack.c.b16 %v1532, %v1531
        %v1560 = vpack.c.b16 %v1534, %v1533
        %v1561 = vpack.c.b16 %v1536, %v1535
        %v1562 = vpack.c.b16 %v1538, %v1537
        %v1563 = vpack.c.b16 %v1540, %v1539
        %v1564 = vpack.c.b16 %v1542, %v1541
        %v1565 = vpack.c.b16 %v1544, %v1543
        %v1566 = vpack.c.b16 %v1546, %v1545
        %v1567 = vpack.c.b16 %v1548, %v1547
        %v1568 = vpack.c.b16 %v1550, %v1549
        %v1569 = vpack.c.b16 %v1552, %v1551
        %v1570 = vpack.c.b16 %v1554, %v1553
        %v1572 = vsel %vm1274, %v1555, 0
        %v1575 = vsel %vm1274, %v1556, 0
        %v1578 = vsel %vm1274, %v1557, 0
        %v1581 = vsel %vm1274, %v1558, 0
        %v1584 = vsel %vm1274, %v1559, 0
        %v1587 = vsel %vm1274, %v1560, 0
        %v1590 = vsel %vm1274, %v1561, 0
        %v1593 = vsel %vm1274, %v1562, 0
        %v1596 = vsel %vm1274, %v1563, 0
        %v1599 = vsel %vm1274, %v1564, 0
        %v1602 = vsel %vm1274, %v1565, 0
        %v1605 = vsel %vm1274, %v1566, 0
        %v1608 = vsel %vm1274, %v1567, 0
        %v1611 = vsel %vm1274, %v1568, 0
        %v1614 = vsel %vm1274, %v1569, 0
        %v1617 = vsel %vm1274, %v1570, 0
        %v1620 = vand.u32 %v820, %v1326
        %1622 = vmatprep.subr.bf16.mxu0 0
        %1623 = vmatpush1.bf16.msra.mxu0 %v1620
        %1624 = vmatprep.subr.bf16.mxu0 0
        %1625 = vmatpush1.bf16.msra.mxu0 0
        %1626 = vmatprep.subr.bf16.mxu0 0
        %1627 = vmatpush1.bf16.msra.mxu0 0
        %1628 = vmatprep.subr.bf16.mxu0 0
        %1629 = vmatpush1.bf16.msra.mxu0 0
        %1630 = vmatprep.subr.bf16.mxu0 0
        %1631 = vmatpush1.bf16.msra.mxu0 0
        %1632 = vmatprep.subr.bf16.mxu0 0
        %1633 = vmatpush1.bf16.msra.mxu0 0
        %1634 = vmatprep.subr.bf16.mxu0 0
        %1635 = vmatpush1.bf16.msra.mxu0 0
        %1636 = vmatprep.subr.bf16.mxu0 0
        %1637 = vmatpush1.bf16.msra.mxu0 0
        %1638 = vmatprep.subr.bf16.mxu0 0
        %1639 = vmatpush1.bf16.msra.mxu0 0
        %1640 = vmatprep.subr.bf16.mxu0 0
        %1641 = vmatpush1.bf16.msra.mxu0 0
        %1642 = vmatprep.subr.bf16.mxu0 0
        %1643 = vmatpush1.bf16.msra.mxu0 0
        %1644 = vmatprep.subr.bf16.mxu0 0
        %1645 = vmatpush1.bf16.msra.mxu0 0
        %1646 = vmatprep.subr.bf16.mxu0 0
        %1647 = vmatpush1.bf16.msra.mxu0 0
        %1648 = vmatprep.subr.bf16.mxu0 0
        %1649 = vmatpush1.bf16.msra.mxu0 0
        %1650 = vmatprep.subr.bf16.mxu0 0
        %1651 = vmatpush1.bf16.msra.mxu0 0
        %1652 = vmatprep.subr.bf16.mxu0 0
        %1653 = vmatpush1.bf16.msra.mxu0 0
        %1654 = vmatprep.mubr.bf16.mxu0 0
        %1655 = vmatmul.mubr.bf16.gmra.mrb[0].mxu0 %v1572
        %v1656 = vpop.f32.mrb[0].mxu0
        %v1657 = vadd.f32 %v1365, %v1656
        %v1658 = vpop.f32.mrb[0].mxu0
        %v1659 = vpop.f32.mrb[0].mxu0
        %v1660 = vadd.f32 %v1368, %v1659
        %v1661 = vpop.f32.mrb[0].mxu0
        %1662 = vmatprep.mubr.bf16.mxu0 0
        %1663 = vmatmul.mubr.bf16.gmra.mrb[0].mxu0 %v1575
        %v1664 = vpop.f32.mrb[0].mxu0
        %v1665 = vadd.f32 %v1373, %v1664
        %v1666 = vpop.f32.mrb[0].mxu0
        %v1667 = vpop.f32.mrb[0].mxu0
        %v1668 = vadd.f32 %v1376, %v1667
        %v1669 = vpop.f32.mrb[0].mxu0
        %1670 = vmatprep.mubr.bf16.mxu0 0
        %1671 = vmatmul.mubr.bf16.gmra.mrb[0].mxu0 %v1578
        %v1672 = vpop.f32.mrb[0].mxu0
        %v1673 = vadd.f32 %v1381, %v1672
        %v1674 = vpop.f32.mrb[0].mxu0
        %v1675 = vpop.f32.mrb[0].mxu0
        %v1676 = vadd.f32 %v1384, %v1675
        %v1677 = vpop.f32.mrb[0].mxu0
        %1678 = vmatprep.mubr.bf16.mxu0 0
        %1679 = vmatmul.mubr.bf16.gmra.mrb[0].mxu0 %v1581
        %v1680 = vpop.f32.mrb[0].mxu0
        %v1681 = vadd.f32 %v1389, %v1680
        %v1682 = vpop.f32.mrb[0].mxu0
        %v1683 = vpop.f32.mrb[0].mxu0
        %v1684 = vadd.f32 %v1392, %v1683
        %v1685 = vpop.f32.mrb[0].mxu0
        %1686 = vmatprep.mubr.bf16.mxu0 0
        %1687 = vmatmul.mubr.bf16.gmra.mrb[0].mxu0 %v1584
        %v1688 = vpop.f32.mrb[0].mxu0
        %v1689 = vadd.f32 %v1397, %v1688
        %v1690 = vpop.f32.mrb[0].mxu0
        %v1691 = vpop.f32.mrb[0].mxu0
        %v1692 = vadd.f32 %v1400, %v1691
        %v1693 = vpop.f32.mrb[0].mxu0
        %1694 = vmatprep.mubr.bf16.mxu0 0
        %1695 = vmatmul.mubr.bf16.gmra.mrb[0].mxu0 %v1587
        %v1696 = vpop.f32.mrb[0].mxu0
        %v1697 = vadd.f32 %v1405, %v1696
        %v1698 = vpop.f32.mrb[0].mxu0
        %v1699 = vpop.f32.mrb[0].mxu0
        %v1700 = vadd.f32 %v1408, %v1699
        %v1701 = vpop.f32.mrb[0].mxu0
        %1702 = vmatprep.mubr.bf16.mxu0 0
        %1703 = vmatmul.mubr.bf16.gmra.mrb[0].mxu0 %v1590
        %v1704 = vpop.f32.mrb[0].mxu0
        %v1705 = vadd.f32 %v1413, %v1704
        %v1706 = vpop.f32.mrb[0].mxu0
        %v1707 = vpop.f32.mrb[0].mxu0
        %v1708 = vadd.f32 %v1416, %v1707
        %v1709 = vpop.f32.mrb[0].mxu0
        %1710 = vmatprep.mubr.bf16.mxu0 0
        %1711 = vmatmul.mubr.bf16.gmra.mrb[0].mxu0 %v1593
        %v1712 = vpop.f32.mrb[0].mxu0
        %v1713 = vadd.f32 %v1421, %v1712
        %v1714 = vpop.f32.mrb[0].mxu0
        %v1715 = vpop.f32.mrb[0].mxu0
        %v1716 = vadd.f32 %v1424, %v1715
        %v1717 = vpop.f32.mrb[0].mxu0
        %1718 = vmatprep.mubr.bf16.mxu0 0
        %1719 = vmatmul.mubr.bf16.gmra.mrb[0].mxu0 %v1596
        %v1720 = vpop.f32.mrb[0].mxu0
        %v1721 = vadd.f32 %v1429, %v1720
        %v1722 = vpop.f32.mrb[0].mxu0
        %v1723 = vpop.f32.mrb[0].mxu0
        %v1724 = vadd.f32 %v1432, %v1723
        %v1725 = vpop.f32.mrb[0].mxu0
        %1726 = vmatprep.mubr.bf16.mxu0 0
        %1727 = vmatmul.mubr.bf16.gmra.mrb[0].mxu0 %v1599
        %v1728 = vpop.f32.mrb[0].mxu0
        %v1729 = vadd.f32 %v1437, %v1728
        %v1730 = vpop.f32.mrb[0].mxu0
        %v1731 = vpop.f32.mrb[0].mxu0
        %v1732 = vadd.f32 %v1440, %v1731
        %v1733 = vpop.f32.mrb[0].mxu0
        %1734 = vmatprep.mubr.bf16.mxu0 0
        %1735 = vmatmul.mubr.bf16.gmra.mrb[0].mxu0 %v1602
        %v1736 = vpop.f32.mrb[0].mxu0
        %v1737 = vadd.f32 %v1445, %v1736
        %v1738 = vpop.f32.mrb[0].mxu0
        %v1739 = vpop.f32.mrb[0].mxu0
        %v1740 = vadd.f32 %v1448, %v1739
        %v1741 = vpop.f32.mrb[0].mxu0
        %1742 = vmatprep.mubr.bf16.mxu0 0
        %1743 = vmatmul.mubr.bf16.gmra.mrb[0].mxu0 %v1605
        %v1744 = vpop.f32.mrb[0].mxu0
        %v1745 = vadd.f32 %v1453, %v1744
        %v1746 = vpop.f32.mrb[0].mxu0
        %v1747 = vpop.f32.mrb[0].mxu0
        %v1748 = vadd.f32 %v1456, %v1747
        %v1749 = vpop.f32.mrb[0].mxu0
        %1750 = vmatprep.mubr.bf16.mxu0 0
        %1751 = vmatmul.mubr.bf16.gmra.mrb[0].mxu0 %v1608
        %v1752 = vpop.f32.mrb[0].mxu0
        %v1753 = vadd.f32 %v1461, %v1752
        %v1754 = vpop.f32.mrb[0].mxu0
        %v1755 = vpop.f32.mrb[0].mxu0
        %v1756 = vadd.f32 %v1464, %v1755
        %v1757 = vpop.f32.mrb[0].mxu0
        %1758 = vmatprep.mubr.bf16.mxu0 0
        %1759 = vmatmul.mubr.bf16.gmra.mrb[0].mxu0 %v1611
        %v1760 = vpop.f32.mrb[0].mxu0
        %v1761 = vadd.f32 %v1469, %v1760
        %v1762 = vpop.f32.mrb[0].mxu0
        %v1763 = vpop.f32.mrb[0].mxu0
        %v1764 = vadd.f32 %v1472, %v1763
        %v1765 = vpop.f32.mrb[0].mxu0
        %1766 = vmatprep.mubr.bf16.mxu0 0
        %1767 = vmatmul.mubr.bf16.gmra.mrb[0].mxu0 %v1614
        %v1768 = vpop.f32.mrb[0].mxu0
        %v1769 = vadd.f32 %v1477, %v1768
        %v1770 = vpop.f32.mrb[0].mxu0
        %v1771 = vpop.f32.mrb[0].mxu0
        %v1772 = vadd.f32 %v1480, %v1771
        %v1773 = vpop.f32.mrb[0].mxu0
        %1774 = vmatprep.mubr.bf16.mxu0 0
        %1775 = vmatmul.mubr.bf16.gmra.mrb[0].mxu0 %v1617
        %v1776 = vpop.f32.mrb[0].mxu0
        %v1777 = vadd.f32 %v1485, %v1776
        %v1778 = vpop.f32.mrb[0].mxu0
        %v1779 = vpop.f32.mrb[0].mxu0
        %v1780 = vadd.f32 %v1488, %v1779
        %v1781 = vpop.f32.mrb[0].mxu0
        %1782 = vdwg.mxu0
        %v1783 = vld [vmem:[#allocation2] sm:$0xe]
        %v1784 = vld [vmem:[#allocation2 + $0xc] sm:$0xe]
        %v1785 = vld [vmem:[#allocation2 + $0x18] sm:$0xe]
        %v1786 = vld [vmem:[#allocation2 + $0x24] sm:$0xe]
        %v1787 = vld [vmem:[#allocation2 + $0x30] sm:$0xe]
        %v1788 = vld [vmem:[#allocation2 + $0x3c] sm:$0xe]
        %v1789 = vld [vmem:[#allocation2 + $0x48] sm:$0xe]
        %v1790 = vld [vmem:[#allocation2 + $0x54] sm:$0xe]
        %v1791 = vld [vmem:[#allocation2 + $0x60] sm:$0xe]
        %v1792 = vld [vmem:[#allocation2 + $0x6c] sm:$0xe]
        %v1793 = vld [vmem:[#allocation2 + $0x78] sm:$0xe]
        %v1794 = vld [vmem:[#allocation2 + $0x84] sm:$0xe]
        %v1795 = vld [vmem:[#allocation2 + $0x90] sm:$0xe]
        %v1796 = vld [vmem:[#allocation2 + $0x9c] sm:$0xe]
        %v1797 = vld [vmem:[#allocation2 + $0xa8] sm:$0xe]
        %v1798 = vld [vmem:[#allocation2 + $0xb4] sm:$0xe]
        %vm1831 = vcmask 1042432
        %vm1832 = vcmask 1046532
        %vm1833 = vmor %vm1831, %vm1832
        %v1834 = vrot.slane %v1783, 5
        %v1835 = vrot.slane %v1834, 4
        %v1836 = vrot.slane %v789, 5
        %v1837 = vsel %vm1833, %v1835, %v1836
        %v1838 = vrot.slane %v1836, 4
        %v1839 = vrot.slane %v821, 5
        %v1840 = vsel %vm1833, %v1838, %v1839
        %v1841 = vrot.slane %v1784, 5
        %v1842 = vrot.slane %v1841, 4
        %v1843 = vrot.slane %v791, 5
        %v1844 = vsel %vm1833, %v1842, %v1843
        %v1845 = vrot.slane %v1843, 4
        %v1846 = vrot.slane %v822, 5
        %v1847 = vsel %vm1833, %v1845, %v1846
        %v1848 = vrot.slane %v1785, 5
        %v1849 = vrot.slane %v1848, 4
        %v1850 = vrot.slane %v793, 5
        %v1851 = vsel %vm1833, %v1849, %v1850
        %v1852 = vrot.slane %v1850, 4
        %v1853 = vrot.slane %v823, 5
        %v1854 = vsel %vm1833, %v1852, %v1853
        %v1855 = vrot.slane %v1786, 5
        %v1856 = vrot.slane %v1855, 4
        %v1857 = vrot.slane %v795, 5
        %v1858 = vsel %vm1833, %v1856, %v1857
        %v1859 = vrot.slane %v1857, 4
        %v1860 = vrot.slane %v824, 5
        %v1861 = vsel %vm1833, %v1859, %v1860
        %v1862 = vrot.slane %v1787, 5
        %v1863 = vrot.slane %v1862, 4
        %v1864 = vrot.slane %v797, 5
        %v1865 = vsel %vm1833, %v1863, %v1864
        %v1866 = vrot.slane %v1864, 4
        %v1867 = vrot.slane %v825, 5
        %v1868 = vsel %vm1833, %v1866, %v1867
        %v1869 = vrot.slane %v1788, 5
        %v1870 = vrot.slane %v1869, 4
        %v1871 = vrot.slane %v799, 5
        %v1872 = vsel %vm1833, %v1870, %v1871
        %v1873 = vrot.slane %v1871, 4
        %v1874 = vrot.slane %v826, 5
        %v1875 = vsel %vm1833, %v1873, %v1874
        %v1876 = vrot.slane %v1789, 5
        %v1877 = vrot.slane %v1876, 4
        %v1878 = vrot.slane %v801, 5
        %v1879 = vsel %vm1833, %v1877, %v1878
        %v1880 = vrot.slane %v1878, 4
        %v1881 = vrot.slane %v827, 5
        %v1882 = vsel %vm1833, %v1880, %v1881
        %v1883 = vrot.slane %v1790, 5
        %v1884 = vrot.slane %v1883, 4
        %v1885 = vrot.slane %v803, 5
        %v1886 = vsel %vm1833, %v1884, %v1885
        %v1887 = vrot.slane %v1885, 4
        %v1888 = vrot.slane %v828, 5
        %v1889 = vsel %vm1833, %v1887, %v1888
        %v1890 = vrot.slane %v1791, 5
        %v1891 = vrot.slane %v1890, 4
        %v1892 = vrot.slane %v805, 5
        %v1893 = vsel %vm1833, %v1891, %v1892
        %v1894 = vrot.slane %v1892, 4
        %v1895 = vrot.slane %v829, 5
        %v1896 = vsel %vm1833, %v1894, %v1895
        %v1897 = vrot.slane %v1792, 5
        %v1898 = vrot.slane %v1897, 4
        %v1899 = vrot.slane %v807, 5
        %v1900 = vsel %vm1833, %v1898, %v1899
        %v1901 = vrot.slane %v1899, 4
        %v1902 = vrot.slane %v830, 5
        %v1903 = vsel %vm1833, %v1901, %v1902
        %v1904 = vrot.slane %v1793, 5
        %v1905 = vrot.slane %v1904, 4
        %v1906 = vrot.slane %v809, 5
        %v1907 = vsel %vm1833, %v1905, %v1906
        %v1908 = vrot.slane %v1906, 4
        %v1909 = vrot.slane %v831, 5
        %v1910 = vsel %vm1833, %v1908, %v1909
        %v1911 = vrot.slane %v1794, 5
        %v1912 = vrot.slane %v1911, 4
        %v1913 = vrot.slane %v811, 5
        %v1914 = vsel %vm1833, %v1912, %v1913
        %v1915 = vrot.slane %v1913, 4
        %v1916 = vrot.slane %v832, 5
        %v1917 = vsel %vm1833, %v1915, %v1916
        %v1918 = vrot.slane %v1795, 5
        %v1919 = vrot.slane %v1918, 4
        %v1920 = vrot.slane %v813, 5
        %v1921 = vsel %vm1833, %v1919, %v1920
        %v1922 = vrot.slane %v1920, 4
        %v1923 = vrot.slane %v833, 5
        %v1924 = vsel %vm1833, %v1922, %v1923
        %v1925 = vrot.slane %v1796, 5
        %v1926 = vrot.slane %v1925, 4
        %v1927 = vrot.slane %v815, 5
        %v1928 = vsel %vm1833, %v1926, %v1927
        %v1929 = vrot.slane %v1927, 4
        %v1930 = vrot.slane %v834, 5
        %v1931 = vsel %vm1833, %v1929, %v1930
        %v1932 = vrot.slane %v1797, 5
        %v1933 = vrot.slane %v1932, 4
        %v1934 = vrot.slane %v817, 5
        %v1935 = vsel %vm1833, %v1933, %v1934
        %v1936 = vrot.slane %v1934, 4
        %v1937 = vrot.slane %v835, 5
        %v1938 = vsel %vm1833, %v1936, %v1937
        %v1939 = vrot.slane %v1798, 5
        %v1940 = vrot.slane %v1939, 4
        %v1941 = vrot.slane %v819, 5
        %v1942 = vsel %vm1833, %v1940, %v1941
        %v1943 = vrot.slane %v1941, 4
        %v1944 = vrot.slane %v836, 5
        %v1945 = vsel %vm1833, %v1943, %v1944
        %s1946 = scalar_lea.vmem %s1, 4
        %v1947 = vld [vmem:[%s1946] sm:$0x3]
        %v1948 = vunpack.c.l.b16 %v1837
        %v1949 = vunpack.c.l.b16 %v1840
        %v1950 = vunpack.c.l.b16 %v1844
        %v1951 = vunpack.c.l.b16 %v1847
        %v1952 = vunpack.c.l.b16 %v1851
        %v1953 = vunpack.c.l.b16 %v1854
        %v1954 = vunpack.c.l.b16 %v1858
        %v1955 = vunpack.c.l.b16 %v1861
        %v1956 = vunpack.c.l.b16 %v1865
        %v1957 = vunpack.c.l.b16 %v1868
        %v1958 = vunpack.c.l.b16 %v1872
        %v1959 = vunpack.c.l.b16 %v1875
        %v1960 = vunpack.c.l.b16 %v1879
        %v1961 = vunpack.c.l.b16 %v1882
        %v1962 = vunpack.c.l.b16 %v1886
        %v1963 = vunpack.c.l.b16 %v1889
        %v1964 = vunpack.c.l.b16 %v1893
        %v1965 = vunpack.c.l.b16 %v1896
        %v1966 = vunpack.c.l.b16 %v1900
        %v1967 = vunpack.c.l.b16 %v1903
        %v1968 = vunpack.c.l.b16 %v1907
        %v1969 = vunpack.c.l.b16 %v1910
        %v1970 = vunpack.c.l.b16 %v1914
        %v1971 = vunpack.c.l.b16 %v1917
        %v1972 = vunpack.c.l.b16 %v1921
        %v1973 = vunpack.c.l.b16 %v1924
        %v1974 = vunpack.c.l.b16 %v1928
        %v1975 = vunpack.c.l.b16 %v1931
        %v1976 = vunpack.c.l.b16 %v1935
        %v1977 = vunpack.c.l.b16 %v1938
        %v1978 = vunpack.c.l.b16 %v1942
        %v1979 = vunpack.c.l.b16 %v1945
        %v1980 = vpack.c.b16 %v1949, %v1948
        %v1981 = vpack.c.b16 %v1951, %v1950
        %v1982 = vpack.c.b16 %v1953, %v1952
        %v1983 = vpack.c.b16 %v1955, %v1954
        %v1984 = vpack.c.b16 %v1957, %v1956
        %v1985 = vpack.c.b16 %v1959, %v1958
        %v1986 = vpack.c.b16 %v1961, %v1960
        %v1987 = vpack.c.b16 %v1963, %v1962
        %v1988 = vpack.c.b16 %v1965, %v1964
        %v1989 = vpack.c.b16 %v1967, %v1966
        %v1990 = vpack.c.b16 %v1969, %v1968
        %v1991 = vpack.c.b16 %v1971, %v1970
        %v1992 = vpack.c.b16 %v1973, %v1972
        %v1993 = vpack.c.b16 %v1975, %v1974
        %v1994 = vpack.c.b16 %v1977, %v1976
        %v1995 = vpack.c.b16 %v1979, %v1978
        %v1997 = vsel %vm1274, %v1980, 0
        %v2000 = vsel %vm1274, %v1981, 0
        %v2003 = vsel %vm1274, %v1982, 0
        %v2006 = vsel %vm1274, %v1983, 0
        %v2009 = vsel %vm1274, %v1984, 0
        %v2012 = vsel %vm1274, %v1985, 0
        %v2015 = vsel %vm1274, %v1986, 0
        %v2018 = vsel %vm1274, %v1987, 0
        %v2021 = vsel %vm1274, %v1988, 0
        %v2024 = vsel %vm1274, %v1989, 0
        %v2027 = vsel %vm1274, %v1990, 0
        %v2030 = vsel %vm1274, %v1991, 0
        %v2033 = vsel %vm1274, %v1992, 0
        %v2036 = vsel %vm1274, %v1993, 0
        %v2039 = vsel %vm1274, %v1994, 0
        %v2042 = vsel %vm1274, %v1995, 0
        %v2045 = vand.u32 %v1947, %v1326
        %2047 = vmatprep.subr.bf16.mxu0 0
        %2048 = vmatpush1.bf16.msra.mxu0 %v2045
        %2049 = vmatprep.subr.bf16.mxu0 0
        %2050 = vmatpush1.bf16.msra.mxu0 0
        %2051 = vmatprep.subr.bf16.mxu0 0
        %2052 = vmatpush1.bf16.msra.mxu0 0
        %2053 = vmatprep.subr.bf16.mxu0 0
        %2054 = vmatpush1.bf16.msra.mxu0 0
        %2055 = vmatprep.subr.bf16.mxu0 0
        %2056 = vmatpush1.bf16.msra.mxu0 0
        %2057 = vmatprep.subr.bf16.mxu0 0
        %2058 = vmatpush1.bf16.msra.mxu0 0
        %2059 = vmatprep.subr.bf16.mxu0 0
        %2060 = vmatpush1.bf16.msra.mxu0 0
        %2061 = vmatprep.subr.bf16.mxu0 0
        %2062 = vmatpush1.bf16.msra.mxu0 0
        %2063 = vmatprep.subr.bf16.mxu0 0
        %2064 = vmatpush1.bf16.msra.mxu0 0
        %2065 = vmatprep.subr.bf16.mxu0 0
        %2066 = vmatpush1.bf16.msra.mxu0 0
        %2067 = vmatprep.subr.bf16.mxu0 0
        %2068 = vmatpush1.bf16.msra.mxu0 0
        %2069 = vmatprep.subr.bf16.mxu0 0
        %2070 = vmatpush1.bf16.msra.mxu0 0
        %2071 = vmatprep.subr.bf16.mxu0 0
        %2072 = vmatpush1.bf16.msra.mxu0 0
        %2073 = vmatprep.subr.bf16.mxu0 0
        %2074 = vmatpush1.bf16.msra.mxu0 0
        %2075 = vmatprep.subr.bf16.mxu0 0
        %2076 = vmatpush1.bf16.msra.mxu0 0
        %2077 = vmatprep.subr.bf16.mxu0 0
        %2078 = vmatpush1.bf16.msra.mxu0 0
        %2079 = vmatprep.mubr.bf16.mxu0 0
        %2080 = vmatmul.mubr.bf16.gmra.mrb[0].mxu0 %v1997
        %v2081 = vpop.f32.mrb[0].mxu0
        %v2082 = vadd.f32 0.0, %v2081
        %v2083 = vpop.f32.mrb[0].mxu0
        %v2084 = vpop.f32.mrb[0].mxu0
        %v2085 = vadd.f32 0.0, %v2084
        %v2086 = vpop.f32.mrb[0].mxu0
        %2087 = vmatprep.mubr.bf16.mxu0 0
        %2088 = vmatmul.mubr.bf16.gmra.mrb[0].mxu0 %v2000
        %v2089 = vpop.f32.mrb[0].mxu0
        %v2090 = vadd.f32 0.0, %v2089
        %v2091 = vpop.f32.mrb[0].mxu0
        %v2092 = vpop.f32.mrb[0].mxu0
        %v2093 = vadd.f32 0.0, %v2092
        %v2094 = vpop.f32.mrb[0].mxu0
        %2095 = vmatprep.mubr.bf16.mxu0 0
        %2096 = vmatmul.mubr.bf16.gmra.mrb[0].mxu0 %v2003
        %v2097 = vpop.f32.mrb[0].mxu0
        %v2098 = vadd.f32 0.0, %v2097
        %v2099 = vpop.f32.mrb[0].mxu0
        %v2100 = vpop.f32.mrb[0].mxu0
        %v2101 = vadd.f32 0.0, %v2100
        %v2102 = vpop.f32.mrb[0].mxu0
        %2103 = vmatprep.mubr.bf16.mxu0 0
        %2104 = vmatmul.mubr.bf16.gmra.mrb[0].mxu0 %v2006
        %v2105 = vpop.f32.mrb[0].mxu0
        %v2106 = vadd.f32 0.0, %v2105
        %v2107 = vpop.f32.mrb[0].mxu0
        %v2108 = vpop.f32.mrb[0].mxu0
        %v2109 = vadd.f32 0.0, %v2108
        %v2110 = vpop.f32.mrb[0].mxu0
        %2111 = vmatprep.mubr.bf16.mxu0 0
        %2112 = vmatmul.mubr.bf16.gmra.mrb[0].mxu0 %v2009
        %v2113 = vpop.f32.mrb[0].mxu0
        %v2114 = vadd.f32 0.0, %v2113
        %v2115 = vpop.f32.mrb[0].mxu0
        %v2116 = vpop.f32.mrb[0].mxu0
        %v2117 = vadd.f32 0.0, %v2116
        %v2118 = vpop.f32.mrb[0].mxu0
        %2119 = vmatprep.mubr.bf16.mxu0 0
        %2120 = vmatmul.mubr.bf16.gmra.mrb[0].mxu0 %v2012
        %v2121 = vpop.f32.mrb[0].mxu0
        %v2122 = vadd.f32 0.0, %v2121
        %v2123 = vpop.f32.mrb[0].mxu0
        %v2124 = vpop.f32.mrb[0].mxu0
        %v2125 = vadd.f32 0.0, %v2124
        %v2126 = vpop.f32.mrb[0].mxu0
        %2127 = vmatprep.mubr.bf16.mxu0 0
        %2128 = vmatmul.mubr.bf16.gmra.mrb[0].mxu0 %v2015
        %v2129 = vpop.f32.mrb[0].mxu0
        %v2130 = vadd.f32 0.0, %v2129
        %v2131 = vpop.f32.mrb[0].mxu0
        %v2132 = vpop.f32.mrb[0].mxu0
        %v2133 = vadd.f32 0.0, %v2132
        %v2134 = vpop.f32.mrb[0].mxu0
        %2135 = vmatprep.mubr.bf16.mxu0 0
        %2136 = vmatmul.mubr.bf16.gmra.mrb[0].mxu0 %v2018
        %v2137 = vpop.f32.mrb[0].mxu0
        %v2138 = vadd.f32 0.0, %v2137
        %v2139 = vpop.f32.mrb[0].mxu0
        %v2140 = vpop.f32.mrb[0].mxu0
        %v2141 = vadd.f32 0.0, %v2140
        %v2142 = vpop.f32.mrb[0].mxu0
        %2143 = vmatprep.mubr.bf16.mxu0 0
        %2144 = vmatmul.mubr.bf16.gmra.mrb[0].mxu0 %v2021
        %v2145 = vpop.f32.mrb[0].mxu0
        %v2146 = vadd.f32 0.0, %v2145
        %v2147 = vpop.f32.mrb[0].mxu0
        %v2148 = vpop.f32.mrb[0].mxu0
        %v2149 = vadd.f32 0.0, %v2148
        %v2150 = vpop.f32.mrb[0].mxu0
        %2151 = vmatprep.mubr.bf16.mxu0 0
        %2152 = vmatmul.mubr.bf16.gmra.mrb[0].mxu0 %v2024
        %v2153 = vpop.f32.mrb[0].mxu0
        %v2154 = vadd.f32 0.0, %v2153
        %v2155 = vpop.f32.mrb[0].mxu0
        %v2156 = vpop.f32.mrb[0].mxu0
        %v2157 = vadd.f32 0.0, %v2156
        %v2158 = vpop.f32.mrb[0].mxu0
        %2159 = vmatprep.mubr.bf16.mxu0 0
        %2160 = vmatmul.mubr.bf16.gmra.mrb[0].mxu0 %v2027
        %v2161 = vpop.f32.mrb[0].mxu0
        %v2162 = vadd.f32 0.0, %v2161
        %v2163 = vpop.f32.mrb[0].mxu0
        %v2164 = vpop.f32.mrb[0].mxu0
        %v2165 = vadd.f32 0.0, %v2164
        %v2166 = vpop.f32.mrb[0].mxu0
        %2167 = vmatprep.mubr.bf16.mxu0 0
        %2168 = vmatmul.mubr.bf16.gmra.mrb[0].mxu0 %v2030
        %v2169 = vpop.f32.mrb[0].mxu0
        %v2170 = vadd.f32 0.0, %v2169
        %v2171 = vpop.f32.mrb[0].mxu0
        %v2172 = vpop.f32.mrb[0].mxu0
        %v2173 = vadd.f32 0.0, %v2172
        %v2174 = vpop.f32.mrb[0].mxu0
        %2175 = vmatprep.mubr.bf16.mxu0 0
        %2176 = vmatmul.mubr.bf16.gmra.mrb[0].mxu0 %v2033
        %v2177 = vpop.f32.mrb[0].mxu0
        %v2178 = vadd.f32 0.0, %v2177
        %v2179 = vpop.f32.mrb[0].mxu0
        %v2180 = vpop.f32.mrb[0].mxu0
        %v2181 = vadd.f32 0.0, %v2180
        %v2182 = vpop.f32.mrb[0].mxu0
        %2183 = vmatprep.mubr.bf16.mxu0 0
        %2184 = vmatmul.mubr.bf16.gmra.mrb[0].mxu0 %v2036
        %v2185 = vpop.f32.mrb[0].mxu0
        %v2186 = vadd.f32 0.0, %v2185
        %v2187 = vpop.f32.mrb[0].mxu0
        %v2188 = vpop.f32.mrb[0].mxu0
        %v2189 = vadd.f32 0.0, %v2188
        %v2190 = vpop.f32.mrb[0].mxu0
        %2191 = vmatprep.mubr.bf16.mxu0 0
        %2192 = vmatmul.mubr.bf16.gmra.mrb[0].mxu0 %v2039
        %v2193 = vpop.f32.mrb[0].mxu0
        %v2194 = vadd.f32 0.0, %v2193
        %v2195 = vpop.f32.mrb[0].mxu0
        %v2196 = vpop.f32.mrb[0].mxu0
        %v2197 = vadd.f32 0.0, %v2196
        %v2198 = vpop.f32.mrb[0].mxu0
        %2199 = vmatprep.mubr.bf16.mxu0 0
        %2200 = vmatmul.mubr.bf16.gmra.mrb[0].mxu0 %v2042
        %v2201 = vpop.f32.mrb[0].mxu0
        %v2202 = vadd.f32 0.0, %v2201
        %v2203 = vpop.f32.mrb[0].mxu0
        %v2204 = vpop.f32.mrb[0].mxu0
        %v2205 = vadd.f32 0.0, %v2204
        %v2206 = vpop.f32.mrb[0].mxu0
        %2207 = vdwg.mxu0
        %v2208 = vadd.f32 %v1657, %v2082
        %v2209 = vadd.f32 %v1660, %v2085
        %v2210 = vadd.f32 %v1665, %v2090
        %v2211 = vadd.f32 %v1668, %v2093
        %v2212 = vadd.f32 %v1673, %v2098
        %v2213 = vadd.f32 %v1676, %v2101
        %v2214 = vadd.f32 %v1681, %v2106
        %v2215 = vadd.f32 %v1684, %v2109
        %v2216 = vadd.f32 %v1689, %v2114
        %v2217 = vadd.f32 %v1692, %v2117
        %v2218 = vadd.f32 %v1697, %v2122
        %v2219 = vadd.f32 %v1700, %v2125
        %v2220 = vadd.f32 %v1705, %v2130
        %v2221 = vadd.f32 %v1708, %v2133
        %v2222 = vadd.f32 %v1713, %v2138
        %v2223 = vadd.f32 %v1716, %v2141
        %v2224 = vadd.f32 %v1721, %v2146
        %v2225 = vadd.f32 %v1724, %v2149
        %v2226 = vadd.f32 %v1729, %v2154
        %v2227 = vadd.f32 %v1732, %v2157
        %v2228 = vadd.f32 %v1737, %v2162
        %v2229 = vadd.f32 %v1740, %v2165
        %v2230 = vadd.f32 %v1745, %v2170
        %v2231 = vadd.f32 %v1748, %v2173
        %v2232 = vadd.f32 %v1753, %v2178
        %v2233 = vadd.f32 %v1756, %v2181
        %v2234 = vadd.f32 %v1761, %v2186
        %v2235 = vadd.f32 %v1764, %v2189
        %v2236 = vadd.f32 %v1769, %v2194
        %v2237 = vadd.f32 %v1772, %v2197
        %v2238 = vadd.f32 %v1777, %v2202
        %v2239 = vadd.f32 %v1780, %v2205
        %v2240 = vld [vmem:[%s673] sm:$0xf]
        %v2241 = vld [vmem:[%s673 + $0x4] sm:$0xf]
        %v2242 = vld [vmem:[%s673 + $0xc] sm:$0xf]
        %v2243 = vld [vmem:[%s673 + $0x10] sm:$0xf]
        %v2244 = vld [vmem:[%s673 + $0x18] sm:$0xf]
        %v2245 = vld [vmem:[%s673 + $0x1c] sm:$0xf]
        %v2246 = vld [vmem:[%s673 + $0x24] sm:$0xf]
        %v2247 = vld [vmem:[%s673 + $0x28] sm:$0xf]
        %v2248 = vld [vmem:[%s673 + $0x30] sm:$0xf]
        %v2249 = vld [vmem:[%s673 + $0x34] sm:$0xf]
        %v2250 = vld [vmem:[%s673 + $0x3c] sm:$0xf]
        %v2251 = vld [vmem:[%s673 + $0x40] sm:$0xf]
        %v2252 = vld [vmem:[%s673 + $0x48] sm:$0xf]
        %v2253 = vld [vmem:[%s673 + $0x4c] sm:$0xf]
        %v2254 = vld [vmem:[%s673 + $0x54] sm:$0xf]
        %v2255 = vld [vmem:[%s673 + $0x58] sm:$0xf]
        %v2256 = vld [vmem:[%s673 + $0x60] sm:$0xf]
        %v2257 = vld [vmem:[%s673 + $0x64] sm:$0xf]
        %v2258 = vld [vmem:[%s673 + $0x6c] sm:$0xf]
        %v2259 = vld [vmem:[%s673 + $0x70] sm:$0xf]
        %v2260 = vld [vmem:[%s673 + $0x78] sm:$0xf]
        %v2261 = vld [vmem:[%s673 + $0x7c] sm:$0xf]
        %v2262 = vld [vmem:[%s673 + $0x84] sm:$0xf]
        %v2263 = vld [vmem:[%s673 + $0x88] sm:$0xf]
        %v2264 = vld [vmem:[%s673 + $0x90] sm:$0xf]
        %v2265 = vld [vmem:[%s673 + $0x94] sm:$0xf]
        %v2266 = vld [vmem:[%s673 + $0x9c] sm:$0xf]
        %v2267 = vld [vmem:[%s673 + $0xa0] sm:$0xf]
        %v2268 = vld [vmem:[%s673 + $0xa8] sm:$0xf]
        %v2269 = vld [vmem:[%s673 + $0xac] sm:$0xf]
        %v2270 = vld [vmem:[%s673 + $0xb4] sm:$0xf]
        %v2271 = vld [vmem:[%s673 + $0xb8] sm:$0xf]
        %s2272 = scalar_lea.vmem %s1, 6
        %v2273 = vld [vmem:[%s2272] sm:$0x3]
        %v2306 = vunpack.c.l.b16 %v2240
        %v2307 = vunpack.c.l.b16 %v2241
        %v2308 = vunpack.c.l.b16 %v2242
        %v2309 = vunpack.c.l.b16 %v2243
        %v2310 = vunpack.c.l.b16 %v2244
        %v2311 = vunpack.c.l.b16 %v2245
        %v2312 = vunpack.c.l.b16 %v2246
        %v2313 = vunpack.c.l.b16 %v2247
        %v2314 = vunpack.c.l.b16 %v2248
        %v2315 = vunpack.c.l.b16 %v2249
        %v2316 = vunpack.c.l.b16 %v2250
        %v2317 = vunpack.c.l.b16 %v2251
        %v2318 = vunpack.c.l.b16 %v2252
        %v2319 = vunpack.c.l.b16 %v2253
        %v2320 = vunpack.c.l.b16 %v2254
        %v2321 = vunpack.c.l.b16 %v2255
        %v2322 = vunpack.c.l.b16 %v2256
        %v2323 = vunpack.c.l.b16 %v2257
        %v2324 = vunpack.c.l.b16 %v2258
        %v2325 = vunpack.c.l.b16 %v2259
        %v2326 = vunpack.c.l.b16 %v2260
        %v2327 = vunpack.c.l.b16 %v2261
        %v2328 = vunpack.c.l.b16 %v2262
        %v2329 = vunpack.c.l.b16 %v2263
        %v2330 = vunpack.c.l.b16 %v2264
        %v2331 = vunpack.c.l.b16 %v2265
        %v2332 = vunpack.c.l.b16 %v2266
        %v2333 = vunpack.c.l.b16 %v2267
        %v2334 = vunpack.c.l.b16 %v2268
        %v2335 = vunpack.c.l.b16 %v2269
        %v2336 = vunpack.c.l.b16 %v2270
        %v2337 = vunpack.c.l.b16 %v2271
        %v2338 = vpack.c.b16 %v2307, %v2306
        %v2339 = vpack.c.b16 %v2309, %v2308
        %v2340 = vpack.c.b16 %v2311, %v2310
        %v2341 = vpack.c.b16 %v2313, %v2312
        %v2342 = vpack.c.b16 %v2315, %v2314
        %v2343 = vpack.c.b16 %v2317, %v2316
        %v2344 = vpack.c.b16 %v2319, %v2318
        %v2345 = vpack.c.b16 %v2321, %v2320
        %v2346 = vpack.c.b16 %v2323, %v2322
        %v2347 = vpack.c.b16 %v2325, %v2324
        %v2348 = vpack.c.b16 %v2327, %v2326
        %v2349 = vpack.c.b16 %v2329, %v2328
        %v2350 = vpack.c.b16 %v2331, %v2330
        %v2351 = vpack.c.b16 %v2333, %v2332
        %v2352 = vpack.c.b16 %v2335, %v2334
        %v2353 = vpack.c.b16 %v2337, %v2336
        %v2355 = vsel %vm1274, %v2338, 0
        %v2358 = vsel %vm1274, %v2339, 0
        %v2361 = vsel %vm1274, %v2340, 0
        %v2364 = vsel %vm1274, %v2341, 0
        %v2367 = vsel %vm1274, %v2342, 0
        %v2370 = vsel %vm1274, %v2343, 0
        %v2373 = vsel %vm1274, %v2344, 0
        %v2376 = vsel %vm1274, %v2345, 0
        %v2379 = vsel %vm1274, %v2346, 0
        %v2382 = vsel %vm1274, %v2347, 0
        %v2385 = vsel %vm1274, %v2348, 0
        %v2388 = vsel %vm1274, %v2349, 0
        %v2391 = vsel %vm1274, %v2350, 0
        %v2394 = vsel %vm1274, %v2351, 0
        %v2397 = vsel %vm1274, %v2352, 0
        %v2400 = vsel %vm1274, %v2353, 0
        %v2403 = vand.u32 %v2273, %v1326
        %2405 = vmatprep.subr.bf16.mxu0 0
        %2406 = vmatpush1.bf16.msra.mxu0 %v2403
        %2407 = vmatprep.subr.bf16.mxu0 0
        %2408 = vmatpush1.bf16.msra.mxu0 0
        %2409 = vmatprep.subr.bf16.mxu0 0
        %2410 = vmatpush1.bf16.msra.mxu0 0
        %2411 = vmatprep.subr.bf16.mxu0 0
        %2412 = vmatpush1.bf16.msra.mxu0 0
        %2413 = vmatprep.subr.bf16.mxu0 0
        %2414 = vmatpush1.bf16.msra.mxu0 0
        %2415 = vmatprep.subr.bf16.mxu0 0
        %2416 = vmatpush1.bf16.msra.mxu0 0
        %2417 = vmatprep.subr.bf16.mxu0 0
        %2418 = vmatpush1.bf16.msra.mxu0 0
        %2419 = vmatprep.subr.bf16.mxu0 0
        %2420 = vmatpush1.bf16.msra.mxu0 0
        %2421 = vmatprep.subr.bf16.mxu0 0
        %2422 = vmatpush1.bf16.msra.mxu0 0
        %2423 = vmatprep.subr.bf16.mxu0 0
        %2424 = vmatpush1.bf16.msra.mxu0 0
        %2425 = vmatprep.subr.bf16.mxu0 0
        %2426 = vmatpush1.bf16.msra.mxu0 0
        %2427 = vmatprep.subr.bf16.mxu0 0
        %2428 = vmatpush1.bf16.msra.mxu0 0
        %2429 = vmatprep.subr.bf16.mxu0 0
        %2430 = vmatpush1.bf16.msra.mxu0 0
        %2431 = vmatprep.subr.bf16.mxu0 0
        %2432 = vmatpush1.bf16.msra.mxu0 0
        %2433 = vmatprep.subr.bf16.mxu0 0
        %2434 = vmatpush1.bf16.msra.mxu0 0
        %2435 = vmatprep.subr.bf16.mxu0 0
        %2436 = vmatpush1.bf16.msra.mxu0 0
        %2437 = vmatprep.mubr.bf16.mxu0 0
        %2438 = vmatmul.mubr.bf16.gmra.mrb[0].mxu0 %v2355
        %v2439 = vpop.f32.mrb[0].mxu0
        %v2440 = vadd.f32 0.0, %v2439
        %v2441 = vpop.f32.mrb[0].mxu0
        %v2442 = vpop.f32.mrb[0].mxu0
        %v2443 = vadd.f32 0.0, %v2442
        %v2444 = vpop.f32.mrb[0].mxu0
        %2445 = vmatprep.mubr.bf16.mxu0 0
        %2446 = vmatmul.mubr.bf16.gmra.mrb[0].mxu0 %v2358
        %v2447 = vpop.f32.mrb[0].mxu0
        %v2448 = vadd.f32 0.0, %v2447
        %v2449 = vpop.f32.mrb[0].mxu0
        %v2450 = vpop.f32.mrb[0].mxu0
        %v2451 = vadd.f32 0.0, %v2450
        %v2452 = vpop.f32.mrb[0].mxu0
        %2453 = vmatprep.mubr.bf16.mxu0 0
        %2454 = vmatmul.mubr.bf16.gmra.mrb[0].mxu0 %v2361
        %v2455 = vpop.f32.mrb[0].mxu0
        %v2456 = vadd.f32 0.0, %v2455
        %v2457 = vpop.f32.mrb[0].mxu0
        %v2458 = vpop.f32.mrb[0].mxu0
        %v2459 = vadd.f32 0.0, %v2458
        %v2460 = vpop.f32.mrb[0].mxu0
        %2461 = vmatprep.mubr.bf16.mxu0 0
        %2462 = vmatmul.mubr.bf16.gmra.mrb[0].mxu0 %v2364
        %v2463 = vpop.f32.mrb[0].mxu0
        %v2464 = vadd.f32 0.0, %v2463
        %v2465 = vpop.f32.mrb[0].mxu0
        %v2466 = vpop.f32.mrb[0].mxu0
        %v2467 = vadd.f32 0.0, %v2466
        %v2468 = vpop.f32.mrb[0].mxu0
        %2469 = vmatprep.mubr.bf16.mxu0 0
        %2470 = vmatmul.mubr.bf16.gmra.mrb[0].mxu0 %v2367
        %v2471 = vpop.f32.mrb[0].mxu0
        %v2472 = vadd.f32 0.0, %v2471
        %v2473 = vpop.f32.mrb[0].mxu0
        %v2474 = vpop.f32.mrb[0].mxu0
        %v2475 = vadd.f32 0.0, %v2474
        %v2476 = vpop.f32.mrb[0].mxu0
        %2477 = vmatprep.mubr.bf16.mxu0 0
        %2478 = vmatmul.mubr.bf16.gmra.mrb[0].mxu0 %v2370
        %v2479 = vpop.f32.mrb[0].mxu0
        %v2480 = vadd.f32 0.0, %v2479
        %v2481 = vpop.f32.mrb[0].mxu0
        %v2482 = vpop.f32.mrb[0].mxu0
        %v2483 = vadd.f32 0.0, %v2482
        %v2484 = vpop.f32.mrb[0].mxu0
        %2485 = vmatprep.mubr.bf16.mxu0 0
        %2486 = vmatmul.mubr.bf16.gmra.mrb[0].mxu0 %v2373
        %v2487 = vpop.f32.mrb[0].mxu0
        %v2488 = vadd.f32 0.0, %v2487
        %v2489 = vpop.f32.mrb[0].mxu0
        %v2490 = vpop.f32.mrb[0].mxu0
        %v2491 = vadd.f32 0.0, %v2490
        %v2492 = vpop.f32.mrb[0].mxu0
        %2493 = vmatprep.mubr.bf16.mxu0 0
        %2494 = vmatmul.mubr.bf16.gmra.mrb[0].mxu0 %v2376
        %v2495 = vpop.f32.mrb[0].mxu0
        %v2496 = vadd.f32 0.0, %v2495
        %v2497 = vpop.f32.mrb[0].mxu0
        %v2498 = vpop.f32.mrb[0].mxu0
        %v2499 = vadd.f32 0.0, %v2498
        %v2500 = vpop.f32.mrb[0].mxu0
        %2501 = vmatprep.mubr.bf16.mxu0 0
        %2502 = vmatmul.mubr.bf16.gmra.mrb[0].mxu0 %v2379
        %v2503 = vpop.f32.mrb[0].mxu0
        %v2504 = vadd.f32 0.0, %v2503
        %v2505 = vpop.f32.mrb[0].mxu0
        %v2506 = vpop.f32.mrb[0].mxu0
        %v2507 = vadd.f32 0.0, %v2506
        %v2508 = vpop.f32.mrb[0].mxu0
        %2509 = vmatprep.mubr.bf16.mxu0 0
        %2510 = vmatmul.mubr.bf16.gmra.mrb[0].mxu0 %v2382
        %v2511 = vpop.f32.mrb[0].mxu0
        %v2512 = vadd.f32 0.0, %v2511
        %v2513 = vpop.f32.mrb[0].mxu0
        %v2514 = vpop.f32.mrb[0].mxu0
        %v2515 = vadd.f32 0.0, %v2514
        %v2516 = vpop.f32.mrb[0].mxu0
        %2517 = vmatprep.mubr.bf16.mxu0 0
        %2518 = vmatmul.mubr.bf16.gmra.mrb[0].mxu0 %v2385
        %v2519 = vpop.f32.mrb[0].mxu0
        %v2520 = vadd.f32 0.0, %v2519
        %v2521 = vpop.f32.mrb[0].mxu0
        %v2522 = vpop.f32.mrb[0].mxu0
        %v2523 = vadd.f32 0.0, %v2522
        %v2524 = vpop.f32.mrb[0].mxu0
        %2525 = vmatprep.mubr.bf16.mxu0 0
        %2526 = vmatmul.mubr.bf16.gmra.mrb[0].mxu0 %v2388
        %v2527 = vpop.f32.mrb[0].mxu0
        %v2528 = vadd.f32 0.0, %v2527
        %v2529 = vpop.f32.mrb[0].mxu0
        %v2530 = vpop.f32.mrb[0].mxu0
        %v2531 = vadd.f32 0.0, %v2530
        %v2532 = vpop.f32.mrb[0].mxu0
        %2533 = vmatprep.mubr.bf16.mxu0 0
        %2534 = vmatmul.mubr.bf16.gmra.mrb[0].mxu0 %v2391
        %v2535 = vpop.f32.mrb[0].mxu0
        %v2536 = vadd.f32 0.0, %v2535
        %v2537 = vpop.f32.mrb[0].mxu0
        %v2538 = vpop.f32.mrb[0].mxu0
        %v2539 = vadd.f32 0.0, %v2538
        %v2540 = vpop.f32.mrb[0].mxu0
        %2541 = vmatprep.mubr.bf16.mxu0 0
        %2542 = vmatmul.mubr.bf16.gmra.mrb[0].mxu0 %v2394
        %v2543 = vpop.f32.mrb[0].mxu0
        %v2544 = vadd.f32 0.0, %v2543
        %v2545 = vpop.f32.mrb[0].mxu0
        %v2546 = vpop.f32.mrb[0].mxu0
        %v2547 = vadd.f32 0.0, %v2546
        %v2548 = vpop.f32.mrb[0].mxu0
        %2549 = vmatprep.mubr.bf16.mxu0 0
        %2550 = vmatmul.mubr.bf16.gmra.mrb[0].mxu0 %v2397
        %v2551 = vpop.f32.mrb[0].mxu0
        %v2552 = vadd.f32 0.0, %v2551
        %v2553 = vpop.f32.mrb[0].mxu0
        %v2554 = vpop.f32.mrb[0].mxu0
        %v2555 = vadd.f32 0.0, %v2554
        %v2556 = vpop.f32.mrb[0].mxu0
        %2557 = vmatprep.mubr.bf16.mxu0 0
        %2558 = vmatmul.mubr.bf16.gmra.mrb[0].mxu0 %v2400
        %v2559 = vpop.f32.mrb[0].mxu0
        %v2560 = vadd.f32 0.0, %v2559
        %v2561 = vpop.f32.mrb[0].mxu0
        %v2562 = vpop.f32.mrb[0].mxu0
        %v2563 = vadd.f32 0.0, %v2562
        %v2564 = vpop.f32.mrb[0].mxu0
        %2565 = vdwg.mxu0
        %v2566 = vadd.f32 %v2208, %v2440
        %v2567 = vadd.f32 %v2209, %v2443
        %v2568 = vadd.f32 %v2210, %v2448
        %v2569 = vadd.f32 %v2211, %v2451
        %v2570 = vadd.f32 %v2212, %v2456
        %v2571 = vadd.f32 %v2213, %v2459
        %v2572 = vadd.f32 %v2214, %v2464
        %v2573 = vadd.f32 %v2215, %v2467
        %v2574 = vadd.f32 %v2216, %v2472
        %v2575 = vadd.f32 %v2217, %v2475
        %v2576 = vadd.f32 %v2218, %v2480
        %v2577 = vadd.f32 %v2219, %v2483
        %v2578 = vadd.f32 %v2220, %v2488
        %v2579 = vadd.f32 %v2221, %v2491
        %v2580 = vadd.f32 %v2222, %v2496
        %v2581 = vadd.f32 %v2223, %v2499
        %v2582 = vadd.f32 %v2224, %v2504
        %v2583 = vadd.f32 %v2225, %v2507
        %v2584 = vadd.f32 %v2226, %v2512
        %v2585 = vadd.f32 %v2227, %v2515
        %v2586 = vadd.f32 %v2228, %v2520
        %v2587 = vadd.f32 %v2229, %v2523
        %v2588 = vadd.f32 %v2230, %v2528
        %v2589 = vadd.f32 %v2231, %v2531
        %v2590 = vadd.f32 %v2232, %v2536
        %v2591 = vadd.f32 %v2233, %v2539
        %v2592 = vadd.f32 %v2234, %v2544
        %v2593 = vadd.f32 %v2235, %v2547
        %v2594 = vadd.f32 %v2236, %v2552
        %v2595 = vadd.f32 %v2237, %v2555
        %v2596 = vadd.f32 %v2238, %v2560
        %v2597 = vadd.f32 %v2239, %v2563
        %v2598 = vld [vmem:[%s673] sm:$0xf]
        %v2599 = vld [vmem:[%s673 + $0x4] sm:$0xf]
        %v2600 = vld [vmem:[%s673 + $0x8] sm:$0x1]
        %v2601 = vld [vmem:[%s673 + $0xc] sm:$0xf]
        %v2602 = vld [vmem:[%s673 + $0x10] sm:$0xf]
        %v2603 = vld [vmem:[%s673 + $0x14] sm:$0x1]
        %v2604 = vld [vmem:[%s673 + $0x18] sm:$0xf]
        %v2605 = vld [vmem:[%s673 + $0x1c] sm:$0xf]
        %v2606 = vld [vmem:[%s673 + $0x20] sm:$0x1]
        %v2607 = vld [vmem:[%s673 + $0x24] sm:$0xf]
        %v2608 = vld [vmem:[%s673 + $0x28] sm:$0xf]
        %v2609 = vld [vmem:[%s673 + $0x2c] sm:$0x1]
        %v2610 = vld [vmem:[%s673 + $0x30] sm:$0xf]
        %v2611 = vld [vmem:[%s673 + $0x34] sm:$0xf]
        %v2612 = vld [vmem:[%s673 + $0x38] sm:$0x1]
        %v2613 = vld [vmem:[%s673 + $0x3c] sm:$0xf]
        %v2614 = vld [vmem:[%s673 + $0x40] sm:$0xf]
        %v2615 = vld [vmem:[%s673 + $0x44] sm:$0x1]
        %v2616 = vld [vmem:[%s673 + $0x48] sm:$0xf]
        %v2617 = vld [vmem:[%s673 + $0x4c] sm:$0xf]
        %v2618 = vld [vmem:[%s673 + $0x50] sm:$0x1]
        %v2619 = vld [vmem:[%s673 + $0x54] sm:$0xf]
        %v2620 = vld [vmem:[%s673 + $0x58] sm:$0xf]
        %v2621 = vld [vmem:[%s673 + $0x5c] sm:$0x1]
        %v2622 = vld [vmem:[%s673 + $0x60] sm:$0xf]
        %v2623 = vld [vmem:[%s673 + $0x64] sm:$0xf]
        %v2624 = vld [vmem:[%s673 + $0x68] sm:$0x1]
        %v2625 = vld [vmem:[%s673 + $0x6c] sm:$0xf]
        %v2626 = vld [vmem:[%s673 + $0x70] sm:$0xf]
        %v2627 = vld [vmem:[%s673 + $0x74] sm:$0x1]
        %v2628 = vld [vmem:[%s673 + $0x78] sm:$0xf]
        %v2629 = vld [vmem:[%s673 + $0x7c] sm:$0xf]
        %v2630 = vld [vmem:[%s673 + $0x80] sm:$0x1]
        %v2631 = vld [vmem:[%s673 + $0x84] sm:$0xf]
        %v2632 = vld [vmem:[%s673 + $0x88] sm:$0xf]
        %v2633 = vld [vmem:[%s673 + $0x8c] sm:$0x1]
        %v2634 = vld [vmem:[%s673 + $0x90] sm:$0xf]
        %v2635 = vld [vmem:[%s673 + $0x94] sm:$0xf]
        %v2636 = vld [vmem:[%s673 + $0x98] sm:$0x1]
        %v2637 = vld [vmem:[%s673 + $0x9c] sm:$0xf]
        %v2638 = vld [vmem:[%s673 + $0xa0] sm:$0xf]
        %v2639 = vld [vmem:[%s673 + $0xa4] sm:$0x1]
        %v2640 = vld [vmem:[%s673 + $0xa8] sm:$0xf]
        %v2641 = vld [vmem:[%s673 + $0xac] sm:$0xf]
        %v2642 = vld [vmem:[%s673 + $0xb0] sm:$0x1]
        %v2643 = vld [vmem:[%s673 + $0xb4] sm:$0xf]
        %v2644 = vld [vmem:[%s673 + $0xb8] sm:$0xf]
        %v2645 = vld [vmem:[%s673 + $0xbc] sm:$0x1]
        %v2647 = vshrl.u32 %v2598, 16
        %v2649 = vrot.slane %v2647, 4
        %v2650 = vshll.u32 %v2598, 16
        %v2652 = vrot.slane %v2650, 5
        %v2653 = vor.u32 %v2649, %v2652
        %v2654 = vrot.slane %v2653, 4
        %v2656 = vshll.u32 %v2599, 16
        %v2658 = vrot.slane %v2656, 5
        %v2659 = vsel %vm839, %v2654, %v2658
        %v2660 = vshrl.u32 %v2599, 16
        %v2662 = vrot.slane %v2660, 4
        %v2663 = vor.u32 %v2662, %v2658
        %v2664 = vrot.slane %v2663, 4
        %v2666 = vshll.u32 %v2600, 16
        %v2668 = vrot.slane %v2666, 5
        %v2669 = vsel %vm839, %v2664, %v2668
        %v2671 = vshrl.u32 %v2601, 16
        %v2673 = vrot.slane %v2671, 4
        %v2674 = vshll.u32 %v2601, 16
        %v2676 = vrot.slane %v2674, 5
        %v2677 = vor.u32 %v2673, %v2676
        %v2678 = vrot.slane %v2677, 4
        %v2680 = vshll.u32 %v2602, 16
        %v2682 = vrot.slane %v2680, 5
        %v2683 = vsel %vm839, %v2678, %v2682
        %v2684 = vshrl.u32 %v2602, 16
        %v2686 = vrot.slane %v2684, 4
        %v2687 = vor.u32 %v2686, %v2682
        %v2688 = vrot.slane %v2687, 4
        %v2690 = vshll.u32 %v2603, 16
        %v2692 = vrot.slane %v2690, 5
        %v2693 = vsel %vm839, %v2688, %v2692
        %v2695 = vshrl.u32 %v2604, 16
        %v2697 = vrot.slane %v2695, 4
        %v2698 = vshll.u32 %v2604, 16
        %v2700 = vrot.slane %v2698, 5
        %v2701 = vor.u32 %v2697, %v2700
        %v2702 = vrot.slane %v2701, 4
        %v2704 = vshll.u32 %v2605, 16
        %v2706 = vrot.slane %v2704, 5
        %v2707 = vsel %vm839, %v2702, %v2706
        %v2708 = vshrl.u32 %v2605, 16
        %v2710 = vrot.slane %v2708, 4
        %v2711 = vor.u32 %v2710, %v2706
        %v2712 = vrot.slane %v2711, 4
        %v2714 = vshll.u32 %v2606, 16
        %v2716 = vrot.slane %v2714, 5
        %v2717 = vsel %vm839, %v2712, %v2716
        %v2719 = vshrl.u32 %v2607, 16
        %v2721 = vrot.slane %v2719, 4
        %v2722 = vshll.u32 %v2607, 16
        %v2724 = vrot.slane %v2722, 5
        %v2725 = vor.u32 %v2721, %v2724
        %v2726 = vrot.slane %v2725, 4
        %v2728 = vshll.u32 %v2608, 16
        %v2730 = vrot.slane %v2728, 5
        %v2731 = vsel %vm839, %v2726, %v2730
        %v2732 = vshrl.u32 %v2608, 16
        %v2734 = vrot.slane %v2732, 4
        %v2735 = vor.u32 %v2734, %v2730
        %v2736 = vrot.slane %v2735, 4
        %v2738 = vshll.u32 %v2609, 16
        %v2740 = vrot.slane %v2738, 5
        %v2741 = vsel %vm839, %v2736, %v2740
        %v2743 = vshrl.u32 %v2610, 16
        %v2745 = vrot.slane %v2743, 4
        %v2746 = vshll.u32 %v2610, 16
        %v2748 = vrot.slane %v2746, 5
        %v2749 = vor.u32 %v2745, %v2748
        %v2750 = vrot.slane %v2749, 4
        %v2752 = vshll.u32 %v2611, 16
        %v2754 = vrot.slane %v2752, 5
        %v2755 = vsel %vm839, %v2750, %v2754
        %v2756 = vshrl.u32 %v2611, 16
        %v2758 = vrot.slane %v2756, 4
        %v2759 = vor.u32 %v2758, %v2754
        %v2760 = vrot.slane %v2759, 4
        %v2762 = vshll.u32 %v2612, 16
        %v2764 = vrot.slane %v2762, 5
        %v2765 = vsel %vm839, %v2760, %v2764
        %v2767 = vshrl.u32 %v2613, 16
        %v2769 = vrot.slane %v2767, 4
        %v2770 = vshll.u32 %v2613, 16
        %v2772 = vrot.slane %v2770, 5
        %v2773 = vor.u32 %v2769, %v2772
        %v2774 = vrot.slane %v2773, 4
        %v2776 = vshll.u32 %v2614, 16
        %v2778 = vrot.slane %v2776, 5
        %v2779 = vsel %vm839, %v2774, %v2778
        %v2780 = vshrl.u32 %v2614, 16
        %v2782 = vrot.slane %v2780, 4
        %v2783 = vor.u32 %v2782, %v2778
        %v2784 = vrot.slane %v2783, 4
        %v2786 = vshll.u32 %v2615, 16
        %v2788 = vrot.slane %v2786, 5
        %v2789 = vsel %vm839, %v2784, %v2788
        %v2791 = vshrl.u32 %v2616, 16
        %v2793 = vrot.slane %v2791, 4
        %v2794 = vshll.u32 %v2616, 16
        %v2796 = vrot.slane %v2794, 5
        %v2797 = vor.u32 %v2793, %v2796
        %v2798 = vrot.slane %v2797, 4
        %v2800 = vshll.u32 %v2617, 16
        %v2802 = vrot.slane %v2800, 5
        %v2803 = vsel %vm839, %v2798, %v2802
        %v2804 = vshrl.u32 %v2617, 16
        %v2806 = vrot.slane %v2804, 4
        %v2807 = vor.u32 %v2806, %v2802
        %v2808 = vrot.slane %v2807, 4
        %v2810 = vshll.u32 %v2618, 16
        %v2812 = vrot.slane %v2810, 5
        %v2813 = vsel %vm839, %v2808, %v2812
        %v2815 = vshrl.u32 %v2619, 16
        %v2817 = vrot.slane %v2815, 4
        %v2818 = vshll.u32 %v2619, 16
        %v2820 = vrot.slane %v2818, 5
        %v2821 = vor.u32 %v2817, %v2820
        %v2822 = vrot.slane %v2821, 4
        %v2824 = vshll.u32 %v2620, 16
        %v2826 = vrot.slane %v2824, 5
        %v2827 = vsel %vm839, %v2822, %v2826
        %v2828 = vshrl.u32 %v2620, 16
        %v2830 = vrot.slane %v2828, 4
        %v2831 = vor.u32 %v2830, %v2826
        %v2832 = vrot.slane %v2831, 4
        %v2834 = vshll.u32 %v2621, 16
        %v2836 = vrot.slane %v2834, 5
        %v2837 = vsel %vm839, %v2832, %v2836
        %v2839 = vshrl.u32 %v2622, 16
        %v2841 = vrot.slane %v2839, 4
        %v2842 = vshll.u32 %v2622, 16
        %v2844 = vrot.slane %v2842, 5
        %v2845 = vor.u32 %v2841, %v2844
        %v2846 = vrot.slane %v2845, 4
        %v2848 = vshll.u32 %v2623, 16
        %v2850 = vrot.slane %v2848, 5
        %v2851 = vsel %vm839, %v2846, %v2850
        %v2852 = vshrl.u32 %v2623, 16
        %v2854 = vrot.slane %v2852, 4
        %v2855 = vor.u32 %v2854, %v2850
        %v2856 = vrot.slane %v2855, 4
        %v2858 = vshll.u32 %v2624, 16
        %v2860 = vrot.slane %v2858, 5
        %v2861 = vsel %vm839, %v2856, %v2860
        %v2863 = vshrl.u32 %v2625, 16
        %v2865 = vrot.slane %v2863, 4
        %v2866 = vshll.u32 %v2625, 16
        %v2868 = vrot.slane %v2866, 5
        %v2869 = vor.u32 %v2865, %v2868
        %v2870 = vrot.slane %v2869, 4
        %v2872 = vshll.u32 %v2626, 16
        %v2874 = vrot.slane %v2872, 5
        %v2875 = vsel %vm839, %v2870, %v2874
        %v2876 = vshrl.u32 %v2626, 16
        %v2878 = vrot.slane %v2876, 4
        %v2879 = vor.u32 %v2878, %v2874
        %v2880 = vrot.slane %v2879, 4
        %v2882 = vshll.u32 %v2627, 16
        %v2884 = vrot.slane %v2882, 5
        %v2885 = vsel %vm839, %v2880, %v2884
        %v2887 = vshrl.u32 %v2628, 16
        %v2889 = vrot.slane %v2887, 4
        %v2890 = vshll.u32 %v2628, 16
        %v2892 = vrot.slane %v2890, 5
        %v2893 = vor.u32 %v2889, %v2892
        %v2894 = vrot.slane %v2893, 4
        %v2896 = vshll.u32 %v2629, 16
        %v2898 = vrot.slane %v2896, 5
        %v2899 = vsel %vm839, %v2894, %v2898
        %v2900 = vshrl.u32 %v2629, 16
        %v2902 = vrot.slane %v2900, 4
        %v2903 = vor.u32 %v2902, %v2898
        %v2904 = vrot.slane %v2903, 4
        %v2906 = vshll.u32 %v2630, 16
        %v2908 = vrot.slane %v2906, 5
        %v2909 = vsel %vm839, %v2904, %v2908
        %v2911 = vshrl.u32 %v2631, 16
        %v2913 = vrot.slane %v2911, 4
        %v2914 = vshll.u32 %v2631, 16
        %v2916 = vrot.slane %v2914, 5
        %v2917 = vor.u32 %v2913, %v2916
        %v2918 = vrot.slane %v2917, 4
        %v2920 = vshll.u32 %v2632, 16
        %v2922 = vrot.slane %v2920, 5
        %v2923 = vsel %vm839, %v2918, %v2922
        %v2924 = vshrl.u32 %v2632, 16
        %v2926 = vrot.slane %v2924, 4
        %v2927 = vor.u32 %v2926, %v2922
        %v2928 = vrot.slane %v2927, 4
        %v2930 = vshll.u32 %v2633, 16
        %v2932 = vrot.slane %v2930, 5
        %v2933 = vsel %vm839, %v2928, %v2932
        %v2935 = vshrl.u32 %v2634, 16
        %v2937 = vrot.slane %v2935, 4
        %v2938 = vshll.u32 %v2634, 16
        %v2940 = vrot.slane %v2938, 5
        %v2941 = vor.u32 %v2937, %v2940
        %v2942 = vrot.slane %v2941, 4
        %v2944 = vshll.u32 %v2635, 16
        %v2946 = vrot.slane %v2944, 5
        %v2947 = vsel %vm839, %v2942, %v2946
        %v2948 = vshrl.u32 %v2635, 16
        %v2950 = vrot.slane %v2948, 4
        %v2951 = vor.u32 %v2950, %v2946
        %v2952 = vrot.slane %v2951, 4
        %v2954 = vshll.u32 %v2636, 16
        %v2956 = vrot.slane %v2954, 5
        %v2957 = vsel %vm839, %v2952, %v2956
        %v2959 = vshrl.u32 %v2637, 16
        %v2961 = vrot.slane %v2959, 4
        %v2962 = vshll.u32 %v2637, 16
        %v2964 = vrot.slane %v2962, 5
        %v2965 = vor.u32 %v2961, %v2964
        %v2966 = vrot.slane %v2965, 4
        %v2968 = vshll.u32 %v2638, 16
        %v2970 = vrot.slane %v2968, 5
        %v2971 = vsel %vm839, %v2966, %v2970
        %v2972 = vshrl.u32 %v2638, 16
        %v2974 = vrot.slane %v2972, 4
        %v2975 = vor.u32 %v2974, %v2970
        %v2976 = vrot.slane %v2975, 4
        %v2978 = vshll.u32 %v2639, 16
        %v2980 = vrot.slane %v2978, 5
        %v2981 = vsel %vm839, %v2976, %v2980
        %v2983 = vshrl.u32 %v2640, 16
        %v2985 = vrot.slane %v2983, 4
        %v2986 = vshll.u32 %v2640, 16
        %v2988 = vrot.slane %v2986, 5
        %v2989 = vor.u32 %v2985, %v2988
        %v2990 = vrot.slane %v2989, 4
        %v2992 = vshll.u32 %v2641, 16
        %v2994 = vrot.slane %v2992, 5
        %v2995 = vsel %vm839, %v2990, %v2994
        %v2996 = vshrl.u32 %v2641, 16
        %v2998 = vrot.slane %v2996, 4
        %v2999 = vor.u32 %v2998, %v2994
        %v3000 = vrot.slane %v2999, 4
        %v3002 = vshll.u32 %v2642, 16
        %v3004 = vrot.slane %v3002, 5
        %v3005 = vsel %vm839, %v3000, %v3004
        %v3007 = vshrl.u32 %v2643, 16
        %v3009 = vrot.slane %v3007, 4
        %v3010 = vshll.u32 %v2643, 16
        %v3012 = vrot.slane %v3010, 5
        %v3013 = vor.u32 %v3009, %v3012
        %v3014 = vrot.slane %v3013, 4
        %v3016 = vshll.u32 %v2644, 16
        %v3018 = vrot.slane %v3016, 5
        %v3019 = vsel %vm839, %v3014, %v3018
        %v3020 = vshrl.u32 %v2644, 16
        %v3022 = vrot.slane %v3020, 4
        %v3023 = vor.u32 %v3022, %v3018
        %v3024 = vrot.slane %v3023, 4
        %v3026 = vshll.u32 %v2645, 16
        %v3028 = vrot.slane %v3026, 5
        %v3029 = vsel %vm839, %v3024, %v3028
        %s3030 = scalar_lea.vmem %s1, 8
        %v3031 = vld [vmem:[%s3030] sm:$0x3]
        %v3032 = vunpack.c.l.b16 %v2659
        %v3033 = vunpack.c.l.b16 %v2669
        %v3034 = vunpack.c.l.b16 %v2683
        %v3035 = vunpack.c.l.b16 %v2693
        %v3036 = vunpack.c.l.b16 %v2707
        %v3037 = vunpack.c.l.b16 %v2717
        %v3038 = vunpack.c.l.b16 %v2731
        %v3039 = vunpack.c.l.b16 %v2741
        %v3040 = vunpack.c.l.b16 %v2755
        %v3041 = vunpack.c.l.b16 %v2765
        %v3042 = vunpack.c.l.b16 %v2779
        %v3043 = vunpack.c.l.b16 %v2789
        %v3044 = vunpack.c.l.b16 %v2803
        %v3045 = vunpack.c.l.b16 %v2813
        %v3046 = vunpack.c.l.b16 %v2827
        %v3047 = vunpack.c.l.b16 %v2837
        %v3048 = vunpack.c.l.b16 %v2851
        %v3049 = vunpack.c.l.b16 %v2861
        %v3050 = vunpack.c.l.b16 %v2875
        %v3051 = vunpack.c.l.b16 %v2885
        %v3052 = vunpack.c.l.b16 %v2899
        %v3053 = vunpack.c.l.b16 %v2909
        %v3054 = vunpack.c.l.b16 %v2923
        %v3055 = vunpack.c.l.b16 %v2933
        %v3056 = vunpack.c.l.b16 %v2947
        %v3057 = vunpack.c.l.b16 %v2957
        %v3058 = vunpack.c.l.b16 %v2971
        %v3059 = vunpack.c.l.b16 %v2981
        %v3060 = vunpack.c.l.b16 %v2995
        %v3061 = vunpack.c.l.b16 %v3005
        %v3062 = vunpack.c.l.b16 %v3019
        %v3063 = vunpack.c.l.b16 %v3029
        %v3064 = vpack.c.b16 %v3033, %v3032
        %v3065 = vpack.c.b16 %v3035, %v3034
        %v3066 = vpack.c.b16 %v3037, %v3036
        %v3067 = vpack.c.b16 %v3039, %v3038
        %v3068 = vpack.c.b16 %v3041, %v3040
        %v3069 = vpack.c.b16 %v3043, %v3042
        %v3070 = vpack.c.b16 %v3045, %v3044
        %v3071 = vpack.c.b16 %v3047, %v3046
        %v3072 = vpack.c.b16 %v3049, %v3048
        %v3073 = vpack.c.b16 %v3051, %v3050
        %v3074 = vpack.c.b16 %v3053, %v3052
        %v3075 = vpack.c.b16 %v3055, %v3054
        %v3076 = vpack.c.b16 %v3057, %v3056
        %v3077 = vpack.c.b16 %v3059, %v3058
        %v3078 = vpack.c.b16 %v3061, %v3060
        %v3079 = vpack.c.b16 %v3063, %v3062
        %v3081 = vsel %vm1274, %v3064, 0
        %v3084 = vsel %vm1274, %v3065, 0
        %v3087 = vsel %vm1274, %v3066, 0
        %v3090 = vsel %vm1274, %v3067, 0
        %v3093 = vsel %vm1274, %v3068, 0
        %v3096 = vsel %vm1274, %v3069, 0
        %v3099 = vsel %vm1274, %v3070, 0
        %v3102 = vsel %vm1274, %v3071, 0
        %v3105 = vsel %vm1274, %v3072, 0
        %v3108 = vsel %vm1274, %v3073, 0
        %v3111 = vsel %vm1274, %v3074, 0
        %v3114 = vsel %vm1274, %v3075, 0
        %v3117 = vsel %vm1274, %v3076, 0
        %v3120 = vsel %vm1274, %v3077, 0
        %v3123 = vsel %vm1274, %v3078, 0
        %v3126 = vsel %vm1274, %v3079, 0
        %v3129 = vand.u32 %v3031, %v1326
        %3131 = vmatprep.subr.bf16.mxu0 0
        %3132 = vmatpush1.bf16.msra.mxu0 %v3129
        %3133 = vmatprep.subr.bf16.mxu0 0
        %3134 = vmatpush1.bf16.msra.mxu0 0
        %3135 = vmatprep.subr.bf16.mxu0 0
        %3136 = vmatpush1.bf16.msra.mxu0 0
        %3137 = vmatprep.subr.bf16.mxu0 0
        %3138 = vmatpush1.bf16.msra.mxu0 0
        %3139 = vmatprep.subr.bf16.mxu0 0
        %3140 = vmatpush1.bf16.msra.mxu0 0
        %3141 = vmatprep.subr.bf16.mxu0 0
        %3142 = vmatpush1.bf16.msra.mxu0 0
        %3143 = vmatprep.subr.bf16.mxu0 0
        %3144 = vmatpush1.bf16.msra.mxu0 0
        %3145 = vmatprep.subr.bf16.mxu0 0
        %3146 = vmatpush1.bf16.msra.mxu0 0
        %3147 = vmatprep.subr.bf16.mxu0 0
        %3148 = vmatpush1.bf16.msra.mxu0 0
        %3149 = vmatprep.subr.bf16.mxu0 0
        %3150 = vmatpush1.bf16.msra.mxu0 0
        %3151 = vmatprep.subr.bf16.mxu0 0
        %3152 = vmatpush1.bf16.msra.mxu0 0
        %3153 = vmatprep.subr.bf16.mxu0 0
        %3154 = vmatpush1.bf16.msra.mxu0 0
        %3155 = vmatprep.subr.bf16.mxu0 0
        %3156 = vmatpush1.bf16.msra.mxu0 0
        %3157 = vmatprep.subr.bf16.mxu0 0
        %3158 = vmatpush1.bf16.msra.mxu0 0
        %3159 = vmatprep.subr.bf16.mxu0 0
        %3160 = vmatpush1.bf16.msra.mxu0 0
        %3161 = vmatprep.subr.bf16.mxu0 0
        %3162 = vmatpush1.bf16.msra.mxu0 0
        %3163 = vmatprep.mubr.bf16.mxu0 0
        %3164 = vmatmul.mubr.bf16.gmra.mrb[0].mxu0 %v3081
        %v3165 = vpop.f32.mrb[0].mxu0
        %v3166 = vadd.f32 0.0, %v3165
        %v3167 = vpop.f32.mrb[0].mxu0
        %v3168 = vpop.f32.mrb[0].mxu0
        %v3169 = vadd.f32 0.0, %v3168
        %v3170 = vpop.f32.mrb[0].mxu0
        %3171 = vmatprep.mubr.bf16.mxu0 0
        %3172 = vmatmul.mubr.bf16.gmra.mrb[0].mxu0 %v3084
        %v3173 = vpop.f32.mrb[0].mxu0
        %v3174 = vadd.f32 0.0, %v3173
        %v3175 = vpop.f32.mrb[0].mxu0
        %v3176 = vpop.f32.mrb[0].mxu0
        %v3177 = vadd.f32 0.0, %v3176
        %v3178 = vpop.f32.mrb[0].mxu0
        %3179 = vmatprep.mubr.bf16.mxu0 0
        %3180 = vmatmul.mubr.bf16.gmra.mrb[0].mxu0 %v3087
        %v3181 = vpop.f32.mrb[0].mxu0
        %v3182 = vadd.f32 0.0, %v3181
        %v3183 = vpop.f32.mrb[0].mxu0
        %v3184 = vpop.f32.mrb[0].mxu0
        %v3185 = vadd.f32 0.0, %v3184
        %v3186 = vpop.f32.mrb[0].mxu0
        %3187 = vmatprep.mubr.bf16.mxu0 0
        %3188 = vmatmul.mubr.bf16.gmra.mrb[0].mxu0 %v3090
        %v3189 = vpop.f32.mrb[0].mxu0
        %v3190 = vadd.f32 0.0, %v3189
        %v3191 = vpop.f32.mrb[0].mxu0
        %v3192 = vpop.f32.mrb[0].mxu0
        %v3193 = vadd.f32 0.0, %v3192
        %v3194 = vpop.f32.mrb[0].mxu0
        %3195 = vmatprep.mubr.bf16.mxu0 0
        %3196 = vmatmul.mubr.bf16.gmra.mrb[0].mxu0 %v3093
        %v3197 = vpop.f32.mrb[0].mxu0
        %v3198 = vadd.f32 0.0, %v3197
        %v3199 = vpop.f32.mrb[0].mxu0
        %v3200 = vpop.f32.mrb[0].mxu0
        %v3201 = vadd.f32 0.0, %v3200
        %v3202 = vpop.f32.mrb[0].mxu0
        %3203 = vmatprep.mubr.bf16.mxu0 0
        %3204 = vmatmul.mubr.bf16.gmra.mrb[0].mxu0 %v3096
        %v3205 = vpop.f32.mrb[0].mxu0
        %v3206 = vadd.f32 0.0, %v3205
        %v3207 = vpop.f32.mrb[0].mxu0
        %v3208 = vpop.f32.mrb[0].mxu0
        %v3209 = vadd.f32 0.0, %v3208
        %v3210 = vpop.f32.mrb[0].mxu0
        %3211 = vmatprep.mubr.bf16.mxu0 0
        %3212 = vmatmul.mubr.bf16.gmra.mrb[0].mxu0 %v3099
        %v3213 = vpop.f32.mrb[0].mxu0
        %v3214 = vadd.f32 0.0, %v3213
        %v3215 = vpop.f32.mrb[0].mxu0
        %v3216 = vpop.f32.mrb[0].mxu0
        %v3217 = vadd.f32 0.0, %v3216
        %v3218 = vpop.f32.mrb[0].mxu0
        %3219 = vmatprep.mubr.bf16.mxu0 0
        %3220 = vmatmul.mubr.bf16.gmra.mrb[0].mxu0 %v3102
        %v3221 = vpop.f32.mrb[0].mxu0
        %v3222 = vadd.f32 0.0, %v3221
        %v3223 = vpop.f32.mrb[0].mxu0
        %v3224 = vpop.f32.mrb[0].mxu0
        %v3225 = vadd.f32 0.0, %v3224
        %v3226 = vpop.f32.mrb[0].mxu0
        %3227 = vmatprep.mubr.bf16.mxu0 0
        %3228 = vmatmul.mubr.bf16.gmra.mrb[0].mxu0 %v3105
        %v3229 = vpop.f32.mrb[0].mxu0
        %v3230 = vadd.f32 0.0, %v3229
        %v3231 = vpop.f32.mrb[0].mxu0
        %v3232 = vpop.f32.mrb[0].mxu0
        %v3233 = vadd.f32 0.0, %v3232
        %v3234 = vpop.f32.mrb[0].mxu0
        %3235 = vmatprep.mubr.bf16.mxu0 0
        %3236 = vmatmul.mubr.bf16.gmra.mrb[0].mxu0 %v3108
        %v3237 = vpop.f32.mrb[0].mxu0
        %v3238 = vadd.f32 0.0, %v3237
        %v3239 = vpop.f32.mrb[0].mxu0
        %v3240 = vpop.f32.mrb[0].mxu0
        %v3241 = vadd.f32 0.0, %v3240
        %v3242 = vpop.f32.mrb[0].mxu0
        %3243 = vmatprep.mubr.bf16.mxu0 0
        %3244 = vmatmul.mubr.bf16.gmra.mrb[0].mxu0 %v3111
        %v3245 = vpop.f32.mrb[0].mxu0
        %v3246 = vadd.f32 0.0, %v3245
        %v3247 = vpop.f32.mrb[0].mxu0
        %v3248 = vpop.f32.mrb[0].mxu0
        %v3249 = vadd.f32 0.0, %v3248
        %v3250 = vpop.f32.mrb[0].mxu0
        %3251 = vmatprep.mubr.bf16.mxu0 0
        %3252 = vmatmul.mubr.bf16.gmra.mrb[0].mxu0 %v3114
        %v3253 = vpop.f32.mrb[0].mxu0
        %v3254 = vadd.f32 0.0, %v3253
        %v3255 = vpop.f32.mrb[0].mxu0
        %v3256 = vpop.f32.mrb[0].mxu0
        %v3257 = vadd.f32 0.0, %v3256
        %v3258 = vpop.f32.mrb[0].mxu0
        %3259 = vmatprep.mubr.bf16.mxu0 0
        %3260 = vmatmul.mubr.bf16.gmra.mrb[0].mxu0 %v3117
        %v3261 = vpop.f32.mrb[0].mxu0
        %v3262 = vadd.f32 0.0, %v3261
        %v3263 = vpop.f32.mrb[0].mxu0
        %v3264 = vpop.f32.mrb[0].mxu0
        %v3265 = vadd.f32 0.0, %v3264
        %v3266 = vpop.f32.mrb[0].mxu0
        %3267 = vmatprep.mubr.bf16.mxu0 0
        %3268 = vmatmul.mubr.bf16.gmra.mrb[0].mxu0 %v3120
        %v3269 = vpop.f32.mrb[0].mxu0
        %v3270 = vadd.f32 0.0, %v3269
        %v3271 = vpop.f32.mrb[0].mxu0
        %v3272 = vpop.f32.mrb[0].mxu0
        %v3273 = vadd.f32 0.0, %v3272
        %v3274 = vpop.f32.mrb[0].mxu0
        %3275 = vmatprep.mubr.bf16.mxu0 0
        %3276 = vmatmul.mubr.bf16.gmra.mrb[0].mxu0 %v3123
        %v3277 = vpop.f32.mrb[0].mxu0
        %v3278 = vadd.f32 0.0, %v3277
        %v3279 = vpop.f32.mrb[0].mxu0
        %v3280 = vpop.f32.mrb[0].mxu0
        %v3281 = vadd.f32 0.0, %v3280
        %v3282 = vpop.f32.mrb[0].mxu0
        %3283 = vmatprep.mubr.bf16.mxu0 0
        %3284 = vmatmul.mubr.bf16.gmra.mrb[0].mxu0 %v3126
        %v3285 = vpop.f32.mrb[0].mxu0
        %v3286 = vadd.f32 0.0, %v3285
        %v3287 = vpop.f32.mrb[0].mxu0
        %v3288 = vpop.f32.mrb[0].mxu0
        %v3289 = vadd.f32 0.0, %v3288
        %v3290 = vpop.f32.mrb[0].mxu0
        %3291 = vdwg.mxu0
        %v3292 = vadd.f32 %v2566, %v3166
        %v3293 = vadd.f32 %v2567, %v3169
        %v3294 = vadd.f32 %v2568, %v3174
        %v3295 = vadd.f32 %v2569, %v3177
        %v3296 = vadd.f32 %v2570, %v3182
        %v3297 = vadd.f32 %v2571, %v3185
        %v3298 = vadd.f32 %v2572, %v3190
        %v3299 = vadd.f32 %v2573, %v3193
        %v3300 = vadd.f32 %v2574, %v3198
        %v3301 = vadd.f32 %v2575, %v3201
        %v3302 = vadd.f32 %v2576, %v3206
        %v3303 = vadd.f32 %v2577, %v3209
        %v3304 = vadd.f32 %v2578, %v3214
        %v3305 = vadd.f32 %v2579, %v3217
        %v3306 = vadd.f32 %v2580, %v3222
        %v3307 = vadd.f32 %v2581, %v3225
        %v3308 = vadd.f32 %v2582, %v3230
        %v3309 = vadd.f32 %v2583, %v3233
        %v3310 = vadd.f32 %v2584, %v3238
        %v3311 = vadd.f32 %v2585, %v3241
        %v3312 = vadd.f32 %v2586, %v3246
        %v3313 = vadd.f32 %v2587, %v3249
        %v3314 = vadd.f32 %v2588, %v3254
        %v3315 = vadd.f32 %v2589, %v3257
        %v3316 = vadd.f32 %v2590, %v3262
        %v3317 = vadd.f32 %v2591, %v3265
        %v3318 = vadd.f32 %v2592, %v3270
        %v3319 = vadd.f32 %v2593, %v3273
        %v3320 = vadd.f32 %v2594, %v3278
        %v3321 = vadd.f32 %v2595, %v3281
        %v3322 = vadd.f32 %v2596, %v3286
        %v3323 = vadd.f32 %v2597, %v3289
        %v3324 = vld [vmem:[%s673] sm:$0xe]
        %v3325 = vld [vmem:[%s673 + $0xc] sm:$0xe]
        %v3326 = vld [vmem:[%s673 + $0x18] sm:$0xe]
        %v3327 = vld [vmem:[%s673 + $0x24] sm:$0xe]
        %v3328 = vld [vmem:[%s673 + $0x30] sm:$0xe]
        %v3329 = vld [vmem:[%s673 + $0x3c] sm:$0xe]
        %v3330 = vld [vmem:[%s673 + $0x48] sm:$0xe]
        %v3331 = vld [vmem:[%s673 + $0x54] sm:$0xe]
        %v3332 = vld [vmem:[%s673 + $0x60] sm:$0xe]
        %v3333 = vld [vmem:[%s673 + $0x6c] sm:$0xe]
        %v3334 = vld [vmem:[%s673 + $0x78] sm:$0xe]
        %v3335 = vld [vmem:[%s673 + $0x84] sm:$0xe]
        %v3336 = vld [vmem:[%s673 + $0x90] sm:$0xe]
        %v3337 = vld [vmem:[%s673 + $0x9c] sm:$0xe]
        %v3338 = vld [vmem:[%s673 + $0xa8] sm:$0xe]
        %v3339 = vld [vmem:[%s673 + $0xb4] sm:$0xe]
        %v3388 = vrot.slane %v3324, 5
        %v3389 = vrot.slane %v3388, 4
        %v3390 = vrot.slane %v2599, 5
        %v3391 = vsel %vm1833, %v3389, %v3390
        %v3392 = vrot.slane %v3390, 4
        %v3393 = vrot.slane %v2600, 5
        %v3394 = vsel %vm1833, %v3392, %v3393
        %v3395 = vrot.slane %v3325, 5
        %v3396 = vrot.slane %v3395, 4
        %v3397 = vrot.slane %v2602, 5
        %v3398 = vsel %vm1833, %v3396, %v3397
        %v3399 = vrot.slane %v3397, 4
        %v3400 = vrot.slane %v2603, 5
        %v3401 = vsel %vm1833, %v3399, %v3400
        %v3402 = vrot.slane %v3326, 5
        %v3403 = vrot.slane %v3402, 4
        %v3404 = vrot.slane %v2605, 5
        %v3405 = vsel %vm1833, %v3403, %v3404
        %v3406 = vrot.slane %v3404, 4
        %v3407 = vrot.slane %v2606, 5
        %v3408 = vsel %vm1833, %v3406, %v3407
        %v3409 = vrot.slane %v3327, 5
        %v3410 = vrot.slane %v3409, 4
        %v3411 = vrot.slane %v2608, 5
        %v3412 = vsel %vm1833, %v3410, %v3411
        %v3413 = vrot.slane %v3411, 4
        %v3414 = vrot.slane %v2609, 5
        %v3415 = vsel %vm1833, %v3413, %v3414
        %v3416 = vrot.slane %v3328, 5
        %v3417 = vrot.slane %v3416, 4
        %v3418 = vrot.slane %v2611, 5
        %v3419 = vsel %vm1833, %v3417, %v3418
        %v3420 = vrot.slane %v3418, 4
        %v3421 = vrot.slane %v2612, 5
        %v3422 = vsel %vm1833, %v3420, %v3421
        %v3423 = vrot.slane %v3329, 5
        %v3424 = vrot.slane %v3423, 4
        %v3425 = vrot.slane %v2614, 5
        %v3426 = vsel %vm1833, %v3424, %v3425
        %v3427 = vrot.slane %v3425, 4
        %v3428 = vrot.slane %v2615, 5
        %v3429 = vsel %vm1833, %v3427, %v3428
        %v3430 = vrot.slane %v3330, 5
        %v3431 = vrot.slane %v3430, 4
        %v3432 = vrot.slane %v2617, 5
        %v3433 = vsel %vm1833, %v3431, %v3432
        %v3434 = vrot.slane %v3432, 4
        %v3435 = vrot.slane %v2618, 5
        %v3436 = vsel %vm1833, %v3434, %v3435
        %v3437 = vrot.slane %v3331, 5
        %v3438 = vrot.slane %v3437, 4
        %v3439 = vrot.slane %v2620, 5
        %v3440 = vsel %vm1833, %v3438, %v3439
        %v3441 = vrot.slane %v3439, 4
        %v3442 = vrot.slane %v2621, 5
        %v3443 = vsel %vm1833, %v3441, %v3442
        %v3444 = vrot.slane %v3332, 5
        %v3445 = vrot.slane %v3444, 4
        %v3446 = vrot.slane %v2623, 5
        %v3447 = vsel %vm1833, %v3445, %v3446
        %v3448 = vrot.slane %v3446, 4
        %v3449 = vrot.slane %v2624, 5
        %v3450 = vsel %vm1833, %v3448, %v3449
        %v3451 = vrot.slane %v3333, 5
        %v3452 = vrot.slane %v3451, 4
        %v3453 = vrot.slane %v2626, 5
        %v3454 = vsel %vm1833, %v3452, %v3453
        %v3455 = vrot.slane %v3453, 4
        %v3456 = vrot.slane %v2627, 5
        %v3457 = vsel %vm1833, %v3455, %v3456
        %v3458 = vrot.slane %v3334, 5
        %v3459 = vrot.slane %v3458, 4
        %v3460 = vrot.slane %v2629, 5
        %v3461 = vsel %vm1833, %v3459, %v3460
        %v3462 = vrot.slane %v3460, 4
        %v3463 = vrot.slane %v2630, 5
        %v3464 = vsel %vm1833, %v3462, %v3463
        %v3465 = vrot.slane %v3335, 5
        %v3466 = vrot.slane %v3465, 4
        %v3467 = vrot.slane %v2632, 5
        %v3468 = vsel %vm1833, %v3466, %v3467
        %v3469 = vrot.slane %v3467, 4
        %v3470 = vrot.slane %v2633, 5
        %v3471 = vsel %vm1833, %v3469, %v3470
        %v3472 = vrot.slane %v3336, 5
        %v3473 = vrot.slane %v3472, 4
        %v3474 = vrot.slane %v2635, 5
        %v3475 = vsel %vm1833, %v3473, %v3474
        %v3476 = vrot.slane %v3474, 4
        %v3477 = vrot.slane %v2636, 5
        %v3478 = vsel %vm1833, %v3476, %v3477
        %v3479 = vrot.slane %v3337, 5
        %v3480 = vrot.slane %v3479, 4
        %v3481 = vrot.slane %v2638, 5
        %v3482 = vsel %vm1833, %v3480, %v3481
        %v3483 = vrot.slane %v3481, 4
        %v3484 = vrot.slane %v2639, 5
        %v3485 = vsel %vm1833, %v3483, %v3484
        %v3486 = vrot.slane %v3338, 5
        %v3487 = vrot.slane %v3486, 4
        %v3488 = vrot.slane %v2641, 5
        %v3489 = vsel %vm1833, %v3487, %v3488
        %v3490 = vrot.slane %v3488, 4
        %v3491 = vrot.slane %v2642, 5
        %v3492 = vsel %vm1833, %v3490, %v3491
        %v3493 = vrot.slane %v3339, 5
        %v3494 = vrot.slane %v3493, 4
        %v3495 = vrot.slane %v2644, 5
        %v3496 = vsel %vm1833, %v3494, %v3495
        %v3497 = vrot.slane %v3495, 4
        %v3498 = vrot.slane %v2645, 5
        %v3499 = vsel %vm1833, %v3497, %v3498
        %s3500 = scalar_lea.vmem %s1, 10
        %v3501 = vld [vmem:[%s3500] sm:$0x3]
        %v3502 = vunpack.c.l.b16 %v3391
        %v3503 = vunpack.c.l.b16 %v3394
        %v3504 = vunpack.c.l.b16 %v3398
        %v3505 = vunpack.c.l.b16 %v3401
        %v3506 = vunpack.c.l.b16 %v3405
        %v3507 = vunpack.c.l.b16 %v3408
        %v3508 = vunpack.c.l.b16 %v3412
        %v3509 = vunpack.c.l.b16 %v3415
        %v3510 = vunpack.c.l.b16 %v3419
        %v3511 = vunpack.c.l.b16 %v3422
        %v3512 = vunpack.c.l.b16 %v3426
        %v3513 = vunpack.c.l.b16 %v3429
        %v3514 = vunpack.c.l.b16 %v3433
        %v3515 = vunpack.c.l.b16 %v3436
        %v3516 = vunpack.c.l.b16 %v3440
        %v3517 = vunpack.c.l.b16 %v3443
        %v3518 = vunpack.c.l.b16 %v3447
        %v3519 = vunpack.c.l.b16 %v3450
        %v3520 = vunpack.c.l.b16 %v3454
        %v3521 = vunpack.c.l.b16 %v3457
        %v3522 = vunpack.c.l.b16 %v3461
        %v3523 = vunpack.c.l.b16 %v3464
        %v3524 = vunpack.c.l.b16 %v3468
        %v3525 = vunpack.c.l.b16 %v3471
        %v3526 = vunpack.c.l.b16 %v3475
        %v3527 = vunpack.c.l.b16 %v3478
        %v3528 = vunpack.c.l.b16 %v3482
        %v3529 = vunpack.c.l.b16 %v3485
        %v3530 = vunpack.c.l.b16 %v3489
        %v3531 = vunpack.c.l.b16 %v3492
        %v3532 = vunpack.c.l.b16 %v3496
        %v3533 = vunpack.c.l.b16 %v3499
        %v3534 = vpack.c.b16 %v3503, %v3502
        %v3535 = vpack.c.b16 %v3505, %v3504
        %v3536 = vpack.c.b16 %v3507, %v3506
        %v3537 = vpack.c.b16 %v3509, %v3508
        %v3538 = vpack.c.b16 %v3511, %v3510
        %v3539 = vpack.c.b16 %v3513, %v3512
        %v3540 = vpack.c.b16 %v3515, %v3514
        %v3541 = vpack.c.b16 %v3517, %v3516
        %v3542 = vpack.c.b16 %v3519, %v3518
        %v3543 = vpack.c.b16 %v3521, %v3520
        %v3544 = vpack.c.b16 %v3523, %v3522
        %v3545 = vpack.c.b16 %v3525, %v3524
        %v3546 = vpack.c.b16 %v3527, %v3526
        %v3547 = vpack.c.b16 %v3529, %v3528
        %v3548 = vpack.c.b16 %v3531, %v3530
        %v3549 = vpack.c.b16 %v3533, %v3532
        %v3551 = vsel %vm1274, %v3534, 0
        %v3554 = vsel %vm1274, %v3535, 0
        %v3557 = vsel %vm1274, %v3536, 0
        %v3560 = vsel %vm1274, %v3537, 0
        %v3563 = vsel %vm1274, %v3538, 0
        %v3566 = vsel %vm1274, %v3539, 0
        %v3569 = vsel %vm1274, %v3540, 0
        %v3572 = vsel %vm1274, %v3541, 0
        %v3575 = vsel %vm1274, %v3542, 0
        %v3578 = vsel %vm1274, %v3543, 0
        %v3581 = vsel %vm1274, %v3544, 0
        %v3584 = vsel %vm1274, %v3545, 0
        %v3587 = vsel %vm1274, %v3546, 0
        %v3590 = vsel %vm1274, %v3547, 0
        %v3593 = vsel %vm1274, %v3548, 0
        %v3596 = vsel %vm1274, %v3549, 0
        %v3599 = vand.u32 %v3501, %v1326
        %3601 = vmatprep.subr.bf16.mxu0 0
        %3602 = vmatpush1.bf16.msra.mxu0 %v3599
        %3603 = vmatprep.subr.bf16.mxu0 0
        %3604 = vmatpush1.bf16.msra.mxu0 0
        %3605 = vmatprep.subr.bf16.mxu0 0
        %3606 = vmatpush1.bf16.msra.mxu0 0
        %3607 = vmatprep.subr.bf16.mxu0 0
        %3608 = vmatpush1.bf16.msra.mxu0 0
        %3609 = vmatprep.subr.bf16.mxu0 0
        %3610 = vmatpush1.bf16.msra.mxu0 0
        %3611 = vmatprep.subr.bf16.mxu0 0
        %3612 = vmatpush1.bf16.msra.mxu0 0
        %3613 = vmatprep.subr.bf16.mxu0 0
        %3614 = vmatpush1.bf16.msra.mxu0 0
        %3615 = vmatprep.subr.bf16.mxu0 0
        %3616 = vmatpush1.bf16.msra.mxu0 0
        %3617 = vmatprep.subr.bf16.mxu0 0
        %3618 = vmatpush1.bf16.msra.mxu0 0
        %3619 = vmatprep.subr.bf16.mxu0 0
        %3620 = vmatpush1.bf16.msra.mxu0 0
        %3621 = vmatprep.subr.bf16.mxu0 0
        %3622 = vmatpush1.bf16.msra.mxu0 0
        %3623 = vmatprep.subr.bf16.mxu0 0
        %3624 = vmatpush1.bf16.msra.mxu0 0
        %3625 = vmatprep.subr.bf16.mxu0 0
        %3626 = vmatpush1.bf16.msra.mxu0 0
        %3627 = vmatprep.subr.bf16.mxu0 0
        %3628 = vmatpush1.bf16.msra.mxu0 0
        %3629 = vmatprep.subr.bf16.mxu0 0
        %3630 = vmatpush1.bf16.msra.mxu0 0
        %3631 = vmatprep.subr.bf16.mxu0 0
        %3632 = vmatpush1.bf16.msra.mxu0 0
        %3633 = vmatprep.mubr.bf16.mxu0 0
        %3634 = vmatmul.mubr.bf16.gmra.mrb[0].mxu0 %v3551
        %v3635 = vpop.f32.mrb[0].mxu0
        %v3636 = vadd.f32 0.0, %v3635
        %v3637 = vpop.f32.mrb[0].mxu0
        %v3638 = vpop.f32.mrb[0].mxu0
        %v3639 = vadd.f32 0.0, %v3638
        %v3640 = vpop.f32.mrb[0].mxu0
        %3641 = vmatprep.mubr.bf16.mxu0 0
        %3642 = vmatmul.mubr.bf16.gmra.mrb[0].mxu0 %v3554
        %v3643 = vpop.f32.mrb[0].mxu0
        %v3644 = vadd.f32 0.0, %v3643
        %v3645 = vpop.f32.mrb[0].mxu0
        %v3646 = vpop.f32.mrb[0].mxu0
        %v3647 = vadd.f32 0.0, %v3646
        %v3648 = vpop.f32.mrb[0].mxu0
        %3649 = vmatprep.mubr.bf16.mxu0 0
        %3650 = vmatmul.mubr.bf16.gmra.mrb[0].mxu0 %v3557
        %v3651 = vpop.f32.mrb[0].mxu0
        %v3652 = vadd.f32 0.0, %v3651
        %v3653 = vpop.f32.mrb[0].mxu0
        %v3654 = vpop.f32.mrb[0].mxu0
        %v3655 = vadd.f32 0.0, %v3654
        %v3656 = vpop.f32.mrb[0].mxu0
        %3657 = vmatprep.mubr.bf16.mxu0 0
        %3658 = vmatmul.mubr.bf16.gmra.mrb[0].mxu0 %v3560
        %v3659 = vpop.f32.mrb[0].mxu0
        %v3660 = vadd.f32 0.0, %v3659
        %v3661 = vpop.f32.mrb[0].mxu0
        %v3662 = vpop.f32.mrb[0].mxu0
        %v3663 = vadd.f32 0.0, %v3662
        %v3664 = vpop.f32.mrb[0].mxu0
        %3665 = vmatprep.mubr.bf16.mxu0 0
        %3666 = vmatmul.mubr.bf16.gmra.mrb[0].mxu0 %v3563
        %v3667 = vpop.f32.mrb[0].mxu0
        %v3668 = vadd.f32 0.0, %v3667
        %v3669 = vpop.f32.mrb[0].mxu0
        %v3670 = vpop.f32.mrb[0].mxu0
        %v3671 = vadd.f32 0.0, %v3670
        %v3672 = vpop.f32.mrb[0].mxu0
        %3673 = vmatprep.mubr.bf16.mxu0 0
        %3674 = vmatmul.mubr.bf16.gmra.mrb[0].mxu0 %v3566
        %v3675 = vpop.f32.mrb[0].mxu0
        %v3676 = vadd.f32 0.0, %v3675
        %v3677 = vpop.f32.mrb[0].mxu0
        %v3678 = vpop.f32.mrb[0].mxu0
        %v3679 = vadd.f32 0.0, %v3678
        %v3680 = vpop.f32.mrb[0].mxu0
        %3681 = vmatprep.mubr.bf16.mxu0 0
        %3682 = vmatmul.mubr.bf16.gmra.mrb[0].mxu0 %v3569
        %v3683 = vpop.f32.mrb[0].mxu0
        %v3684 = vadd.f32 0.0, %v3683
        %v3685 = vpop.f32.mrb[0].mxu0
        %v3686 = vpop.f32.mrb[0].mxu0
        %v3687 = vadd.f32 0.0, %v3686
        %v3688 = vpop.f32.mrb[0].mxu0
        %3689 = vmatprep.mubr.bf16.mxu0 0
        %3690 = vmatmul.mubr.bf16.gmra.mrb[0].mxu0 %v3572
        %v3691 = vpop.f32.mrb[0].mxu0
        %v3692 = vadd.f32 0.0, %v3691
        %v3693 = vpop.f32.mrb[0].mxu0
        %v3694 = vpop.f32.mrb[0].mxu0
        %v3695 = vadd.f32 0.0, %v3694
        %v3696 = vpop.f32.mrb[0].mxu0
        %3697 = vmatprep.mubr.bf16.mxu0 0
        %3698 = vmatmul.mubr.bf16.gmra.mrb[0].mxu0 %v3575
        %v3699 = vpop.f32.mrb[0].mxu0
        %v3700 = vadd.f32 0.0, %v3699
        %v3701 = vpop.f32.mrb[0].mxu0
        %v3702 = vpop.f32.mrb[0].mxu0
        %v3703 = vadd.f32 0.0, %v3702
        %v3704 = vpop.f32.mrb[0].mxu0
        %3705 = vmatprep.mubr.bf16.mxu0 0
        %3706 = vmatmul.mubr.bf16.gmra.mrb[0].mxu0 %v3578
        %v3707 = vpop.f32.mrb[0].mxu0
        %v3708 = vadd.f32 0.0, %v3707
        %v3709 = vpop.f32.mrb[0].mxu0
        %v3710 = vpop.f32.mrb[0].mxu0
        %v3711 = vadd.f32 0.0, %v3710
        %v3712 = vpop.f32.mrb[0].mxu0
        %3713 = vmatprep.mubr.bf16.mxu0 0
        %3714 = vmatmul.mubr.bf16.gmra.mrb[0].mxu0 %v3581
        %v3715 = vpop.f32.mrb[0].mxu0
        %v3716 = vadd.f32 0.0, %v3715
        %v3717 = vpop.f32.mrb[0].mxu0
        %v3718 = vpop.f32.mrb[0].mxu0
        %v3719 = vadd.f32 0.0, %v3718
        %v3720 = vpop.f32.mrb[0].mxu0
        %3721 = vmatprep.mubr.bf16.mxu0 0
        %3722 = vmatmul.mubr.bf16.gmra.mrb[0].mxu0 %v3584
        %v3723 = vpop.f32.mrb[0].mxu0
        %v3724 = vadd.f32 0.0, %v3723
        %v3725 = vpop.f32.mrb[0].mxu0
        %v3726 = vpop.f32.mrb[0].mxu0
        %v3727 = vadd.f32 0.0, %v3726
        %v3728 = vpop.f32.mrb[0].mxu0
        %3729 = vmatprep.mubr.bf16.mxu0 0
        %3730 = vmatmul.mubr.bf16.gmra.mrb[0].mxu0 %v3587
        %v3731 = vpop.f32.mrb[0].mxu0
        %v3732 = vadd.f32 0.0, %v3731
        %v3733 = vpop.f32.mrb[0].mxu0
        %v3734 = vpop.f32.mrb[0].mxu0
        %v3735 = vadd.f32 0.0, %v3734
        %v3736 = vpop.f32.mrb[0].mxu0
        %3737 = vmatprep.mubr.bf16.mxu0 0
        %3738 = vmatmul.mubr.bf16.gmra.mrb[0].mxu0 %v3590
        %v3739 = vpop.f32.mrb[0].mxu0
        %v3740 = vadd.f32 0.0, %v3739
        %v3741 = vpop.f32.mrb[0].mxu0
        %v3742 = vpop.f32.mrb[0].mxu0
        %v3743 = vadd.f32 0.0, %v3742
        %v3744 = vpop.f32.mrb[0].mxu0
        %3745 = vmatprep.mubr.bf16.mxu0 0
        %3746 = vmatmul.mubr.bf16.gmra.mrb[0].mxu0 %v3593
        %v3747 = vpop.f32.mrb[0].mxu0
        %v3748 = vadd.f32 0.0, %v3747
        %v3749 = vpop.f32.mrb[0].mxu0
        %v3750 = vpop.f32.mrb[0].mxu0
        %v3751 = vadd.f32 0.0, %v3750
        %v3752 = vpop.f32.mrb[0].mxu0
        %3753 = vmatprep.mubr.bf16.mxu0 0
        %3754 = vmatmul.mubr.bf16.gmra.mrb[0].mxu0 %v3596
        %v3755 = vpop.f32.mrb[0].mxu0
        %v3756 = vadd.f32 0.0, %v3755
        %v3757 = vpop.f32.mrb[0].mxu0
        %v3758 = vpop.f32.mrb[0].mxu0
        %v3759 = vadd.f32 0.0, %v3758
        %v3760 = vpop.f32.mrb[0].mxu0
        %3761 = vdwg.mxu0
        %v3762 = vadd.f32 %v3292, %v3636
        %v3763 = vadd.f32 %v3293, %v3639
        %v3764 = vadd.f32 %v3294, %v3644
        %v3765 = vadd.f32 %v3295, %v3647
        %v3766 = vadd.f32 %v3296, %v3652
        %v3767 = vadd.f32 %v3297, %v3655
        %v3768 = vadd.f32 %v3298, %v3660
        %v3769 = vadd.f32 %v3299, %v3663
        %v3770 = vadd.f32 %v3300, %v3668
        %v3771 = vadd.f32 %v3301, %v3671
        %v3772 = vadd.f32 %v3302, %v3676
        %v3773 = vadd.f32 %v3303, %v3679
        %v3774 = vadd.f32 %v3304, %v3684
        %v3775 = vadd.f32 %v3305, %v3687
        %v3776 = vadd.f32 %v3306, %v3692
        %v3777 = vadd.f32 %v3307, %v3695
        %v3778 = vadd.f32 %v3308, %v3700
        %v3779 = vadd.f32 %v3309, %v3703
        %v3780 = vadd.f32 %v3310, %v3708
        %v3781 = vadd.f32 %v3311, %v3711
        %v3782 = vadd.f32 %v3312, %v3716
        %v3783 = vadd.f32 %v3313, %v3719
        %v3784 = vadd.f32 %v3314, %v3724
        %v3785 = vadd.f32 %v3315, %v3727
        %v3786 = vadd.f32 %v3316, %v3732
        %v3787 = vadd.f32 %v3317, %v3735
        %v3788 = vadd.f32 %v3318, %v3740
        %v3789 = vadd.f32 %v3319, %v3743
        %v3790 = vadd.f32 %v3320, %v3748
        %v3791 = vadd.f32 %v3321, %v3751
        %v3792 = vadd.f32 %v3322, %v3756
        %v3793 = vadd.f32 %v3323, %v3759
        %s3794 = scalar_lea.vmem [#allocation2], 24
        %v3795 = vld [vmem:[%s3794] sm:$0xf]
        %v3796 = vld [vmem:[%s3794 + $0x4] sm:$0xf]
        %v3797 = vld [vmem:[%s3794 + $0xc] sm:$0xf]
        %v3798 = vld [vmem:[%s3794 + $0x10] sm:$0xf]
        %v3799 = vld [vmem:[%s3794 + $0x18] sm:$0xf]
        %v3800 = vld [vmem:[%s3794 + $0x1c] sm:$0xf]
        %v3801 = vld [vmem:[%s3794 + $0x24] sm:$0xf]
        %v3802 = vld [vmem:[%s3794 + $0x28] sm:$0xf]
        %v3803 = vld [vmem:[%s3794 + $0x30] sm:$0xf]
        %v3804 = vld [vmem:[%s3794 + $0x34] sm:$0xf]
        %v3805 = vld [vmem:[%s3794 + $0x3c] sm:$0xf]
        %v3806 = vld [vmem:[%s3794 + $0x40] sm:$0xf]
        %v3807 = vld [vmem:[%s3794 + $0x48] sm:$0xf]
        %v3808 = vld [vmem:[%s3794 + $0x4c] sm:$0xf]
        %v3809 = vld [vmem:[%s3794 + $0x54] sm:$0xf]
        %v3810 = vld [vmem:[%s3794 + $0x58] sm:$0xf]
        %v3811 = vld [vmem:[%s3794 + $0x60] sm:$0xf]
        %v3812 = vld [vmem:[%s3794 + $0x64] sm:$0xf]
        %v3813 = vld [vmem:[%s3794 + $0x6c] sm:$0xf]
        %v3814 = vld [vmem:[%s3794 + $0x70] sm:$0xf]
        %v3815 = vld [vmem:[%s3794 + $0x78] sm:$0xf]
        %v3816 = vld [vmem:[%s3794 + $0x7c] sm:$0xf]
        %v3817 = vld [vmem:[%s3794 + $0x84] sm:$0xf]
        %v3818 = vld [vmem:[%s3794 + $0x88] sm:$0xf]
        %v3819 = vld [vmem:[%s3794 + $0x90] sm:$0xf]
        %v3820 = vld [vmem:[%s3794 + $0x94] sm:$0xf]
        %v3821 = vld [vmem:[%s3794 + $0x9c] sm:$0xf]
        %v3822 = vld [vmem:[%s3794 + $0xa0] sm:$0xf]
        %v3823 = vld [vmem:[%s3794 + $0xa8] sm:$0xf]
        %v3824 = vld [vmem:[%s3794 + $0xac] sm:$0xf]
        %v3825 = vld [vmem:[%s3794 + $0xb4] sm:$0xf]
        %v3826 = vld [vmem:[%s3794 + $0xb8] sm:$0xf]
        %s3827 = scalar_lea.vmem %s1, 12
        %v3828 = vld [vmem:[%s3827] sm:$0x3]
        %v3861 = vunpack.c.l.b16 %v3795
        %v3862 = vunpack.c.l.b16 %v3796
        %v3863 = vunpack.c.l.b16 %v3797
        %v3864 = vunpack.c.l.b16 %v3798
        %v3865 = vunpack.c.l.b16 %v3799
        %v3866 = vunpack.c.l.b16 %v3800
        %v3867 = vunpack.c.l.b16 %v3801
        %v3868 = vunpack.c.l.b16 %v3802
        %v3869 = vunpack.c.l.b16 %v3803
        %v3870 = vunpack.c.l.b16 %v3804
        %v3871 = vunpack.c.l.b16 %v3805
        %v3872 = vunpack.c.l.b16 %v3806
        %v3873 = vunpack.c.l.b16 %v3807
        %v3874 = vunpack.c.l.b16 %v3808
        %v3875 = vunpack.c.l.b16 %v3809
        %v3876 = vunpack.c.l.b16 %v3810
        %v3877 = vunpack.c.l.b16 %v3811
        %v3878 = vunpack.c.l.b16 %v3812
        %v3879 = vunpack.c.l.b16 %v3813
        %v3880 = vunpack.c.l.b16 %v3814
        %v3881 = vunpack.c.l.b16 %v3815
        %v3882 = vunpack.c.l.b16 %v3816
        %v3883 = vunpack.c.l.b16 %v3817
        %v3884 = vunpack.c.l.b16 %v3818
        %v3885 = vunpack.c.l.b16 %v3819
        %v3886 = vunpack.c.l.b16 %v3820
        %v3887 = vunpack.c.l.b16 %v3821
        %v3888 = vunpack.c.l.b16 %v3822
        %v3889 = vunpack.c.l.b16 %v3823
        %v3890 = vunpack.c.l.b16 %v3824
        %v3891 = vunpack.c.l.b16 %v3825
        %v3892 = vunpack.c.l.b16 %v3826
        %v3893 = vpack.c.b16 %v3862, %v3861
        %v3894 = vpack.c.b16 %v3864, %v3863
        %v3895 = vpack.c.b16 %v3866, %v3865
        %v3896 = vpack.c.b16 %v3868, %v3867
        %v3897 = vpack.c.b16 %v3870, %v3869
        %v3898 = vpack.c.b16 %v3872, %v3871
        %v3899 = vpack.c.b16 %v3874, %v3873
        %v3900 = vpack.c.b16 %v3876, %v3875
        %v3901 = vpack.c.b16 %v3878, %v3877
        %v3902 = vpack.c.b16 %v3880, %v3879
        %v3903 = vpack.c.b16 %v3882, %v3881
        %v3904 = vpack.c.b16 %v3884, %v3883
        %v3905 = vpack.c.b16 %v3886, %v3885
        %v3906 = vpack.c.b16 %v3888, %v3887
        %v3907 = vpack.c.b16 %v3890, %v3889
        %v3908 = vpack.c.b16 %v3892, %v3891
        %v3910 = vsel %vm1274, %v3893, 0
        %v3913 = vsel %vm1274, %v3894, 0
        %v3916 = vsel %vm1274, %v3895, 0
        %v3919 = vsel %vm1274, %v3896, 0
        %v3922 = vsel %vm1274, %v3897, 0
        %v3925 = vsel %vm1274, %v3898, 0
        %v3928 = vsel %vm1274, %v3899, 0
        %v3931 = vsel %vm1274, %v3900, 0
        %v3934 = vsel %vm1274, %v3901, 0
        %v3937 = vsel %vm1274, %v3902, 0
        %v3940 = vsel %vm1274, %v3903, 0
        %v3943 = vsel %vm1274, %v3904, 0
        %v3946 = vsel %vm1274, %v3905, 0
        %v3949 = vsel %vm1274, %v3906, 0
        %v3952 = vsel %vm1274, %v3907, 0
        %v3955 = vsel %vm1274, %v3908, 0
        %v3958 = vand.u32 %v3828, %v1326
        %3960 = vmatprep.subr.bf16.mxu0 0
        %3961 = vmatpush1.bf16.msra.mxu0 %v3958
        %3962 = vmatprep.subr.bf16.mxu0 0
        %3963 = vmatpush1.bf16.msra.mxu0 0
        %3964 = vmatprep.subr.bf16.mxu0 0
        %3965 = vmatpush1.bf16.msra.mxu0 0
        %3966 = vmatprep.subr.bf16.mxu0 0
        %3967 = vmatpush1.bf16.msra.mxu0 0
        %3968 = vmatprep.subr.bf16.mxu0 0
        %3969 = vmatpush1.bf16.msra.mxu0 0
        %3970 = vmatprep.subr.bf16.mxu0 0
        %3971 = vmatpush1.bf16.msra.mxu0 0
        %3972 = vmatprep.subr.bf16.mxu0 0
        %3973 = vmatpush1.bf16.msra.mxu0 0
        %3974 = vmatprep.subr.bf16.mxu0 0
        %3975 = vmatpush1.bf16.msra.mxu0 0
        %3976 = vmatprep.subr.bf16.mxu0 0
        %3977 = vmatpush1.bf16.msra.mxu0 0
        %3978 = vmatprep.subr.bf16.mxu0 0
        %3979 = vmatpush1.bf16.msra.mxu0 0
        %3980 = vmatprep.subr.bf16.mxu0 0
        %3981 = vmatpush1.bf16.msra.mxu0 0
        %3982 = vmatprep.subr.bf16.mxu0 0
        %3983 = vmatpush1.bf16.msra.mxu0 0
        %3984 = vmatprep.subr.bf16.mxu0 0
        %3985 = vmatpush1.bf16.msra.mxu0 0
        %3986 = vmatprep.subr.bf16.mxu0 0
        %3987 = vmatpush1.bf16.msra.mxu0 0
        %3988 = vmatprep.subr.bf16.mxu0 0
        %3989 = vmatpush1.bf16.msra.mxu0 0
        %3990 = vmatprep.subr.bf16.mxu0 0
        %3991 = vmatpush1.bf16.msra.mxu0 0
        %3992 = vmatprep.mubr.bf16.mxu0 0
        %3993 = vmatmul.mubr.bf16.gmra.mrb[0].mxu0 %v3910
        %v3994 = vpop.f32.mrb[0].mxu0
        %v3995 = vadd.f32 0.0, %v3994
        %v3996 = vpop.f32.mrb[0].mxu0
        %v3997 = vpop.f32.mrb[0].mxu0
        %v3998 = vadd.f32 0.0, %v3997
        %v3999 = vpop.f32.mrb[0].mxu0
        %4000 = vmatprep.mubr.bf16.mxu0 0
        %4001 = vmatmul.mubr.bf16.gmra.mrb[0].mxu0 %v3913
        %v4002 = vpop.f32.mrb[0].mxu0
        %v4003 = vadd.f32 0.0, %v4002
        %v4004 = vpop.f32.mrb[0].mxu0
        %v4005 = vpop.f32.mrb[0].mxu0
        %v4006 = vadd.f32 0.0, %v4005
        %v4007 = vpop.f32.mrb[0].mxu0
        %4008 = vmatprep.mubr.bf16.mxu0 0
        %4009 = vmatmul.mubr.bf16.gmra.mrb[0].mxu0 %v3916
        %v4010 = vpop.f32.mrb[0].mxu0
        %v4011 = vadd.f32 0.0, %v4010
        %v4012 = vpop.f32.mrb[0].mxu0
        %v4013 = vpop.f32.mrb[0].mxu0
        %v4014 = vadd.f32 0.0, %v4013
        %v4015 = vpop.f32.mrb[0].mxu0
        %4016 = vmatprep.mubr.bf16.mxu0 0
        %4017 = vmatmul.mubr.bf16.gmra.mrb[0].mxu0 %v3919
        %v4018 = vpop.f32.mrb[0].mxu0
        %v4019 = vadd.f32 0.0, %v4018
        %v4020 = vpop.f32.mrb[0].mxu0
        %v4021 = vpop.f32.mrb[0].mxu0
        %v4022 = vadd.f32 0.0, %v4021
        %v4023 = vpop.f32.mrb[0].mxu0
        %4024 = vmatprep.mubr.bf16.mxu0 0
        %4025 = vmatmul.mubr.bf16.gmra.mrb[0].mxu0 %v3922
        %v4026 = vpop.f32.mrb[0].mxu0
        %v4027 = vadd.f32 0.0, %v4026
        %v4028 = vpop.f32.mrb[0].mxu0
        %v4029 = vpop.f32.mrb[0].mxu0
        %v4030 = vadd.f32 0.0, %v4029
        %v4031 = vpop.f32.mrb[0].mxu0
        %4032 = vmatprep.mubr.bf16.mxu0 0
        %4033 = vmatmul.mubr.bf16.gmra.mrb[0].mxu0 %v3925
        %v4034 = vpop.f32.mrb[0].mxu0
        %v4035 = vadd.f32 0.0, %v4034
        %v4036 = vpop.f32.mrb[0].mxu0
        %v4037 = vpop.f32.mrb[0].mxu0
        %v4038 = vadd.f32 0.0, %v4037
        %v4039 = vpop.f32.mrb[0].mxu0
        %4040 = vmatprep.mubr.bf16.mxu0 0
        %4041 = vmatmul.mubr.bf16.gmra.mrb[0].mxu0 %v3928
        %v4042 = vpop.f32.mrb[0].mxu0
        %v4043 = vadd.f32 0.0, %v4042
        %v4044 = vpop.f32.mrb[0].mxu0
        %v4045 = vpop.f32.mrb[0].mxu0
        %v4046 = vadd.f32 0.0, %v4045
        %v4047 = vpop.f32.mrb[0].mxu0
        %4048 = vmatprep.mubr.bf16.mxu0 0
        %4049 = vmatmul.mubr.bf16.gmra.mrb[0].mxu0 %v3931
        %v4050 = vpop.f32.mrb[0].mxu0
        %v4051 = vadd.f32 0.0, %v4050
        %v4052 = vpop.f32.mrb[0].mxu0
        %v4053 = vpop.f32.mrb[0].mxu0
        %v4054 = vadd.f32 0.0, %v4053
        %v4055 = vpop.f32.mrb[0].mxu0
        %4056 = vmatprep.mubr.bf16.mxu0 0
        %4057 = vmatmul.mubr.bf16.gmra.mrb[0].mxu0 %v3934
        %v4058 = vpop.f32.mrb[0].mxu0
        %v4059 = vadd.f32 0.0, %v4058
        %v4060 = vpop.f32.mrb[0].mxu0
        %v4061 = vpop.f32.mrb[0].mxu0
        %v4062 = vadd.f32 0.0, %v4061
        %v4063 = vpop.f32.mrb[0].mxu0
        %4064 = vmatprep.mubr.bf16.mxu0 0
        %4065 = vmatmul.mubr.bf16.gmra.mrb[0].mxu0 %v3937
        %v4066 = vpop.f32.mrb[0].mxu0
        %v4067 = vadd.f32 0.0, %v4066
        %v4068 = vpop.f32.mrb[0].mxu0
        %v4069 = vpop.f32.mrb[0].mxu0
        %v4070 = vadd.f32 0.0, %v4069
        %v4071 = vpop.f32.mrb[0].mxu0
        %4072 = vmatprep.mubr.bf16.mxu0 0
        %4073 = vmatmul.mubr.bf16.gmra.mrb[0].mxu0 %v3940
        %v4074 = vpop.f32.mrb[0].mxu0
        %v4075 = vadd.f32 0.0, %v4074
        %v4076 = vpop.f32.mrb[0].mxu0
        %v4077 = vpop.f32.mrb[0].mxu0
        %v4078 = vadd.f32 0.0, %v4077
        %v4079 = vpop.f32.mrb[0].mxu0
        %4080 = vmatprep.mubr.bf16.mxu0 0
        %4081 = vmatmul.mubr.bf16.gmra.mrb[0].mxu0 %v3943
        %v4082 = vpop.f32.mrb[0].mxu0
        %v4083 = vadd.f32 0.0, %v4082
        %v4084 = vpop.f32.mrb[0].mxu0
        %v4085 = vpop.f32.mrb[0].mxu0
        %v4086 = vadd.f32 0.0, %v4085
        %v4087 = vpop.f32.mrb[0].mxu0
        %4088 = vmatprep.mubr.bf16.mxu0 0
        %4089 = vmatmul.mubr.bf16.gmra.mrb[0].mxu0 %v3946
        %v4090 = vpop.f32.mrb[0].mxu0
        %v4091 = vadd.f32 0.0, %v4090
        %v4092 = vpop.f32.mrb[0].mxu0
        %v4093 = vpop.f32.mrb[0].mxu0
        %v4094 = vadd.f32 0.0, %v4093
        %v4095 = vpop.f32.mrb[0].mxu0
        %4096 = vmatprep.mubr.bf16.mxu0 0
        %4097 = vmatmul.mubr.bf16.gmra.mrb[0].mxu0 %v3949
        %v4098 = vpop.f32.mrb[0].mxu0
        %v4099 = vadd.f32 0.0, %v4098
        %v4100 = vpop.f32.mrb[0].mxu0
        %v4101 = vpop.f32.mrb[0].mxu0
        %v4102 = vadd.f32 0.0, %v4101
        %v4103 = vpop.f32.mrb[0].mxu0
        %4104 = vmatprep.mubr.bf16.mxu0 0
        %4105 = vmatmul.mubr.bf16.gmra.mrb[0].mxu0 %v3952
        %v4106 = vpop.f32.mrb[0].mxu0
        %v4107 = vadd.f32 0.0, %v4106
        %v4108 = vpop.f32.mrb[0].mxu0
        %v4109 = vpop.f32.mrb[0].mxu0
        %v4110 = vadd.f32 0.0, %v4109
        %v4111 = vpop.f32.mrb[0].mxu0
        %4112 = vmatprep.mubr.bf16.mxu0 0
        %4113 = vmatmul.mubr.bf16.gmra.mrb[0].mxu0 %v3955
        %v4114 = vpop.f32.mrb[0].mxu0
        %v4115 = vadd.f32 0.0, %v4114
        %v4116 = vpop.f32.mrb[0].mxu0
        %v4117 = vpop.f32.mrb[0].mxu0
        %v4118 = vadd.f32 0.0, %v4117
        %v4119 = vpop.f32.mrb[0].mxu0
        %4120 = vdwg.mxu0
        %v4121 = vadd.f32 %v3762, %v3995
        %v4122 = vadd.f32 %v3763, %v3998
        %v4123 = vadd.f32 %v3764, %v4003
        %v4124 = vadd.f32 %v3765, %v4006
        %v4125 = vadd.f32 %v3766, %v4011
        %v4126 = vadd.f32 %v3767, %v4014
        %v4127 = vadd.f32 %v3768, %v4019
        %v4128 = vadd.f32 %v3769, %v4022
        %v4129 = vadd.f32 %v3770, %v4027
        %v4130 = vadd.f32 %v3771, %v4030
        %v4131 = vadd.f32 %v3772, %v4035
        %v4132 = vadd.f32 %v3773, %v4038
        %v4133 = vadd.f32 %v3774, %v4043
        %v4134 = vadd.f32 %v3775, %v4046
        %v4135 = vadd.f32 %v3776, %v4051
        %v4136 = vadd.f32 %v3777, %v4054
        %v4137 = vadd.f32 %v3778, %v4059
        %v4138 = vadd.f32 %v3779, %v4062
        %v4139 = vadd.f32 %v3780, %v4067
        %v4140 = vadd.f32 %v3781, %v4070
        %v4141 = vadd.f32 %v3782, %v4075
        %v4142 = vadd.f32 %v3783, %v4078
        %v4143 = vadd.f32 %v3784, %v4083
        %v4144 = vadd.f32 %v3785, %v4086
        %v4145 = vadd.f32 %v3786, %v4091
        %v4146 = vadd.f32 %v3787, %v4094
        %v4147 = vadd.f32 %v3788, %v4099
        %v4148 = vadd.f32 %v3789, %v4102
        %v4149 = vadd.f32 %v3790, %v4107
        %v4150 = vadd.f32 %v3791, %v4110
        %v4151 = vadd.f32 %v3792, %v4115
        %v4152 = vadd.f32 %v3793, %v4118
        %v4153 = vld [vmem:[%s3794] sm:$0xf]
        %v4154 = vld [vmem:[%s3794 + $0x4] sm:$0xf]
        %v4155 = vld [vmem:[%s3794 + $0x8] sm:$0x1]
        %v4156 = vld [vmem:[%s3794 + $0xc] sm:$0xf]
        %v4157 = vld [vmem:[%s3794 + $0x10] sm:$0xf]
        %v4158 = vld [vmem:[%s3794 + $0x14] sm:$0x1]
        %v4159 = vld [vmem:[%s3794 + $0x18] sm:$0xf]
        %v4160 = vld [vmem:[%s3794 + $0x1c] sm:$0xf]
        %v4161 = vld [vmem:[%s3794 + $0x20] sm:$0x1]
        %v4162 = vld [vmem:[%s3794 + $0x24] sm:$0xf]
        %v4163 = vld [vmem:[%s3794 + $0x28] sm:$0xf]
        %v4164 = vld [vmem:[%s3794 + $0x2c] sm:$0x1]
        %v4165 = vld [vmem:[%s3794 + $0x30] sm:$0xf]
        %v4166 = vld [vmem:[%s3794 + $0x34] sm:$0xf]
        %v4167 = vld [vmem:[%s3794 + $0x38] sm:$0x1]
        %v4168 = vld [vmem:[%s3794 + $0x3c] sm:$0xf]
        %v4169 = vld [vmem:[%s3794 + $0x40] sm:$0xf]
        %v4170 = vld [vmem:[%s3794 + $0x44] sm:$0x1]
        %v4171 = vld [vmem:[%s3794 + $0x48] sm:$0xf]
        %v4172 = vld [vmem:[%s3794 + $0x4c] sm:$0xf]
        %v4173 = vld [vmem:[%s3794 + $0x50] sm:$0x1]
        %v4174 = vld [vmem:[%s3794 + $0x54] sm:$0xf]
        %v4175 = vld [vmem:[%s3794 + $0x58] sm:$0xf]
        %v4176 = vld [vmem:[%s3794 + $0x5c] sm:$0x1]
        %v4177 = vld [vmem:[%s3794 + $0x60] sm:$0xf]
        %v4178 = vld [vmem:[%s3794 + $0x64] sm:$0xf]
        %v4179 = vld [vmem:[%s3794 + $0x68] sm:$0x1]
        %v4180 = vld [vmem:[%s3794 + $0x6c] sm:$0xf]
        %v4181 = vld [vmem:[%s3794 + $0x70] sm:$0xf]
        %v4182 = vld [vmem:[%s3794 + $0x74] sm:$0x1]
        %v4183 = vld [vmem:[%s3794 + $0x78] sm:$0xf]
        %v4184 = vld [vmem:[%s3794 + $0x7c] sm:$0xf]
        %v4185 = vld [vmem:[%s3794 + $0x80] sm:$0x1]
        %v4186 = vld [vmem:[%s3794 + $0x84] sm:$0xf]
        %v4187 = vld [vmem:[%s3794 + $0x88] sm:$0xf]
        %v4188 = vld [vmem:[%s3794 + $0x8c] sm:$0x1]
        %v4189 = vld [vmem:[%s3794 + $0x90] sm:$0xf]
        %v4190 = vld [vmem:[%s3794 + $0x94] sm:$0xf]
        %v4191 = vld [vmem:[%s3794 + $0x98] sm:$0x1]
        %v4192 = vld [vmem:[%s3794 + $0x9c] sm:$0xf]
        %v4193 = vld [vmem:[%s3794 + $0xa0] sm:$0xf]
        %v4194 = vld [vmem:[%s3794 + $0xa4] sm:$0x1]
        %v4195 = vld [vmem:[%s3794 + $0xa8] sm:$0xf]
        %v4196 = vld [vmem:[%s3794 + $0xac] sm:$0xf]
        %v4197 = vld [vmem:[%s3794 + $0xb0] sm:$0x1]
        %v4198 = vld [vmem:[%s3794 + $0xb4] sm:$0xf]
        %v4199 = vld [vmem:[%s3794 + $0xb8] sm:$0xf]
        %v4200 = vld [vmem:[%s3794 + $0xbc] sm:$0x1]
        %v4202 = vshrl.u32 %v4153, 16
        %v4204 = vrot.slane %v4202, 4
        %v4205 = vshll.u32 %v4153, 16
        %v4207 = vrot.slane %v4205, 5
        %v4208 = vor.u32 %v4204, %v4207
        %v4209 = vrot.slane %v4208, 4
        %v4211 = vshll.u32 %v4154, 16
        %v4213 = vrot.slane %v4211, 5
        %v4214 = vsel %vm839, %v4209, %v4213
        %v4215 = vshrl.u32 %v4154, 16
        %v4217 = vrot.slane %v4215, 4
        %v4218 = vor.u32 %v4217, %v4213
        %v4219 = vrot.slane %v4218, 4
        %v4221 = vshll.u32 %v4155, 16
        %v4223 = vrot.slane %v4221, 5
        %v4224 = vsel %vm839, %v4219, %v4223
        %v4226 = vshrl.u32 %v4156, 16
        %v4228 = vrot.slane %v4226, 4
        %v4229 = vshll.u32 %v4156, 16
        %v4231 = vrot.slane %v4229, 5
        %v4232 = vor.u32 %v4228, %v4231
        %v4233 = vrot.slane %v4232, 4
        %v4235 = vshll.u32 %v4157, 16
        %v4237 = vrot.slane %v4235, 5
        %v4238 = vsel %vm839, %v4233, %v4237
        %v4239 = vshrl.u32 %v4157, 16
        %v4241 = vrot.slane %v4239, 4
        %v4242 = vor.u32 %v4241, %v4237
        %v4243 = vrot.slane %v4242, 4
        %v4245 = vshll.u32 %v4158, 16
        %v4247 = vrot.slane %v4245, 5
        %v4248 = vsel %vm839, %v4243, %v4247
        %v4250 = vshrl.u32 %v4159, 16
        %v4252 = vrot.slane %v4250, 4
        %v4253 = vshll.u32 %v4159, 16
        %v4255 = vrot.slane %v4253, 5
        %v4256 = vor.u32 %v4252, %v4255
        %v4257 = vrot.slane %v4256, 4
        %v4259 = vshll.u32 %v4160, 16
        %v4261 = vrot.slane %v4259, 5
        %v4262 = vsel %vm839, %v4257, %v4261
        %v4263 = vshrl.u32 %v4160, 16
        %v4265 = vrot.slane %v4263, 4
        %v4266 = vor.u32 %v4265, %v4261
        %v4267 = vrot.slane %v4266, 4
        %v4269 = vshll.u32 %v4161, 16
        %v4271 = vrot.slane %v4269, 5
        %v4272 = vsel %vm839, %v4267, %v4271
        %v4274 = vshrl.u32 %v4162, 16
        %v4276 = vrot.slane %v4274, 4
        %v4277 = vshll.u32 %v4162, 16
        %v4279 = vrot.slane %v4277, 5
        %v4280 = vor.u32 %v4276, %v4279
        %v4281 = vrot.slane %v4280, 4
        %v4283 = vshll.u32 %v4163, 16
        %v4285 = vrot.slane %v4283, 5
        %v4286 = vsel %vm839, %v4281, %v4285
        %v4287 = vshrl.u32 %v4163, 16
        %v4289 = vrot.slane %v4287, 4
        %v4290 = vor.u32 %v4289, %v4285
        %v4291 = vrot.slane %v4290, 4
        %v4293 = vshll.u32 %v4164, 16
        %v4295 = vrot.slane %v4293, 5
        %v4296 = vsel %vm839, %v4291, %v4295
        %v4298 = vshrl.u32 %v4165, 16
        %v4300 = vrot.slane %v4298, 4
        %v4301 = vshll.u32 %v4165, 16
        %v4303 = vrot.slane %v4301, 5
        %v4304 = vor.u32 %v4300, %v4303
        %v4305 = vrot.slane %v4304, 4
        %v4307 = vshll.u32 %v4166, 16
        %v4309 = vrot.slane %v4307, 5
        %v4310 = vsel %vm839, %v4305, %v4309
        %v4311 = vshrl.u32 %v4166, 16
        %v4313 = vrot.slane %v4311, 4
        %v4314 = vor.u32 %v4313, %v4309
        %v4315 = vrot.slane %v4314, 4
        %v4317 = vshll.u32 %v4167, 16
        %v4319 = vrot.slane %v4317, 5
        %v4320 = vsel %vm839, %v4315, %v4319
        %v4322 = vshrl.u32 %v4168, 16
        %v4324 = vrot.slane %v4322, 4
        %v4325 = vshll.u32 %v4168, 16
        %v4327 = vrot.slane %v4325, 5
        %v4328 = vor.u32 %v4324, %v4327
        %v4329 = vrot.slane %v4328, 4
        %v4331 = vshll.u32 %v4169, 16
        %v4333 = vrot.slane %v4331, 5
        %v4334 = vsel %vm839, %v4329, %v4333
        %v4335 = vshrl.u32 %v4169, 16
        %v4337 = vrot.slane %v4335, 4
        %v4338 = vor.u32 %v4337, %v4333
        %v4339 = vrot.slane %v4338, 4
        %v4341 = vshll.u32 %v4170, 16
        %v4343 = vrot.slane %v4341, 5
        %v4344 = vsel %vm839, %v4339, %v4343
        %v4346 = vshrl.u32 %v4171, 16
        %v4348 = vrot.slane %v4346, 4
        %v4349 = vshll.u32 %v4171, 16
        %v4351 = vrot.slane %v4349, 5
        %v4352 = vor.u32 %v4348, %v4351
        %v4353 = vrot.slane %v4352, 4
        %v4355 = vshll.u32 %v4172, 16
        %v4357 = vrot.slane %v4355, 5
        %v4358 = vsel %vm839, %v4353, %v4357
        %v4359 = vshrl.u32 %v4172, 16
        %v4361 = vrot.slane %v4359, 4
        %v4362 = vor.u32 %v4361, %v4357
        %v4363 = vrot.slane %v4362, 4
        %v4365 = vshll.u32 %v4173, 16
        %v4367 = vrot.slane %v4365, 5
        %v4368 = vsel %vm839, %v4363, %v4367
        %v4370 = vshrl.u32 %v4174, 16
        %v4372 = vrot.slane %v4370, 4
        %v4373 = vshll.u32 %v4174, 16
        %v4375 = vrot.slane %v4373, 5
        %v4376 = vor.u32 %v4372, %v4375
        %v4377 = vrot.slane %v4376, 4
        %v4379 = vshll.u32 %v4175, 16
        %v4381 = vrot.slane %v4379, 5
        %v4382 = vsel %vm839, %v4377, %v4381
        %v4383 = vshrl.u32 %v4175, 16
        %v4385 = vrot.slane %v4383, 4
        %v4386 = vor.u32 %v4385, %v4381
        %v4387 = vrot.slane %v4386, 4
        %v4389 = vshll.u32 %v4176, 16
        %v4391 = vrot.slane %v4389, 5
        %v4392 = vsel %vm839, %v4387, %v4391
        %v4394 = vshrl.u32 %v4177, 16
        %v4396 = vrot.slane %v4394, 4
        %v4397 = vshll.u32 %v4177, 16
        %v4399 = vrot.slane %v4397, 5
        %v4400 = vor.u32 %v4396, %v4399
        %v4401 = vrot.slane %v4400, 4
        %v4403 = vshll.u32 %v4178, 16
        %v4405 = vrot.slane %v4403, 5
        %v4406 = vsel %vm839, %v4401, %v4405
        %v4407 = vshrl.u32 %v4178, 16
        %v4409 = vrot.slane %v4407, 4
        %v4410 = vor.u32 %v4409, %v4405
        %v4411 = vrot.slane %v4410, 4
        %v4413 = vshll.u32 %v4179, 16
        %v4415 = vrot.slane %v4413, 5
        %v4416 = vsel %vm839, %v4411, %v4415
        %v4418 = vshrl.u32 %v4180, 16
        %v4420 = vrot.slane %v4418, 4
        %v4421 = vshll.u32 %v4180, 16
        %v4423 = vrot.slane %v4421, 5
        %v4424 = vor.u32 %v4420, %v4423
        %v4425 = vrot.slane %v4424, 4
        %v4427 = vshll.u32 %v4181, 16
        %v4429 = vrot.slane %v4427, 5
        %v4430 = vsel %vm839, %v4425, %v4429
        %v4431 = vshrl.u32 %v4181, 16
        %v4433 = vrot.slane %v4431, 4
        %v4434 = vor.u32 %v4433, %v4429
        %v4435 = vrot.slane %v4434, 4
        %v4437 = vshll.u32 %v4182, 16
        %v4439 = vrot.slane %v4437, 5
        %v4440 = vsel %vm839, %v4435, %v4439
        %v4442 = vshrl.u32 %v4183, 16
        %v4444 = vrot.slane %v4442, 4
        %v4445 = vshll.u32 %v4183, 16
        %v4447 = vrot.slane %v4445, 5
        %v4448 = vor.u32 %v4444, %v4447
        %v4449 = vrot.slane %v4448, 4
        %v4451 = vshll.u32 %v4184, 16
        %v4453 = vrot.slane %v4451, 5
        %v4454 = vsel %vm839, %v4449, %v4453
        %v4455 = vshrl.u32 %v4184, 16
        %v4457 = vrot.slane %v4455, 4
        %v4458 = vor.u32 %v4457, %v4453
        %v4459 = vrot.slane %v4458, 4
        %v4461 = vshll.u32 %v4185, 16
        %v4463 = vrot.slane %v4461, 5
        %v4464 = vsel %vm839, %v4459, %v4463
        %v4466 = vshrl.u32 %v4186, 16
        %v4468 = vrot.slane %v4466, 4
        %v4469 = vshll.u32 %v4186, 16
        %v4471 = vrot.slane %v4469, 5
        %v4472 = vor.u32 %v4468, %v4471
        %v4473 = vrot.slane %v4472, 4
        %v4475 = vshll.u32 %v4187, 16
        %v4477 = vrot.slane %v4475, 5
        %v4478 = vsel %vm839, %v4473, %v4477
        %v4479 = vshrl.u32 %v4187, 16
        %v4481 = vrot.slane %v4479, 4
        %v4482 = vor.u32 %v4481, %v4477
        %v4483 = vrot.slane %v4482, 4
        %v4485 = vshll.u32 %v4188, 16
        %v4487 = vrot.slane %v4485, 5
        %v4488 = vsel %vm839, %v4483, %v4487
        %v4490 = vshrl.u32 %v4189, 16
        %v4492 = vrot.slane %v4490, 4
        %v4493 = vshll.u32 %v4189, 16
        %v4495 = vrot.slane %v4493, 5
        %v4496 = vor.u32 %v4492, %v4495
        %v4497 = vrot.slane %v4496, 4
        %v4499 = vshll.u32 %v4190, 16
        %v4501 = vrot.slane %v4499, 5
        %v4502 = vsel %vm839, %v4497, %v4501
        %v4503 = vshrl.u32 %v4190, 16
        %v4505 = vrot.slane %v4503, 4
        %v4506 = vor.u32 %v4505, %v4501
        %v4507 = vrot.slane %v4506, 4
        %v4509 = vshll.u32 %v4191, 16
        %v4511 = vrot.slane %v4509, 5
        %v4512 = vsel %vm839, %v4507, %v4511
        %v4514 = vshrl.u32 %v4192, 16
        %v4516 = vrot.slane %v4514, 4
        %v4517 = vshll.u32 %v4192, 16
        %v4519 = vrot.slane %v4517, 5
        %v4520 = vor.u32 %v4516, %v4519
        %v4521 = vrot.slane %v4520, 4
        %v4523 = vshll.u32 %v4193, 16
        %v4525 = vrot.slane %v4523, 5
        %v4526 = vsel %vm839, %v4521, %v4525
        %v4527 = vshrl.u32 %v4193, 16
        %v4529 = vrot.slane %v4527, 4
        %v4530 = vor.u32 %v4529, %v4525
        %v4531 = vrot.slane %v4530, 4
        %v4533 = vshll.u32 %v4194, 16
        %v4535 = vrot.slane %v4533, 5
        %v4536 = vsel %vm839, %v4531, %v4535
        %v4538 = vshrl.u32 %v4195, 16
        %v4540 = vrot.slane %v4538, 4
        %v4541 = vshll.u32 %v4195, 16
        %v4543 = vrot.slane %v4541, 5
        %v4544 = vor.u32 %v4540, %v4543
        %v4545 = vrot.slane %v4544, 4
        %v4547 = vshll.u32 %v4196, 16
        %v4549 = vrot.slane %v4547, 5
        %v4550 = vsel %vm839, %v4545, %v4549
        %v4551 = vshrl.u32 %v4196, 16
        %v4553 = vrot.slane %v4551, 4
        %v4554 = vor.u32 %v4553, %v4549
        %v4555 = vrot.slane %v4554, 4
        %v4557 = vshll.u32 %v4197, 16
        %v4559 = vrot.slane %v4557, 5
        %v4560 = vsel %vm839, %v4555, %v4559
        %v4562 = vshrl.u32 %v4198, 16
        %v4564 = vrot.slane %v4562, 4
        %v4565 = vshll.u32 %v4198, 16
        %v4567 = vrot.slane %v4565, 5
        %v4568 = vor.u32 %v4564, %v4567
        %v4569 = vrot.slane %v4568, 4
        %v4571 = vshll.u32 %v4199, 16
        %v4573 = vrot.slane %v4571, 5
        %v4574 = vsel %vm839, %v4569, %v4573
        %v4575 = vshrl.u32 %v4199, 16
        %v4577 = vrot.slane %v4575, 4
        %v4578 = vor.u32 %v4577, %v4573
        %v4579 = vrot.slane %v4578, 4
        %v4581 = vshll.u32 %v4200, 16
        %v4583 = vrot.slane %v4581, 5
        %v4584 = vsel %vm839, %v4579, %v4583
        %s4585 = scalar_lea.vmem %s1, 14
        %v4586 = vld [vmem:[%s4585] sm:$0x3]
        %v4587 = vunpack.c.l.b16 %v4214
        %v4588 = vunpack.c.l.b16 %v4224
        %v4589 = vunpack.c.l.b16 %v4238
        %v4590 = vunpack.c.l.b16 %v4248
        %v4591 = vunpack.c.l.b16 %v4262
        %v4592 = vunpack.c.l.b16 %v4272
        %v4593 = vunpack.c.l.b16 %v4286
        %v4594 = vunpack.c.l.b16 %v4296
        %v4595 = vunpack.c.l.b16 %v4310
        %v4596 = vunpack.c.l.b16 %v4320
        %v4597 = vunpack.c.l.b16 %v4334
        %v4598 = vunpack.c.l.b16 %v4344
        %v4599 = vunpack.c.l.b16 %v4358
        %v4600 = vunpack.c.l.b16 %v4368
        %v4601 = vunpack.c.l.b16 %v4382
        %v4602 = vunpack.c.l.b16 %v4392
        %v4603 = vunpack.c.l.b16 %v4406
        %v4604 = vunpack.c.l.b16 %v4416
        %v4605 = vunpack.c.l.b16 %v4430
        %v4606 = vunpack.c.l.b16 %v4440
        %v4607 = vunpack.c.l.b16 %v4454
        %v4608 = vunpack.c.l.b16 %v4464
        %v4609 = vunpack.c.l.b16 %v4478
        %v4610 = vunpack.c.l.b16 %v4488
        %v4611 = vunpack.c.l.b16 %v4502
        %v4612 = vunpack.c.l.b16 %v4512
        %v4613 = vunpack.c.l.b16 %v4526
        %v4614 = vunpack.c.l.b16 %v4536
        %v4615 = vunpack.c.l.b16 %v4550
        %v4616 = vunpack.c.l.b16 %v4560
        %v4617 = vunpack.c.l.b16 %v4574
        %v4618 = vunpack.c.l.b16 %v4584
        %v4619 = vpack.c.b16 %v4588, %v4587
        %v4620 = vpack.c.b16 %v4590, %v4589
        %v4621 = vpack.c.b16 %v4592, %v4591
        %v4622 = vpack.c.b16 %v4594, %v4593
        %v4623 = vpack.c.b16 %v4596, %v4595
        %v4624 = vpack.c.b16 %v4598, %v4597
        %v4625 = vpack.c.b16 %v4600, %v4599
        %v4626 = vpack.c.b16 %v4602, %v4601
        %v4627 = vpack.c.b16 %v4604, %v4603
        %v4628 = vpack.c.b16 %v4606, %v4605
        %v4629 = vpack.c.b16 %v4608, %v4607
        %v4630 = vpack.c.b16 %v4610, %v4609
        %v4631 = vpack.c.b16 %v4612, %v4611
        %v4632 = vpack.c.b16 %v4614, %v4613
        %v4633 = vpack.c.b16 %v4616, %v4615
        %v4634 = vpack.c.b16 %v4618, %v4617
        %v4636 = vsel %vm1274, %v4619, 0
        %v4639 = vsel %vm1274, %v4620, 0
        %v4642 = vsel %vm1274, %v4621, 0
        %v4645 = vsel %vm1274, %v4622, 0
        %v4648 = vsel %vm1274, %v4623, 0
        %v4651 = vsel %vm1274, %v4624, 0
        %v4654 = vsel %vm1274, %v4625, 0
        %v4657 = vsel %vm1274, %v4626, 0
        %v4660 = vsel %vm1274, %v4627, 0
        %v4663 = vsel %vm1274, %v4628, 0
        %v4666 = vsel %vm1274, %v4629, 0
        %v4669 = vsel %vm1274, %v4630, 0
        %v4672 = vsel %vm1274, %v4631, 0
        %v4675 = vsel %vm1274, %v4632, 0
        %v4678 = vsel %vm1274, %v4633, 0
        %v4681 = vsel %vm1274, %v4634, 0
        %v4684 = vand.u32 %v4586, %v1326
        %4686 = vmatprep.subr.bf16.mxu0 0
        %4687 = vmatpush1.bf16.msra.mxu0 %v4684
        %4688 = vmatprep.subr.bf16.mxu0 0
        %4689 = vmatpush1.bf16.msra.mxu0 0
        %4690 = vmatprep.subr.bf16.mxu0 0
        %4691 = vmatpush1.bf16.msra.mxu0 0
        %4692 = vmatprep.subr.bf16.mxu0 0
        %4693 = vmatpush1.bf16.msra.mxu0 0
        %4694 = vmatprep.subr.bf16.mxu0 0
        %4695 = vmatpush1.bf16.msra.mxu0 0
        %4696 = vmatprep.subr.bf16.mxu0 0
        %4697 = vmatpush1.bf16.msra.mxu0 0
        %4698 = vmatprep.subr.bf16.mxu0 0
        %4699 = vmatpush1.bf16.msra.mxu0 0
        %4700 = vmatprep.subr.bf16.mxu0 0
        %4701 = vmatpush1.bf16.msra.mxu0 0
        %4702 = vmatprep.subr.bf16.mxu0 0
        %4703 = vmatpush1.bf16.msra.mxu0 0
        %4704 = vmatprep.subr.bf16.mxu0 0
        %4705 = vmatpush1.bf16.msra.mxu0 0
        %4706 = vmatprep.subr.bf16.mxu0 0
        %4707 = vmatpush1.bf16.msra.mxu0 0
        %4708 = vmatprep.subr.bf16.mxu0 0
        %4709 = vmatpush1.bf16.msra.mxu0 0
        %4710 = vmatprep.subr.bf16.mxu0 0
        %4711 = vmatpush1.bf16.msra.mxu0 0
        %4712 = vmatprep.subr.bf16.mxu0 0
        %4713 = vmatpush1.bf16.msra.mxu0 0
        %4714 = vmatprep.subr.bf16.mxu0 0
        %4715 = vmatpush1.bf16.msra.mxu0 0
        %4716 = vmatprep.subr.bf16.mxu0 0
        %4717 = vmatpush1.bf16.msra.mxu0 0
        %4718 = vmatprep.mubr.bf16.mxu0 0
        %4719 = vmatmul.mubr.bf16.gmra.mrb[0].mxu0 %v4636
        %v4720 = vpop.f32.mrb[0].mxu0
        %v4721 = vadd.f32 0.0, %v4720
        %v4722 = vpop.f32.mrb[0].mxu0
        %v4723 = vpop.f32.mrb[0].mxu0
        %v4724 = vadd.f32 0.0, %v4723
        %v4725 = vpop.f32.mrb[0].mxu0
        %4726 = vmatprep.mubr.bf16.mxu0 0
        %4727 = vmatmul.mubr.bf16.gmra.mrb[0].mxu0 %v4639
        %v4728 = vpop.f32.mrb[0].mxu0
        %v4729 = vadd.f32 0.0, %v4728
        %v4730 = vpop.f32.mrb[0].mxu0
        %v4731 = vpop.f32.mrb[0].mxu0
        %v4732 = vadd.f32 0.0, %v4731
        %v4733 = vpop.f32.mrb[0].mxu0
        %4734 = vmatprep.mubr.bf16.mxu0 0
        %4735 = vmatmul.mubr.bf16.gmra.mrb[0].mxu0 %v4642
        %v4736 = vpop.f32.mrb[0].mxu0
        %v4737 = vadd.f32 0.0, %v4736
        %v4738 = vpop.f32.mrb[0].mxu0
        %v4739 = vpop.f32.mrb[0].mxu0
        %v4740 = vadd.f32 0.0, %v4739
        %v4741 = vpop.f32.mrb[0].mxu0
        %4742 = vmatprep.mubr.bf16.mxu0 0
        %4743 = vmatmul.mubr.bf16.gmra.mrb[0].mxu0 %v4645
        %v4744 = vpop.f32.mrb[0].mxu0
        %v4745 = vadd.f32 0.0, %v4744
        %v4746 = vpop.f32.mrb[0].mxu0
        %v4747 = vpop.f32.mrb[0].mxu0
        %v4748 = vadd.f32 0.0, %v4747
        %v4749 = vpop.f32.mrb[0].mxu0
        %4750 = vmatprep.mubr.bf16.mxu0 0
        %4751 = vmatmul.mubr.bf16.gmra.mrb[0].mxu0 %v4648
        %v4752 = vpop.f32.mrb[0].mxu0
        %v4753 = vadd.f32 0.0, %v4752
        %v4754 = vpop.f32.mrb[0].mxu0
        %v4755 = vpop.f32.mrb[0].mxu0
        %v4756 = vadd.f32 0.0, %v4755
        %v4757 = vpop.f32.mrb[0].mxu0
        %4758 = vmatprep.mubr.bf16.mxu0 0
        %4759 = vmatmul.mubr.bf16.gmra.mrb[0].mxu0 %v4651
        %v4760 = vpop.f32.mrb[0].mxu0
        %v4761 = vadd.f32 0.0, %v4760
        %v4762 = vpop.f32.mrb[0].mxu0
        %v4763 = vpop.f32.mrb[0].mxu0
        %v4764 = vadd.f32 0.0, %v4763
        %v4765 = vpop.f32.mrb[0].mxu0
        %4766 = vmatprep.mubr.bf16.mxu0 0
        %4767 = vmatmul.mubr.bf16.gmra.mrb[0].mxu0 %v4654
        %v4768 = vpop.f32.mrb[0].mxu0
        %v4769 = vadd.f32 0.0, %v4768
        %v4770 = vpop.f32.mrb[0].mxu0
        %v4771 = vpop.f32.mrb[0].mxu0
        %v4772 = vadd.f32 0.0, %v4771
        %v4773 = vpop.f32.mrb[0].mxu0
        %4774 = vmatprep.mubr.bf16.mxu0 0
        %4775 = vmatmul.mubr.bf16.gmra.mrb[0].mxu0 %v4657
        %v4776 = vpop.f32.mrb[0].mxu0
        %v4777 = vadd.f32 0.0, %v4776
        %v4778 = vpop.f32.mrb[0].mxu0
        %v4779 = vpop.f32.mrb[0].mxu0
        %v4780 = vadd.f32 0.0, %v4779
        %v4781 = vpop.f32.mrb[0].mxu0
        %4782 = vmatprep.mubr.bf16.mxu0 0
        %4783 = vmatmul.mubr.bf16.gmra.mrb[0].mxu0 %v4660
        %v4784 = vpop.f32.mrb[0].mxu0
        %v4785 = vadd.f32 0.0, %v4784
        %v4786 = vpop.f32.mrb[0].mxu0
        %v4787 = vpop.f32.mrb[0].mxu0
        %v4788 = vadd.f32 0.0, %v4787
        %v4789 = vpop.f32.mrb[0].mxu0
        %4790 = vmatprep.mubr.bf16.mxu0 0
        %4791 = vmatmul.mubr.bf16.gmra.mrb[0].mxu0 %v4663
        %v4792 = vpop.f32.mrb[0].mxu0
        %v4793 = vadd.f32 0.0, %v4792
        %v4794 = vpop.f32.mrb[0].mxu0
        %v4795 = vpop.f32.mrb[0].mxu0
        %v4796 = vadd.f32 0.0, %v4795
        %v4797 = vpop.f32.mrb[0].mxu0
        %4798 = vmatprep.mubr.bf16.mxu0 0
        %4799 = vmatmul.mubr.bf16.gmra.mrb[0].mxu0 %v4666
        %v4800 = vpop.f32.mrb[0].mxu0
        %v4801 = vadd.f32 0.0, %v4800
        %v4802 = vpop.f32.mrb[0].mxu0
        %v4803 = vpop.f32.mrb[0].mxu0
        %v4804 = vadd.f32 0.0, %v4803
        %v4805 = vpop.f32.mrb[0].mxu0
        %4806 = vmatprep.mubr.bf16.mxu0 0
        %4807 = vmatmul.mubr.bf16.gmra.mrb[0].mxu0 %v4669
        %v4808 = vpop.f32.mrb[0].mxu0
        %v4809 = vadd.f32 0.0, %v4808
        %v4810 = vpop.f32.mrb[0].mxu0
        %v4811 = vpop.f32.mrb[0].mxu0
        %v4812 = vadd.f32 0.0, %v4811
        %v4813 = vpop.f32.mrb[0].mxu0
        %4814 = vmatprep.mubr.bf16.mxu0 0
        %4815 = vmatmul.mubr.bf16.gmra.mrb[0].mxu0 %v4672
        %v4816 = vpop.f32.mrb[0].mxu0
        %v4817 = vadd.f32 0.0, %v4816
        %v4818 = vpop.f32.mrb[0].mxu0
        %v4819 = vpop.f32.mrb[0].mxu0
        %v4820 = vadd.f32 0.0, %v4819
        %v4821 = vpop.f32.mrb[0].mxu0
        %4822 = vmatprep.mubr.bf16.mxu0 0
        %4823 = vmatmul.mubr.bf16.gmra.mrb[0].mxu0 %v4675
        %v4824 = vpop.f32.mrb[0].mxu0
        %v4825 = vadd.f32 0.0, %v4824
        %v4826 = vpop.f32.mrb[0].mxu0
        %v4827 = vpop.f32.mrb[0].mxu0
        %v4828 = vadd.f32 0.0, %v4827
        %v4829 = vpop.f32.mrb[0].mxu0
        %4830 = vmatprep.mubr.bf16.mxu0 0
        %4831 = vmatmul.mubr.bf16.gmra.mrb[0].mxu0 %v4678
        %v4832 = vpop.f32.mrb[0].mxu0
        %v4833 = vadd.f32 0.0, %v4832
        %v4834 = vpop.f32.mrb[0].mxu0
        %v4835 = vpop.f32.mrb[0].mxu0
        %v4836 = vadd.f32 0.0, %v4835
        %v4837 = vpop.f32.mrb[0].mxu0
        %4838 = vmatprep.mubr.bf16.mxu0 0
        %4839 = vmatmul.mubr.bf16.gmra.mrb[0].mxu0 %v4681
        %v4840 = vpop.f32.mrb[0].mxu0
        %v4841 = vadd.f32 0.0, %v4840
        %v4842 = vpop.f32.mrb[0].mxu0
        %v4843 = vpop.f32.mrb[0].mxu0
        %v4844 = vadd.f32 0.0, %v4843
        %v4845 = vpop.f32.mrb[0].mxu0
        %4846 = vdwg.mxu0
        %v4847 = vadd.f32 %v4121, %v4721
        %v4848 = vadd.f32 %v4122, %v4724
        %v4849 = vadd.f32 %v4123, %v4729
        %v4850 = vadd.f32 %v4124, %v4732
        %v4851 = vadd.f32 %v4125, %v4737
        %v4852 = vadd.f32 %v4126, %v4740
        %v4853 = vadd.f32 %v4127, %v4745
        %v4854 = vadd.f32 %v4128, %v4748
        %v4855 = vadd.f32 %v4129, %v4753
        %v4856 = vadd.f32 %v4130, %v4756
        %v4857 = vadd.f32 %v4131, %v4761
        %v4858 = vadd.f32 %v4132, %v4764
        %v4859 = vadd.f32 %v4133, %v4769
        %v4860 = vadd.f32 %v4134, %v4772
        %v4861 = vadd.f32 %v4135, %v4777
        %v4862 = vadd.f32 %v4136, %v4780
        %v4863 = vadd.f32 %v4137, %v4785
        %v4864 = vadd.f32 %v4138, %v4788
        %v4865 = vadd.f32 %v4139, %v4793
        %v4866 = vadd.f32 %v4140, %v4796
        %v4867 = vadd.f32 %v4141, %v4801
        %v4868 = vadd.f32 %v4142, %v4804
        %v4869 = vadd.f32 %v4143, %v4809
        %v4870 = vadd.f32 %v4144, %v4812
        %v4871 = vadd.f32 %v4145, %v4817
        %v4872 = vadd.f32 %v4146, %v4820
        %v4873 = vadd.f32 %v4147, %v4825
        %v4874 = vadd.f32 %v4148, %v4828
        %v4875 = vadd.f32 %v4149, %v4833
        %v4876 = vadd.f32 %v4150, %v4836
        %v4877 = vadd.f32 %v4151, %v4841
        %v4878 = vadd.f32 %v4152, %v4844
        %v4879 = vld [vmem:[%s3794] sm:$0xe]
        %v4880 = vld [vmem:[%s3794 + $0xc] sm:$0xe]
        %v4881 = vld [vmem:[%s3794 + $0x18] sm:$0xe]
        %v4882 = vld [vmem:[%s3794 + $0x24] sm:$0xe]
        %v4883 = vld [vmem:[%s3794 + $0x30] sm:$0xe]
        %v4884 = vld [vmem:[%s3794 + $0x3c] sm:$0xe]
        %v4885 = vld [vmem:[%s3794 + $0x48] sm:$0xe]
        %v4886 = vld [vmem:[%s3794 + $0x54] sm:$0xe]
        %v4887 = vld [vmem:[%s3794 + $0x60] sm:$0xe]
        %v4888 = vld [vmem:[%s3794 + $0x6c] sm:$0xe]
        %v4889 = vld [vmem:[%s3794 + $0x78] sm:$0xe]
        %v4890 = vld [vmem:[%s3794 + $0x84] sm:$0xe]
        %v4891 = vld [vmem:[%s3794 + $0x90] sm:$0xe]
        %v4892 = vld [vmem:[%s3794 + $0x9c] sm:$0xe]
        %v4893 = vld [vmem:[%s3794 + $0xa8] sm:$0xe]
        %v4894 = vld [vmem:[%s3794 + $0xb4] sm:$0xe]
        %v4943 = vrot.slane %v4879, 5
        %v4944 = vrot.slane %v4943, 4
        %v4945 = vrot.slane %v4154, 5
        %v4946 = vsel %vm1833, %v4944, %v4945
        %v4947 = vrot.slane %v4945, 4
        %v4948 = vrot.slane %v4155, 5
        %v4949 = vsel %vm1833, %v4947, %v4948
        %v4950 = vrot.slane %v4880, 5
        %v4951 = vrot.slane %v4950, 4
        %v4952 = vrot.slane %v4157, 5
        %v4953 = vsel %vm1833, %v4951, %v4952
        %v4954 = vrot.slane %v4952, 4
        %v4955 = vrot.slane %v4158, 5
        %v4956 = vsel %vm1833, %v4954, %v4955
        %v4957 = vrot.slane %v4881, 5
        %v4958 = vrot.slane %v4957, 4
        %v4959 = vrot.slane %v4160, 5
        %v4960 = vsel %vm1833, %v4958, %v4959
        %v4961 = vrot.slane %v4959, 4
        %v4962 = vrot.slane %v4161, 5
        %v4963 = vsel %vm1833, %v4961, %v4962
        %v4964 = vrot.slane %v4882, 5
        %v4965 = vrot.slane %v4964, 4
        %v4966 = vrot.slane %v4163, 5
        %v4967 = vsel %vm1833, %v4965, %v4966
        %v4968 = vrot.slane %v4966, 4
        %v4969 = vrot.slane %v4164, 5
        %v4970 = vsel %vm1833, %v4968, %v4969
        %v4971 = vrot.slane %v4883, 5
        %v4972 = vrot.slane %v4971, 4
        %v4973 = vrot.slane %v4166, 5
        %v4974 = vsel %vm1833, %v4972, %v4973
        %v4975 = vrot.slane %v4973, 4
        %v4976 = vrot.slane %v4167, 5
        %v4977 = vsel %vm1833, %v4975, %v4976
        %v4978 = vrot.slane %v4884, 5
        %v4979 = vrot.slane %v4978, 4
        %v4980 = vrot.slane %v4169, 5
        %v4981 = vsel %vm1833, %v4979, %v4980
        %v4982 = vrot.slane %v4980, 4
        %v4983 = vrot.slane %v4170, 5
        %v4984 = vsel %vm1833, %v4982, %v4983
        %v4985 = vrot.slane %v4885, 5
        %v4986 = vrot.slane %v4985, 4
        %v4987 = vrot.slane %v4172, 5
        %v4988 = vsel %vm1833, %v4986, %v4987
        %v4989 = vrot.slane %v4987, 4
        %v4990 = vrot.slane %v4173, 5
        %v4991 = vsel %vm1833, %v4989, %v4990
        %v4992 = vrot.slane %v4886, 5
        %v4993 = vrot.slane %v4992, 4
        %v4994 = vrot.slane %v4175, 5
        %v4995 = vsel %vm1833, %v4993, %v4994
        %v4996 = vrot.slane %v4994, 4
        %v4997 = vrot.slane %v4176, 5
        %v4998 = vsel %vm1833, %v4996, %v4997
        %v4999 = vrot.slane %v4887, 5
        %v5000 = vrot.slane %v4999, 4
        %v5001 = vrot.slane %v4178, 5
        %v5002 = vsel %vm1833, %v5000, %v5001
        %v5003 = vrot.slane %v5001, 4
        %v5004 = vrot.slane %v4179, 5
        %v5005 = vsel %vm1833, %v5003, %v5004
        %v5006 = vrot.slane %v4888, 5
        %v5007 = vrot.slane %v5006, 4
        %v5008 = vrot.slane %v4181, 5
        %v5009 = vsel %vm1833, %v5007, %v5008
        %v5010 = vrot.slane %v5008, 4
        %v5011 = vrot.slane %v4182, 5
        %v5012 = vsel %vm1833, %v5010, %v5011
        %v5013 = vrot.slane %v4889, 5
        %v5014 = vrot.slane %v5013, 4
        %v5015 = vrot.slane %v4184, 5
        %v5016 = vsel %vm1833, %v5014, %v5015
        %v5017 = vrot.slane %v5015, 4
        %v5018 = vrot.slane %v4185, 5
        %v5019 = vsel %vm1833, %v5017, %v5018
        %v5020 = vrot.slane %v4890, 5
        %v5021 = vrot.slane %v5020, 4
        %v5022 = vrot.slane %v4187, 5
        %v5023 = vsel %vm1833, %v5021, %v5022
        %v5024 = vrot.slane %v5022, 4
        %v5025 = vrot.slane %v4188, 5
        %v5026 = vsel %vm1833, %v5024, %v5025
        %v5027 = vrot.slane %v4891, 5
        %v5028 = vrot.slane %v5027, 4
        %v5029 = vrot.slane %v4190, 5
        %v5030 = vsel %vm1833, %v5028, %v5029
        %v5031 = vrot.slane %v5029, 4
        %v5032 = vrot.slane %v4191, 5
        %v5033 = vsel %vm1833, %v5031, %v5032
        %v5034 = vrot.slane %v4892, 5
        %v5035 = vrot.slane %v5034, 4
        %v5036 = vrot.slane %v4193, 5
        %v5037 = vsel %vm1833, %v5035, %v5036
        %v5038 = vrot.slane %v5036, 4
        %v5039 = vrot.slane %v4194, 5
        %v5040 = vsel %vm1833, %v5038, %v5039
        %v5041 = vrot.slane %v4893, 5
        %v5042 = vrot.slane %v5041, 4
        %v5043 = vrot.slane %v4196, 5
        %v5044 = vsel %vm1833, %v5042, %v5043
        %v5045 = vrot.slane %v5043, 4
        %v5046 = vrot.slane %v4197, 5
        %v5047 = vsel %vm1833, %v5045, %v5046
        %v5048 = vrot.slane %v4894, 5
        %v5049 = vrot.slane %v5048, 4
        %v5050 = vrot.slane %v4199, 5
        %v5051 = vsel %vm1833, %v5049, %v5050
        %v5052 = vrot.slane %v5050, 4
        %v5053 = vrot.slane %v4200, 5
        %v5054 = vsel %vm1833, %v5052, %v5053
        %s5055 = scalar_lea.vmem %s1, 16
        %v5056 = vld [vmem:[%s5055] sm:$0x3]
        %v5057 = vunpack.c.l.b16 %v4946
        %v5058 = vunpack.c.l.b16 %v4949
        %v5059 = vunpack.c.l.b16 %v4953
        %v5060 = vunpack.c.l.b16 %v4956
        %v5061 = vunpack.c.l.b16 %v4960
        %v5062 = vunpack.c.l.b16 %v4963
        %v5063 = vunpack.c.l.b16 %v4967
        %v5064 = vunpack.c.l.b16 %v4970
        %v5065 = vunpack.c.l.b16 %v4974
        %v5066 = vunpack.c.l.b16 %v4977
        %v5067 = vunpack.c.l.b16 %v4981
        %v5068 = vunpack.c.l.b16 %v4984
        %v5069 = vunpack.c.l.b16 %v4988
        %v5070 = vunpack.c.l.b16 %v4991
        %v5071 = vunpack.c.l.b16 %v4995
        %v5072 = vunpack.c.l.b16 %v4998
        %v5073 = vunpack.c.l.b16 %v5002
        %v5074 = vunpack.c.l.b16 %v5005
        %v5075 = vunpack.c.l.b16 %v5009
        %v5076 = vunpack.c.l.b16 %v5012
        %v5077 = vunpack.c.l.b16 %v5016
        %v5078 = vunpack.c.l.b16 %v5019
        %v5079 = vunpack.c.l.b16 %v5023
        %v5080 = vunpack.c.l.b16 %v5026
        %v5081 = vunpack.c.l.b16 %v5030
        %v5082 = vunpack.c.l.b16 %v5033
        %v5083 = vunpack.c.l.b16 %v5037
        %v5084 = vunpack.c.l.b16 %v5040
        %v5085 = vunpack.c.l.b16 %v5044
        %v5086 = vunpack.c.l.b16 %v5047
        %v5087 = vunpack.c.l.b16 %v5051
        %v5088 = vunpack.c.l.b16 %v5054
        %v5089 = vpack.c.b16 %v5058, %v5057
        %v5090 = vpack.c.b16 %v5060, %v5059
        %v5091 = vpack.c.b16 %v5062, %v5061
        %v5092 = vpack.c.b16 %v5064, %v5063
        %v5093 = vpack.c.b16 %v5066, %v5065
        %v5094 = vpack.c.b16 %v5068, %v5067
        %v5095 = vpack.c.b16 %v5070, %v5069
        %v5096 = vpack.c.b16 %v5072, %v5071
        %v5097 = vpack.c.b16 %v5074, %v5073
        %v5098 = vpack.c.b16 %v5076, %v5075
        %v5099 = vpack.c.b16 %v5078, %v5077
        %v5100 = vpack.c.b16 %v5080, %v5079
        %v5101 = vpack.c.b16 %v5082, %v5081
        %v5102 = vpack.c.b16 %v5084, %v5083
        %v5103 = vpack.c.b16 %v5086, %v5085
        %v5104 = vpack.c.b16 %v5088, %v5087
        %v5106 = vsel %vm1274, %v5089, 0
        %v5109 = vsel %vm1274, %v5090, 0
        %v5112 = vsel %vm1274, %v5091, 0
        %v5115 = vsel %vm1274, %v5092, 0
        %v5118 = vsel %vm1274, %v5093, 0
        %v5121 = vsel %vm1274, %v5094, 0
        %v5124 = vsel %vm1274, %v5095, 0
        %v5127 = vsel %vm1274, %v5096, 0
        %v5130 = vsel %vm1274, %v5097, 0
        %v5133 = vsel %vm1274, %v5098, 0
        %v5136 = vsel %vm1274, %v5099, 0
        %v5139 = vsel %vm1274, %v5100, 0
        %v5142 = vsel %vm1274, %v5101, 0
        %v5145 = vsel %vm1274, %v5102, 0
        %v5148 = vsel %vm1274, %v5103, 0
        %v5151 = vsel %vm1274, %v5104, 0
        %v5154 = vand.u32 %v5056, %v1326
        %5156 = vmatprep.subr.bf16.mxu0 0
        %5157 = vmatpush1.bf16.msra.mxu0 %v5154
        %5158 = vmatprep.subr.bf16.mxu0 0
        %5159 = vmatpush1.bf16.msra.mxu0 0
        %5160 = vmatprep.subr.bf16.mxu0 0
        %5161 = vmatpush1.bf16.msra.mxu0 0
        %5162 = vmatprep.subr.bf16.mxu0 0
        %5163 = vmatpush1.bf16.msra.mxu0 0
        %5164 = vmatprep.subr.bf16.mxu0 0
        %5165 = vmatpush1.bf16.msra.mxu0 0
        %5166 = vmatprep.subr.bf16.mxu0 0
        %5167 = vmatpush1.bf16.msra.mxu0 0
        %5168 = vmatprep.subr.bf16.mxu0 0
        %5169 = vmatpush1.bf16.msra.mxu0 0
        %5170 = vmatprep.subr.bf16.mxu0 0
        %5171 = vmatpush1.bf16.msra.mxu0 0
        %5172 = vmatprep.subr.bf16.mxu0 0
        %5173 = vmatpush1.bf16.msra.mxu0 0
        %5174 = vmatprep.subr.bf16.mxu0 0
        %5175 = vmatpush1.bf16.msra.mxu0 0
        %5176 = vmatprep.subr.bf16.mxu0 0
        %5177 = vmatpush1.bf16.msra.mxu0 0
        %5178 = vmatprep.subr.bf16.mxu0 0
        %5179 = vmatpush1.bf16.msra.mxu0 0
        %5180 = vmatprep.subr.bf16.mxu0 0
        %5181 = vmatpush1.bf16.msra.mxu0 0
        %5182 = vmatprep.subr.bf16.mxu0 0
        %5183 = vmatpush1.bf16.msra.mxu0 0
        %5184 = vmatprep.subr.bf16.mxu0 0
        %5185 = vmatpush1.bf16.msra.mxu0 0
        %5186 = vmatprep.subr.bf16.mxu0 0
        %5187 = vmatpush1.bf16.msra.mxu0 0
        %5188 = vmatprep.mubr.bf16.mxu0 0
        %5189 = vmatmul.mubr.bf16.gmra.mrb[0].mxu0 %v5106
        %v5190 = vpop.f32.mrb[0].mxu0
        %v5191 = vadd.f32 0.0, %v5190
        %v5192 = vpop.f32.mrb[0].mxu0
        %v5193 = vpop.f32.mrb[0].mxu0
        %v5194 = vadd.f32 0.0, %v5193
        %v5195 = vpop.f32.mrb[0].mxu0
        %5196 = vmatprep.mubr.bf16.mxu0 0
        %5197 = vmatmul.mubr.bf16.gmra.mrb[0].mxu0 %v5109
        %v5198 = vpop.f32.mrb[0].mxu0
        %v5199 = vadd.f32 0.0, %v5198
        %v5200 = vpop.f32.mrb[0].mxu0
        %v5201 = vpop.f32.mrb[0].mxu0
        %v5202 = vadd.f32 0.0, %v5201
        %v5203 = vpop.f32.mrb[0].mxu0
        %5204 = vmatprep.mubr.bf16.mxu0 0
        %5205 = vmatmul.mubr.bf16.gmra.mrb[0].mxu0 %v5112
        %v5206 = vpop.f32.mrb[0].mxu0
        %v5207 = vadd.f32 0.0, %v5206
        %v5208 = vpop.f32.mrb[0].mxu0
        %v5209 = vpop.f32.mrb[0].mxu0
        %v5210 = vadd.f32 0.0, %v5209
        %v5211 = vpop.f32.mrb[0].mxu0
        %5212 = vmatprep.mubr.bf16.mxu0 0
        %5213 = vmatmul.mubr.bf16.gmra.mrb[0].mxu0 %v5115
        %v5214 = vpop.f32.mrb[0].mxu0
        %v5215 = vadd.f32 0.0, %v5214
        %v5216 = vpop.f32.mrb[0].mxu0
        %v5217 = vpop.f32.mrb[0].mxu0
        %v5218 = vadd.f32 0.0, %v5217
        %v5219 = vpop.f32.mrb[0].mxu0
        %5220 = vmatprep.mubr.bf16.mxu0 0
        %5221 = vmatmul.mubr.bf16.gmra.mrb[0].mxu0 %v5118
        %v5222 = vpop.f32.mrb[0].mxu0
        %v5223 = vadd.f32 0.0, %v5222
        %v5224 = vpop.f32.mrb[0].mxu0
        %v5225 = vpop.f32.mrb[0].mxu0
        %v5226 = vadd.f32 0.0, %v5225
        %v5227 = vpop.f32.mrb[0].mxu0
        %5228 = vmatprep.mubr.bf16.mxu0 0
        %5229 = vmatmul.mubr.bf16.gmra.mrb[0].mxu0 %v5121
        %v5230 = vpop.f32.mrb[0].mxu0
        %v5231 = vadd.f32 0.0, %v5230
        %v5232 = vpop.f32.mrb[0].mxu0
        %v5233 = vpop.f32.mrb[0].mxu0
        %v5234 = vadd.f32 0.0, %v5233
        %v5235 = vpop.f32.mrb[0].mxu0
        %5236 = vmatprep.mubr.bf16.mxu0 0
        %5237 = vmatmul.mubr.bf16.gmra.mrb[0].mxu0 %v5124
        %v5238 = vpop.f32.mrb[0].mxu0
        %v5239 = vadd.f32 0.0, %v5238
        %v5240 = vpop.f32.mrb[0].mxu0
        %v5241 = vpop.f32.mrb[0].mxu0
        %v5242 = vadd.f32 0.0, %v5241
        %v5243 = vpop.f32.mrb[0].mxu0
        %5244 = vmatprep.mubr.bf16.mxu0 0
        %5245 = vmatmul.mubr.bf16.gmra.mrb[0].mxu0 %v5127
        %v5246 = vpop.f32.mrb[0].mxu0
        %v5247 = vadd.f32 0.0, %v5246
        %v5248 = vpop.f32.mrb[0].mxu0
        %v5249 = vpop.f32.mrb[0].mxu0
        %v5250 = vadd.f32 0.0, %v5249
        %v5251 = vpop.f32.mrb[0].mxu0
        %5252 = vmatprep.mubr.bf16.mxu0 0
        %5253 = vmatmul.mubr.bf16.gmra.mrb[0].mxu0 %v5130
        %v5254 = vpop.f32.mrb[0].mxu0
        %v5255 = vadd.f32 0.0, %v5254
        %v5256 = vpop.f32.mrb[0].mxu0
        %v5257 = vpop.f32.mrb[0].mxu0
        %v5258 = vadd.f32 0.0, %v5257
        %v5259 = vpop.f32.mrb[0].mxu0
        %5260 = vmatprep.mubr.bf16.mxu0 0
        %5261 = vmatmul.mubr.bf16.gmra.mrb[0].mxu0 %v5133
        %v5262 = vpop.f32.mrb[0].mxu0
        %v5263 = vadd.f32 0.0, %v5262
        %v5264 = vpop.f32.mrb[0].mxu0
        %v5265 = vpop.f32.mrb[0].mxu0
        %v5266 = vadd.f32 0.0, %v5265
        %v5267 = vpop.f32.mrb[0].mxu0
        %5268 = vmatprep.mubr.bf16.mxu0 0
        %5269 = vmatmul.mubr.bf16.gmra.mrb[0].mxu0 %v5136
        %v5270 = vpop.f32.mrb[0].mxu0
        %v5271 = vadd.f32 0.0, %v5270
        %v5272 = vpop.f32.mrb[0].mxu0
        %v5273 = vpop.f32.mrb[0].mxu0
        %v5274 = vadd.f32 0.0, %v5273
        %v5275 = vpop.f32.mrb[0].mxu0
        %5276 = vmatprep.mubr.bf16.mxu0 0
        %5277 = vmatmul.mubr.bf16.gmra.mrb[0].mxu0 %v5139
        %v5278 = vpop.f32.mrb[0].mxu0
        %v5279 = vadd.f32 0.0, %v5278
        %v5280 = vpop.f32.mrb[0].mxu0
        %v5281 = vpop.f32.mrb[0].mxu0
        %v5282 = vadd.f32 0.0, %v5281
        %v5283 = vpop.f32.mrb[0].mxu0
        %5284 = vmatprep.mubr.bf16.mxu0 0
        %5285 = vmatmul.mubr.bf16.gmra.mrb[0].mxu0 %v5142
        %v5286 = vpop.f32.mrb[0].mxu0
        %v5287 = vadd.f32 0.0, %v5286
        %v5288 = vpop.f32.mrb[0].mxu0
        %v5289 = vpop.f32.mrb[0].mxu0
        %v5290 = vadd.f32 0.0, %v5289
        %v5291 = vpop.f32.mrb[0].mxu0
        %5292 = vmatprep.mubr.bf16.mxu0 0
        %5293 = vmatmul.mubr.bf16.gmra.mrb[0].mxu0 %v5145
        %v5294 = vpop.f32.mrb[0].mxu0
        %v5295 = vadd.f32 0.0, %v5294
        %v5296 = vpop.f32.mrb[0].mxu0
        %v5297 = vpop.f32.mrb[0].mxu0
        %v5298 = vadd.f32 0.0, %v5297
        %v5299 = vpop.f32.mrb[0].mxu0
        %5300 = vmatprep.mubr.bf16.mxu0 0
        %5301 = vmatmul.mubr.bf16.gmra.mrb[0].mxu0 %v5148
        %v5302 = vpop.f32.mrb[0].mxu0
        %v5303 = vadd.f32 0.0, %v5302
        %v5304 = vpop.f32.mrb[0].mxu0
        %v5305 = vpop.f32.mrb[0].mxu0
        %v5306 = vadd.f32 0.0, %v5305
        %v5307 = vpop.f32.mrb[0].mxu0
        %5308 = vmatprep.mubr.bf16.mxu0 0
        %5309 = vmatmul.mubr.bf16.gmra.mrb[0].mxu0 %v5151
        %v5310 = vpop.f32.mrb[0].mxu0
        %v5311 = vadd.f32 0.0, %v5310
        %v5312 = vpop.f32.mrb[0].mxu0
        %v5313 = vpop.f32.mrb[0].mxu0
        %v5314 = vadd.f32 0.0, %v5313
        %v5315 = vpop.f32.mrb[0].mxu0
        %5316 = vdwg.mxu0
        %v5317 = vadd.f32 %v4847, %v5191
        %v5318 = vadd.f32 %v4848, %v5194
        %v5319 = vadd.f32 %v4849, %v5199
        %v5320 = vadd.f32 %v4850, %v5202
        %v5321 = vadd.f32 %v4851, %v5207
        %v5322 = vadd.f32 %v4852, %v5210
        %v5323 = vadd.f32 %v4853, %v5215
        %v5324 = vadd.f32 %v4854, %v5218
        %v5325 = vadd.f32 %v4855, %v5223
        %v5326 = vadd.f32 %v4856, %v5226
        %v5327 = vadd.f32 %v4857, %v5231
        %v5328 = vadd.f32 %v4858, %v5234
        %v5329 = vadd.f32 %v4859, %v5239
        %v5330 = vadd.f32 %v4860, %v5242
        %v5331 = vadd.f32 %v4861, %v5247
        %v5332 = vadd.f32 %v4862, %v5250
        %v5333 = vadd.f32 %v4863, %v5255
        %v5334 = vadd.f32 %v4864, %v5258
        %v5335 = vadd.f32 %v4865, %v5263
        %v5336 = vadd.f32 %v4866, %v5266
        %v5337 = vadd.f32 %v4867, %v5271
        %v5338 = vadd.f32 %v4868, %v5274
        %v5339 = vadd.f32 %v4869, %v5279
        %v5340 = vadd.f32 %v4870, %v5282
        %v5341 = vadd.f32 %v4871, %v5287
        %v5342 = vadd.f32 %v4872, %v5290
        %v5343 = vadd.f32 %v4873, %v5295
        %v5344 = vadd.f32 %v4874, %v5298
        %v5345 = vadd.f32 %v4875, %v5303
        %v5346 = vadd.f32 %v4876, %v5306
        %v5347 = vadd.f32 %v4877, %v5311
        %v5348 = vadd.f32 %v4878, %v5314
        %v5349 = vld [vmem:[%s2] sm:$0x1]
        %v5350 = vld [vmem:[%s3] sm:$0x1]
        %v5352 = vlaneseq
        %v5353 = vshrl.u32 %v5352, 7
        %v5354 = vsub.s32 0, %v5353
        %v5355 = vrot.slane %v5349, %v5354
        %v5357 = vmul.f32 %v5317, %v5355
        %v5358 = vmul.f32 %v5318, %v5355
        %v5359 = vmul.f32 %v5319, %v5355
        %v5360 = vmul.f32 %v5320, %v5355
        %v5361 = vmul.f32 %v5321, %v5355
        %v5362 = vmul.f32 %v5322, %v5355
        %v5363 = vmul.f32 %v5323, %v5355
        %v5364 = vmul.f32 %v5324, %v5355
        %v5365 = vmul.f32 %v5325, %v5355
        %v5366 = vmul.f32 %v5326, %v5355
        %v5367 = vmul.f32 %v5327, %v5355
        %v5368 = vmul.f32 %v5328, %v5355
        %v5369 = vmul.f32 %v5329, %v5355
        %v5370 = vmul.f32 %v5330, %v5355
        %v5371 = vmul.f32 %v5331, %v5355
        %v5372 = vmul.f32 %v5332, %v5355
        %v5373 = vmul.f32 %v5333, %v5355
        %v5374 = vmul.f32 %v5334, %v5355
        %v5375 = vmul.f32 %v5335, %v5355
        %v5376 = vmul.f32 %v5336, %v5355
        %v5377 = vmul.f32 %v5337, %v5355
        %v5378 = vmul.f32 %v5338, %v5355
        %v5379 = vmul.f32 %v5339, %v5355
        %v5380 = vmul.f32 %v5340, %v5355
        %v5381 = vmul.f32 %v5341, %v5355
        %v5382 = vmul.f32 %v5342, %v5355
        %v5383 = vmul.f32 %v5343, %v5355
        %v5384 = vmul.f32 %v5344, %v5355
        %v5385 = vmul.f32 %v5345, %v5355
        %v5386 = vmul.f32 %v5346, %v5355
        %v5387 = vmul.f32 %v5347, %v5355
        %v5388 = vmul.f32 %v5348, %v5355
        %v5390 = vlaneseq
        %v5391 = vshrl.u32 %v5390, 7
        %v5392 = vsub.s32 0, %v5391
        %v5393 = vrot.slane %v5350, %v5392
        %v5395 = vadd.f32 %v5357, %v5393
        %v5396 = vadd.f32 %v5358, %v5393
        %v5397 = vadd.f32 %v5359, %v5393
        %v5398 = vadd.f32 %v5360, %v5393
        %v5399 = vadd.f32 %v5361, %v5393
        %v5400 = vadd.f32 %v5362, %v5393
        %v5401 = vadd.f32 %v5363, %v5393
        %v5402 = vadd.f32 %v5364, %v5393
        %v5403 = vadd.f32 %v5365, %v5393
        %v5404 = vadd.f32 %v5366, %v5393
        %v5405 = vadd.f32 %v5367, %v5393
        %v5406 = vadd.f32 %v5368, %v5393
        %v5407 = vadd.f32 %v5369, %v5393
        %v5408 = vadd.f32 %v5370, %v5393
        %v5409 = vadd.f32 %v5371, %v5393
        %v5410 = vadd.f32 %v5372, %v5393
        %v5411 = vadd.f32 %v5373, %v5393
        %v5412 = vadd.f32 %v5374, %v5393
        %v5413 = vadd.f32 %v5375, %v5393
        %v5414 = vadd.f32 %v5376, %v5393
        %v5415 = vadd.f32 %v5377, %v5393
        %v5416 = vadd.f32 %v5378, %v5393
        %v5417 = vadd.f32 %v5379, %v5393
        %v5418 = vadd.f32 %v5380, %v5393
        %v5419 = vadd.f32 %v5381, %v5393
        %v5420 = vadd.f32 %v5382, %v5393
        %v5421 = vadd.f32 %v5383, %v5393
        %v5422 = vadd.f32 %v5384, %v5393
        %v5423 = vadd.f32 %v5385, %v5393
        %v5424 = vadd.f32 %v5386, %v5393
        %v5425 = vadd.f32 %v5387, %v5393
        %v5426 = vadd.f32 %v5388, %v5393
        %v5427 = vmax.f32 %v5395, 0.0
        %v5428 = vmax.f32 %v5396, 0.0
        %v5429 = vmax.f32 %v5397, 0.0
        %v5430 = vmax.f32 %v5398, 0.0
        %v5431 = vmax.f32 %v5399, 0.0
        %v5432 = vmax.f32 %v5400, 0.0
        %v5433 = vmax.f32 %v5401, 0.0
        %v5434 = vmax.f32 %v5402, 0.0
        %v5435 = vmax.f32 %v5403, 0.0
        %v5436 = vmax.f32 %v5404, 0.0
        %v5437 = vmax.f32 %v5405, 0.0
        %v5438 = vmax.f32 %v5406, 0.0
        %v5439 = vmax.f32 %v5407, 0.0
        %v5440 = vmax.f32 %v5408, 0.0
        %v5441 = vmax.f32 %v5409, 0.0
        %v5442 = vmax.f32 %v5410, 0.0
        %v5443 = vmax.f32 %v5411, 0.0
        %v5444 = vmax.f32 %v5412, 0.0
        %v5445 = vmax.f32 %v5413, 0.0
        %v5446 = vmax.f32 %v5414, 0.0
        %v5447 = vmax.f32 %v5415, 0.0
        %v5448 = vmax.f32 %v5416, 0.0
        %v5449 = vmax.f32 %v5417, 0.0
        %v5450 = vmax.f32 %v5418, 0.0
        %v5451 = vmax.f32 %v5419, 0.0
        %v5452 = vmax.f32 %v5420, 0.0
        %v5453 = vmax.f32 %v5421, 0.0
        %v5454 = vmax.f32 %v5422, 0.0
        %v5455 = vmax.f32 %v5423, 0.0
        %v5456 = vmax.f32 %v5424, 0.0
        %v5457 = vmax.f32 %v5425, 0.0
        %v5458 = vmax.f32 %v5426, 0.0
        %v5459 = vpack.c.bf16 %v5428, %v5427
        %v5460 = vpack.c.bf16 %v5430, %v5429
        %v5461 = vpack.c.bf16 %v5432, %v5431
        %v5462 = vpack.c.bf16 %v5434, %v5433
        %v5463 = vpack.c.bf16 %v5436, %v5435
        %v5464 = vpack.c.bf16 %v5438, %v5437
        %v5465 = vpack.c.bf16 %v5440, %v5439
        %v5466 = vpack.c.bf16 %v5442, %v5441
        %v5467 = vpack.c.bf16 %v5444, %v5443
        %v5468 = vpack.c.bf16 %v5446, %v5445
        %v5469 = vpack.c.bf16 %v5448, %v5447
        %v5470 = vpack.c.bf16 %v5450, %v5449
        %v5471 = vpack.c.bf16 %v5452, %v5451
        %v5472 = vpack.c.bf16 %v5454, %v5453
        %v5473 = vpack.c.bf16 %v5456, %v5455
        %v5474 = vpack.c.bf16 %v5458, %v5457
        %v5491 = vunpack.c.l.b16 %v5459
        %v5492 = vunpack.c.h.b16 %v5459
        %v5493 = vunpack.c.l.b16 %v5460
        %v5494 = vunpack.c.h.b16 %v5460
        %v5495 = vunpack.c.l.b16 %v5461
        %v5496 = vunpack.c.h.b16 %v5461
        %v5497 = vunpack.c.l.b16 %v5462
        %v5498 = vunpack.c.h.b16 %v5462
        %v5499 = vunpack.c.l.b16 %v5463
        %v5500 = vunpack.c.h.b16 %v5463
        %v5501 = vunpack.c.l.b16 %v5464
        %v5502 = vunpack.c.h.b16 %v5464
        %v5503 = vunpack.c.l.b16 %v5465
        %v5504 = vunpack.c.h.b16 %v5465
        %v5505 = vunpack.c.l.b16 %v5466
        %v5506 = vunpack.c.h.b16 %v5466
        %v5507 = vunpack.c.l.b16 %v5467
        %v5508 = vunpack.c.h.b16 %v5467
        %v5509 = vunpack.c.l.b16 %v5468
        %v5510 = vunpack.c.h.b16 %v5468
        %v5511 = vunpack.c.l.b16 %v5469
        %v5512 = vunpack.c.h.b16 %v5469
        %v5513 = vunpack.c.l.b16 %v5470
        %v5514 = vunpack.c.h.b16 %v5470
        %v5515 = vunpack.c.l.b16 %v5471
        %v5516 = vunpack.c.h.b16 %v5471
        %v5517 = vunpack.c.l.b16 %v5472
        %v5518 = vunpack.c.h.b16 %v5472
        %v5519 = vunpack.c.l.b16 %v5473
        %v5520 = vunpack.c.h.b16 %v5473
        %v5521 = vunpack.c.l.b16 %v5474
        %v5522 = vunpack.c.h.b16 %v5474
        %v5523 = vpack.c.b16 %v5491, %v5491
        %v5524 = vpack.c.b16 %v5492, %v5492
        %v5525 = vpack.c.b16 %v5493, %v5493
        %v5526 = vpack.c.b16 %v5494, %v5494
        %v5527 = vpack.c.b16 %v5495, %v5495
        %v5528 = vpack.c.b16 %v5496, %v5496
        %v5529 = vpack.c.b16 %v5497, %v5497
        %v5530 = vpack.c.b16 %v5498, %v5498
        %v5531 = vpack.c.b16 %v5499, %v5499
        %v5532 = vpack.c.b16 %v5500, %v5500
        %v5533 = vpack.c.b16 %v5501, %v5501
        %v5534 = vpack.c.b16 %v5502, %v5502
        %v5535 = vpack.c.b16 %v5503, %v5503
        %v5536 = vpack.c.b16 %v5504, %v5504
        %v5537 = vpack.c.b16 %v5505, %v5505
        %v5538 = vpack.c.b16 %v5506, %v5506
        %v5539 = vpack.c.b16 %v5507, %v5507
        %v5540 = vpack.c.b16 %v5508, %v5508
        %v5541 = vpack.c.b16 %v5509, %v5509
        %v5542 = vpack.c.b16 %v5510, %v5510
        %v5543 = vpack.c.b16 %v5511, %v5511
        %v5544 = vpack.c.b16 %v5512, %v5512
        %v5545 = vpack.c.b16 %v5513, %v5513
        %v5546 = vpack.c.b16 %v5514, %v5514
        %v5547 = vpack.c.b16 %v5515, %v5515
        %v5548 = vpack.c.b16 %v5516, %v5516
        %v5549 = vpack.c.b16 %v5517, %v5517
        %v5550 = vpack.c.b16 %v5518, %v5518
        %v5551 = vpack.c.b16 %v5519, %v5519
        %v5552 = vpack.c.b16 %v5520, %v5520
        %v5553 = vpack.c.b16 %v5521, %v5521
        %v5554 = vpack.c.b16 %v5522, %v5522
        %vm5587 = vcmask 519168
        %5588 = vst.msk [vmem:[%s190] sm:$0xf] %vm5587, %v5523
        %5589 = vst.msk [vmem:[%s190 + $0x4] sm:$0xf] %vm5587, %v5524
        %5590 = vst.msk [vmem:[%s190 + $0x8] sm:$0xf] %vm5587, %v5525
        %5591 = vst.msk [vmem:[%s190 + $0xc] sm:$0xf] %vm5587, %v5526
        %5592 = vst.msk [vmem:[%s190 + $0x10] sm:$0xf] %vm5587, %v5527
        %5593 = vst.msk [vmem:[%s190 + $0x14] sm:$0xf] %vm5587, %v5528
        %5594 = vst.msk [vmem:[%s190 + $0x18] sm:$0xf] %vm5587, %v5529
        %5595 = vst.msk [vmem:[%s190 + $0x1c] sm:$0xf] %vm5587, %v5530
        %5596 = vst.msk [vmem:[%s190 + $0x20] sm:$0xf] %vm5587, %v5531
        %5597 = vst.msk [vmem:[%s190 + $0x24] sm:$0xf] %vm5587, %v5532
        %5598 = vst.msk [vmem:[%s190 + $0x28] sm:$0xf] %vm5587, %v5533
        %5599 = vst.msk [vmem:[%s190 + $0x2c] sm:$0xf] %vm5587, %v5534
        %5600 = vst.msk [vmem:[%s190 + $0x30] sm:$0xf] %vm5587, %v5535
        %5601 = vst.msk [vmem:[%s190 + $0x34] sm:$0xf] %vm5587, %v5536
        %5602 = vst.msk [vmem:[%s190 + $0x38] sm:$0xf] %vm5587, %v5537
        %5603 = vst.msk [vmem:[%s190 + $0x3c] sm:$0xf] %vm5587, %v5538
        %5604 = vst.msk [vmem:[%s190 + $0x40] sm:$0xf] %vm5587, %v5539
        %5605 = vst.msk [vmem:[%s190 + $0x44] sm:$0xf] %vm5587, %v5540
        %5606 = vst.msk [vmem:[%s190 + $0x48] sm:$0xf] %vm5587, %v5541
        %5607 = vst.msk [vmem:[%s190 + $0x4c] sm:$0xf] %vm5587, %v5542
        %5608 = vst.msk [vmem:[%s190 + $0x50] sm:$0xf] %vm5587, %v5543
        %5609 = vst.msk [vmem:[%s190 + $0x54] sm:$0xf] %vm5587, %v5544
        %5610 = vst.msk [vmem:[%s190 + $0x58] sm:$0xf] %vm5587, %v5545
        %5611 = vst.msk [vmem:[%s190 + $0x5c] sm:$0xf] %vm5587, %v5546
        %5612 = vst.msk [vmem:[%s190 + $0x60] sm:$0xf] %vm5587, %v5547
        %5613 = vst.msk [vmem:[%s190 + $0x64] sm:$0xf] %vm5587, %v5548
        %5614 = vst.msk [vmem:[%s190 + $0x68] sm:$0xf] %vm5587, %v5549
        %5615 = vst.msk [vmem:[%s190 + $0x6c] sm:$0xf] %vm5587, %v5550
        %5616 = vst.msk [vmem:[%s190 + $0x70] sm:$0xf] %vm5587, %v5551
        %5617 = vst.msk [vmem:[%s190 + $0x74] sm:$0xf] %vm5587, %v5552
        %5618 = vst.msk [vmem:[%s190 + $0x78] sm:$0xf] %vm5587, %v5553
        %5619 = vst.msk [vmem:[%s190 + $0x7c] sm:$0xf] %vm5587, %v5554
        %s5620 = sand.u32 %s115, 1
        %s5621 = scalar_lea.sflag [#allocation4], %s5620
        %s5622 = sand.u32 %s115, 1
        %s5623 = smul.addr %s5622, 128
        %s5624 = scalar_lea.vmem [#allocation3], %s5623
        // Predicated region
        $region37: #{tpu_custom_call.1} parent=35 // pred_check
          %p5625 = pneg %p125
        $region38: #{tpu_custom_call.1} parent=35 // pred_check_branch
          %5627 = sbr.rel (%p5625) target = $region40
        $region39: #{tpu_custom_call.1} parent=35 // pred_region
          %s5629 = ssub.s32 2048, 2048
          %5630 = vsyncadd %s5621, %s5629
          %s5631 = smul.addr %s18, 32
          %s5632 = smul.addr %s5631, 64
          %s5633 = scalar_lea.hbm %s4, %s5632
          %s5634 = sshll.u32 %s5624, 4
          %s5635 = int_to_ptr.vmem [resolvable:$true] %s5634
          %5640 = dma.vmem_to_hbm [thread:$0]  %s5635, 2048, %s5633, %s5621, 64, 64, 4
        $region40: #{tpu_custom_call.1} parent=35 // pred_fallthru
          _
      $region36: #{tpu_custom_call.1} parent=5 // pred_fallthru
        _
      %p5641 = scmp.le.s32.totalorder 2, %s13
      // Predicated region
      $region41: #{tpu_custom_call.1} parent=5 // pred_check
        %p5642 = pneg %p5641
      $region42: #{tpu_custom_call.1} parent=5 // pred_check_branch
        %5644 = sbr.rel (%p5642) target = $region44
      $region43: #{tpu_custom_call.1} parent=5 // pred_region
        %s5645 = ssub.s32 %s13, 2
        // Predicated region
        $region45: #{tpu_custom_call.1} parent=43 // pred_check
          %p5646 = pneg %p131
        $region46: #{tpu_custom_call.1} parent=43 // pred_check_branch
          %5648 = sbr.rel (%p5646) target = $region48
        $region47: #{tpu_custom_call.1} parent=43 // pred_region
          %s5649 = sand.u32 %s116, 1
          %s5650 = scalar_lea.sflag [#allocation4], %s5649
          %s5651 = sand.u32 %s116, 1
          %s5652 = smul.addr %s5651, 128
          %s5653 = scalar_lea.vmem [#allocation3], %s5652
          %5654 = dma.done %s5650, 2048
        $region48: #{tpu_custom_call.1} parent=43 // pred_fallthru
          _
      $region44: #{tpu_custom_call.1} parent=5 // pred_fallthru
        _
    $region6: #{tpu_custom_call.1} parent=1 // loop_footer
      %s17 = sadd.s32 1, %s13
    $region7: #{tpu_custom_call.1} parent=1 // loop_footer_branch
      %12 = sbr.rel target = $region3
    $region8: #{tpu_custom_call.1} parent=1 // loop_exit
      _
    %5655 = vsyncpa [#allocation4], 1
    %s5656 = scalar_lea.sflag [#allocation4], 1
    %5657 = vsyncpa %s5656, 1

</llo_original>
